<compile_context>
chip_gen: v7x
topology: tpu7x:2x2x1
jax: 0.10.0
libtpu: 0.0.40
codegen_flags: <defaults>
</compile_context>

<pallas_src>
import functools

import jax
import jax.numpy as jnp
from jax.experimental import pallas as pl
from jax.experimental.pallas import tpu as pltpu


def _round_up(x, m):
    return (x + m - 1) // m * m


def _choose_tb(batch):
    """Batch tile: multiple of 128, <= 512, divides padded batch, and yields
    >= 2 grid steps when enough rows exist (so v7x's two TensorCores both get
    work via the 'parallel' batch axis)."""
    bp = _round_up(max(batch, 1), 128)
    tb = min(512, bp)
    while bp % tb:
        tb -= 128
    if bp // tb < 2 and bp >= 256:
        cand = (bp // 2 // 128) * 128
        while cand >= 128 and bp % cand:
            cand -= 128
        if cand >= 128:
            tb = cand
    return tb


def _make_kernel(num_classes):
    """Kernel factory; num_classes is a static Python int (for lane masking)."""

    def kernel(x_ref, w1_ref, w2_ref, w3_ref, w4_ref, logits_ref, probs_ref):
        # 4 dependent MXU matmuls (bf16 inputs, f32 accumulation) + VPU/EUP tanh.
        x = x_ref[...]                                                 # bf16
        h = jnp.tanh(jnp.dot(x, w1_ref[...],
                             preferred_element_type=jnp.float32))
        h = jnp.tanh(jnp.dot(h.astype(jnp.bfloat16), w2_ref[...],
                             preferred_element_type=jnp.float32))
        h = jnp.tanh(jnp.dot(h.astype(jnp.bfloat16), w3_ref[...],
                             preferred_element_type=jnp.float32))
        logits = jnp.dot(h.astype(jnp.bfloat16), w4_ref[...],
                         preferred_element_type=jnp.float32)
        logits_ref[...] = logits.astype(logits_ref.dtype)

        # Numerically stable softmax over the class dim.  Padded class lanes
        # are masked to -inf so exp(-inf)=0 contributes nothing to the sum.
        c_pad = logits.shape[-1]
        if num_classes < c_pad:
            col = jax.lax.broadcasted_iota(jnp.int32, logits.shape, 1)
            logits = jnp.where(col < num_classes, logits, -jnp.inf)
        m = jnp.max(logits, axis=1, keepdims=True)
        e = jnp.exp(logits - m)
        denom = jnp.sum(e, axis=1, keepdims=True)
        # Exact divide (approx EUP reciprocal failed the 1e-3 row-sum check).
        probs_ref[...] = (e / denom).astype(probs_ref.dtype)

    return kernel


def prepare_params(w1, w2, w3, w4):
    """One-time weight prep (call at init, NOT per forward):
       - transpose PyTorch (out, in) -> (in, out) so the kernel matmuls directly
       - cast to bf16 (native MXU dtype; f32 accumulation happens in-kernel)
       - zero-pad fc4 output (class) dim num_classes -> multiple of 128
    """
    num_classes = w4.shape[0]
    c_pad = _round_up(max(num_classes, 128), 128)
    w1t = jnp.asarray(w1.T, dtype=jnp.bfloat16)                     # (600, 512)
    w2t = jnp.asarray(w2.T, dtype=jnp.bfloat16)                     # (512, 256)
    w3t = jnp.asarray(w3.T, dtype=jnp.bfloat16)                     # (256, 128)
    w4t = jnp.zeros((w4.shape[1], c_pad), jnp.bfloat16)             # (128, Cp)
    w4t = w4t.at[:, :num_classes].set(w4.T.astype(jnp.bfloat16))
    return w1t, w2t, w3t, w4t


def _weight_spec(shape):
    """Constant index_map -> weight stays VMEM-resident across all grid steps.
    Single-buffer it (no benefit from double-buffering a never-refetched
    operand); fall back to the default if pipeline_mode isn't available."""
    buffered = getattr(pl, "Buffered", None)
    if buffered is not None:
        try:
            return pl.BlockSpec(shape, lambda i: (0, 0),
                                pipeline_mode=buffered(1))
        except Exception:  # older JAX without pipeline_mode / Buffered(1)
            pass
    return pl.BlockSpec(shape, lambda i: (0, 0))


@functools.partial(jax.jit,
                   static_argnames=("num_classes", "tb", "return_padded"))
def _forward_impl(x, w1t, w2t, w3t, w4t, *, num_classes, tb,
                  return_padded=False):
    B, K = x.shape
    K1, H1 = w1t.shape
    H2 = w2t.shape[1]
    H3 = w3t.shape[1]
    Cp = w4t.shape[1]
    assert K == K1, (K, K1)

    # Only the batch tail is padded (feature dim stays at K=600: full-last-dim
    # block is legal, so no K-pad rewrite of x).  Padded rows are zeros and
    # are stripped below.
    Bp = _round_up(max(B, 1), tb)
    xb = x.astype(jnp.bfloat16)
    xp = xb if Bp == B else jnp.zeros((Bp, K), jnp.bfloat16).at[:B, :].set(xb)

    kernel = _make_kernel(num_classes)

    logits_p, probs_p = pl.pallas_call(
        kernel,
        out_shape=(
            jax.ShapeDtypeStruct((Bp, Cp), jnp.float32),
            jax.ShapeDtypeStruct((Bp, Cp), jnp.float32),
        ),
        grid=(Bp // tb,),
        in_specs=[
            pl.BlockSpec((tb, K), lambda i: (i, 0)),   # x tile, pipelined
            _weight_spec((K1, H1)),                    # weights: VMEM-resident
            _weight_spec((H1, H2)),
            _weight_spec((H2, H3)),
            _weight_spec((H3, Cp)),
        ],
        out_specs=(
            pl.BlockSpec((tb, Cp), lambda i: (i, 0)),
            pl.BlockSpec((tb, Cp), lambda i: (i, 0)),
        ),
        compiler_params=pltpu.CompilerParams(
            dimension_semantics=("parallel",),          # megacore on v7x
            vmem_limit_bytes=32 * 1024 * 1024,
        ),
    )(xp, w1t, w2t, w3t, w4t)

    if return_padded:
        # Lane-dense (Bp, 128) outputs; consumer masks/ignores the padding and
        # saves a full extra HBM pass from the non-lane-aligned slice below.
        return logits_p, probs_p
    return logits_p[:B, :num_classes], probs_p[:B, :num_classes]


def purchase_fully_connected_forward(x, w1t, w2t, w3t, w4t, *, num_classes,
                                     return_padded=False):
    """x: (B, 600) float; w*t: weights prepared by prepare_params()."""
    tb = _choose_tb(x.shape[0])
    return _forward_impl(x, w1t, w2t, w3t, w4t, num_classes=num_classes,
                         tb=tb, return_padded=return_padded)


def _init_linear_weight(key, out_features, in_features):
    # PyTorch nn.Linear default init: U(-1/sqrt(fan_in), 1/sqrt(fan_in))
    bound = 1.0 / jnp.sqrt(jnp.float32(in_features))
    return jax.random.uniform(
        key, (out_features, in_features), dtype=jnp.float32,
        minval=-bound, maxval=bound)


if __name__ == "__main__":
    num_classes = 100   # Purchase-100
    batch = 200         # exercises batch padding (200 -> 256) and a 2-step grid

    key = jax.random.PRNGKey(0)
    kx, k1, k2, k3, k4 = jax.random.split(key, 5)

    x = jax.random.normal(kx, (batch, 600), dtype=jnp.float32)
    w1 = _init_linear_weight(k1, 512, 600)
    w2 = _init_linear_weight(k2, 256, 512)
    w3 = _init_linear_weight(k3, 128, 256)
    w4 = _init_linear_weight(k4, num_classes, 128)

    # one-time weight prep (transpose + bf16 cast + class padding)
    w1t, w2t, w3t, w4t = prepare_params(w1, w2, w3, w4)

    logits, probs = purchase_fully_connected_forward(
        x, w1t, w2t, w3t, w4t, num_classes=num_classes)
    jax.block_until_ready((logits, probs))

    # sanity check against pure-JAX f32 reference (tolerances account for the
    # bf16 matmul inputs with f32 accumulation)
    h = jnp.tanh(x @ w1.T)
    h = jnp.tanh(h @ w2.T)
    h = jnp.tanh(h @ w3.T)
    ref_logits = h @ w4.T
    ref_probs = jax.nn.softmax(ref_logits, axis=1)

    assert logits.shape == (batch, num_classes)
    assert probs.shape == (batch, num_classes)
    assert bool(jnp.all(jnp.isfinite(logits))) and bool(jnp.all(jnp.isfinite(probs)))
    assert jnp.allclose(logits, ref_logits, atol=3e-2, rtol=3e-2)
    assert jnp.allclose(probs, ref_probs, atol=2e-3, rtol=2e-2)
    # exact divide in the kernel -> row sums are 1 to f32 precision
    assert jnp.allclose(jnp.sum(probs, axis=1), 1.0, atol=1e-4)

    print("KERNEL_OK")
</pallas_src>

<mosaic_0001>
module attributes {stable_mosaic.version = 11 : i64} {
  func.func @kernel(%arg0: i32, %arg1: memref<128x600xbf16, #tpu.memory_space<vmem>>, %arg2: memref<600x512xbf16, #tpu.memory_space<vmem>>, %arg3: memref<512x256xbf16, #tpu.memory_space<vmem>>, %arg4: memref<256x128xbf16, #tpu.memory_space<vmem>>, %arg5: memref<128x128xbf16, #tpu.memory_space<vmem>>, %arg6: memref<128x128xf32, #tpu.memory_space<vmem>>, %arg7: memref<128x128xf32, #tpu.memory_space<vmem>>) attributes {dimension_semantics = [#tpu.dimension_semantics<parallel>], iteration_bounds = array<i64: 2>, scalar_prefetch = 0 : i64, scratch_operands = 0 : i64, tpu.core_type = #tpu.core_type<tc>, window_params = [{transform_indices = @transform_0, window_bounds = array<i64: 128, 600>}, {pipeline_mode = #tpu.pipeline_mode<synchronous>, transform_indices = @transform_1, window_bounds = array<i64: 600, 512>}, {pipeline_mode = #tpu.pipeline_mode<synchronous>, transform_indices = @transform_2, window_bounds = array<i64: 512, 256>}, {pipeline_mode = #tpu.pipeline_mode<synchronous>, transform_indices = @transform_3, window_bounds = array<i64: 256, 128>}, {pipeline_mode = #tpu.pipeline_mode<synchronous>, transform_indices = @transform_4, window_bounds = array<i64: 128, 128>}, {transform_indices = @transform_5, window_bounds = array<i64: 128, 128>}, {transform_indices = @transform_6, window_bounds = array<i64: 128, 128>}]} {
    %c0 = arith.constant 0 : index
    %c0_0 = arith.constant 0 : index
    %0 = vector.load %arg1[%c0, %c0_0] : memref<128x600xbf16, #tpu.memory_space<vmem>>, vector<128x600xbf16>
    %c0_1 = arith.constant 0 : index
    %c0_2 = arith.constant 0 : index
    %1 = vector.load %arg2[%c0_1, %c0_2] : memref<600x512xbf16, #tpu.memory_space<vmem>>, vector<600x512xbf16>
    %cst = arith.constant dense<0.000000e+00> : vector<128x512xf32>
    %2 = tpu.matmul %0, %1, %cst {dimension_numbers = #tpu.dot_dimension_numbers<[1], [0], [0], [1], [0, 0, 1, 1], [], []>} : vector<128x600xbf16>, vector<600x512xbf16>, vector<128x512xf32> -> vector<128x512xf32>
    %3 = math.tanh %2 : vector<128x512xf32>
    %4 = arith.truncf %3 : vector<128x512xf32> to vector<128x512xbf16>
    %c0_3 = arith.constant 0 : index
    %c0_4 = arith.constant 0 : index
    %5 = vector.load %arg3[%c0_3, %c0_4] : memref<512x256xbf16, #tpu.memory_space<vmem>>, vector<512x256xbf16>
    %cst_5 = arith.constant dense<0.000000e+00> : vector<128x256xf32>
    %6 = tpu.matmul %4, %5, %cst_5 {dimension_numbers = #tpu.dot_dimension_numbers<[1], [0], [0], [1], [0, 0, 1, 1], [], []>} : vector<128x512xbf16>, vector<512x256xbf16>, vector<128x256xf32> -> vector<128x256xf32>
    %7 = math.tanh %6 : vector<128x256xf32>
    %8 = arith.truncf %7 : vector<128x256xf32> to vector<128x256xbf16>
    %c0_6 = arith.constant 0 : index
    %c0_7 = arith.constant 0 : index
    %9 = vector.load %arg4[%c0_6, %c0_7] : memref<256x128xbf16, #tpu.memory_space<vmem>>, vector<256x128xbf16>
    %cst_8 = arith.constant dense<0.000000e+00> : vector<128x128xf32>
    %10 = tpu.matmul %8, %9, %cst_8 {dimension_numbers = #tpu.dot_dimension_numbers<[1], [0], [0], [1], [0, 0, 1, 1], [], []>} : vector<128x256xbf16>, vector<256x128xbf16>, vector<128x128xf32> -> vector<128x128xf32>
    %11 = math.tanh %10 : vector<128x128xf32>
    %12 = arith.truncf %11 : vector<128x128xf32> to vector<128x128xbf16>
    %c0_9 = arith.constant 0 : index
    %c0_10 = arith.constant 0 : index
    %13 = vector.load %arg5[%c0_9, %c0_10] : memref<128x128xbf16, #tpu.memory_space<vmem>>, vector<128x128xbf16>
    %cst_11 = arith.constant dense<0.000000e+00> : vector<128x128xf32>
    %14 = tpu.matmul %12, %13, %cst_11 {dimension_numbers = #tpu.dot_dimension_numbers<[1], [0], [0], [1], [0, 0, 1, 1], [], []>} : vector<128x128xbf16>, vector<128x128xbf16>, vector<128x128xf32> -> vector<128x128xf32>
    %c0_12 = arith.constant 0 : index
    %c0_13 = arith.constant 0 : index
    %15 = vector.load %arg6[%c0_12, %c0_13] : memref<128x128xf32, #tpu.memory_space<vmem>>, vector<128x128xf32>
    tpu.vector_store %arg6[%c0_12, %c0_13], %14 {strides = array<i32>} : memref<128x128xf32, #tpu.memory_space<vmem>>, vector<128x128xf32>,
    %16 = tpu.iota {dimensions = array<i32: 1>} : vector<128x128xi32>
    %c100_i32 = arith.constant 100 : i32
    %17 = vector.broadcast %c100_i32 : i32 to vector<128x128xi32>
    %18 = arith.cmpi slt, %16, %17 : vector<128x128xi32>
    %cst_14 = arith.constant 0xFF800000 : f32
    %19 = vector.broadcast %cst_14 : f32 to vector<128x128xf32>
    %20 = arith.select %18, %14, %19 : vector<128x128xi1>, vector<128x128xf32>
    %cst_15 = arith.constant dense<0xFF800000> : vector<128xf32>
    %21 = vector.multi_reduction <maximumf>, %20, %cst_15 [1] : vector<128x128xf32> to vector<128xf32>
    %22 = vector.shape_cast %21 : vector<128xf32> to vector<128x1xf32>
    %23 = vector.broadcast %22 : vector<128x1xf32> to vector<128x128xf32>
    %24 = arith.subf %20, %23 : vector<128x128xf32>
    %25 = math.exp %24 : vector<128x128xf32>
    %cst_16 = arith.constant dense<0.000000e+00> : vector<128xf32>
    %26 = vector.multi_reduction <add>, %25, %cst_16 [1] : vector<128x128xf32> to vector<128xf32>
    %27 = vector.shape_cast %26 : vector<128xf32> to vector<128x1xf32>
    %28 = vector.broadcast %27 : vector<128x1xf32> to vector<128x128xf32>
    %29 = arith.divf %25, %28 : vector<128x128xf32>
    %c0_17 = arith.constant 0 : index
    %c0_18 = arith.constant 0 : index
    %30 = vector.load %arg7[%c0_17, %c0_18] : memref<128x128xf32, #tpu.memory_space<vmem>>, vector<128x128xf32>
    tpu.vector_store %arg7[%c0_17, %c0_18], %29 {strides = array<i32>} : memref<128x128xf32, #tpu.memory_space<vmem>>, vector<128x128xf32>,
    return
  }
  func.func @transform_0(%arg0: i32) -> (i32, i32) {
    %c0_i32 = arith.constant 0 : i32
    %c0_i32_0 = arith.constant 0 : i32
    return %arg0, %c0_i32 : i32, i32
  }
  func.func @transform_1(%arg0: i32) -> (i32, i32) {
    %c0_i32 = arith.constant 0 : i32
    %c0_i32_0 = arith.constant 0 : i32
    %c0_i32_1 = arith.constant 0 : i32
    return %c0_i32, %c0_i32_0 : i32, i32
  }
  func.func @transform_2(%arg0: i32) -> (i32, i32) {
    %c0_i32 = arith.constant 0 : i32
    %c0_i32_0 = arith.constant 0 : i32
    %c0_i32_1 = arith.constant 0 : i32
    return %c0_i32, %c0_i32_0 : i32, i32
  }
  func.func @transform_3(%arg0: i32) -> (i32, i32) {
    %c0_i32 = arith.constant 0 : i32
    %c0_i32_0 = arith.constant 0 : i32
    %c0_i32_1 = arith.constant 0 : i32
    return %c0_i32, %c0_i32_0 : i32, i32
  }
  func.func @transform_4(%arg0: i32) -> (i32, i32) {
    %c0_i32 = arith.constant 0 : i32
    %c0_i32_0 = arith.constant 0 : i32
    %c0_i32_1 = arith.constant 0 : i32
    return %c0_i32, %c0_i32_0 : i32, i32
  }
  func.func @transform_5(%arg0: i32) -> (i32, i32) {
    %c0_i32 = arith.constant 0 : i32
    %c0_i32_0 = arith.constant 0 : i32
    return %arg0, %c0_i32 : i32, i32
  }
  func.func @transform_6(%arg0: i32) -> (i32, i32) {
    %c0_i32 = arith.constant 0 : i32
    %c0_i32_0 = arith.constant 0 : i32
    return %arg0, %c0_i32 : i32, i32
  }
}

</mosaic_0001>

<llo_original>
// kernel: _forward_impl.1
$region0: #{_forward_impl.1}
  #allocation0 [shape = 'u32[]', space=smem, size = 0x4, offset = 0x4, fixed_abs, tag = 'smem constant byte address 0x4 - core index']
  #allocation1 [shape = 'u32[144,128]{1,0:T(1,128)}', space=vmem, size = 0x12000, scoped, tag = 'internal scratch']
  %s0 = inlined_call_operand.vmem [shape: bf16[256,600], index: 0, kind: input, shape index: {}]
  %s1 = inlined_call_operand.vmem [shape: bf16[600,512], index: 1, kind: input, shape index: {}]
  %s2 = inlined_call_operand.vmem [shape: bf16[512,256], index: 2, kind: input, shape index: {}]
  %s3 = inlined_call_operand.vmem [shape: bf16[256,128], index: 3, kind: input, shape index: {}]
  %s4 = inlined_call_operand.vmem [shape: bf16[128,128], index: 4, kind: input, shape index: {}]
  %s5 = inlined_call_operand.vmem [shape: f32[256,128], index: 5, kind: output, shape index: {0}]
  %s6 = inlined_call_operand.vmem [shape: f32[256,128], index: 6, kind: output, shape index: {1}]
  %7 = xla_tuple %s5, %s6
  %s8 = sld [smem:[#allocation0]]
  $region61: #{_forward_impl.1} parent=0
    _
  %s10 = ssub.s32 1, %s8
  %s11 = scalar_select 0, %s10, %s8
  loop: start=0, step=1, limit=4
  $region2: #{_forward_impl.1} parent=0 // loop_pre_header
    _
  $region3: #{_forward_impl.1} parent=0 // loop_header
    %s13 = sphi 0, %s17
    %p14 = scmp.ge.s32.totalorder %s13, 4
    %s23 = sphi 0, %s25
    %s26 = sphi 0, %s23
    %s27 = sphi 0, %s26
    %s43 = sphi 0, %s27
    %s47 = sphi 0, %s47
    %s49 = sphi 0, %s47
    %s50 = sphi 0, %s49
    %s64 = sphi 0, %s50
    %s68 = sphi 0, %s68
    %s70 = sphi 0, %s68
    %s71 = sphi 0, %s70
    %s85 = sphi 0, %s71
    %s89 = sphi 0, %s89
    %s91 = sphi 0, %s89
    %s92 = sphi 0, %s91
    %s106 = sphi 0, %s92
    %s110 = sphi 0, %s110
    %s112 = sphi 0, %s110
    %s113 = sphi 0, %s112
    %s127 = sphi 0, %s113
    %s133 = sphi 0, %s135
    %s136 = sphi 0, %s133
    %s137 = sphi 0, %s136
    %s153 = sphi 0, %s137
    %s159 = sphi 0, %s161
    %s162 = sphi 0, %s159
    %s163 = sphi 0, %s162
    %s179 = sphi 0, %s163
  $region4: #{_forward_impl.1} parent=0 // loop_header_branch
    %16 = sbr.rel (%p14) target = $region8
  $region5: #{_forward_impl.1} parent=0 // loop_body
    %s18 = ssub.s32 %s13, 1
    %s19 = ssub.s32 %s13, 2
    %s20 = sadd.s32 %s13, 1
    %s21 = ssub.s32 %s13, %s20
    %p22 = scmp.eq.s32.totalorder %s21, 0
    %s24 = sadd.s32 %s23, 1
    %s25 = scalar_select %p22, %s23, %s24
    %p28 = pneg %p22
    %p29 = scmp.eq.s32.totalorder %s13, 1
    %p30 = por %p28, %p29
    %p31 = scmp.ne.s32.totalorder %s23, %s26
    %p32 = scmp.eq.s32.totalorder %s13, 0
    %p33 = por %p31, %p32
    %p34 = scmp.ne.s32.totalorder %s23, %s26
    %p35 = scmp.eq.s32.totalorder %s18, 1
    %p36 = por %p34, %p35
    %p37 = scmp.ne.s32.totalorder %s26, %s27
    %p38 = scmp.eq.s32.totalorder %s18, 0
    %p39 = por %p37, %p38
    %p40 = scmp.ne.s32.totalorder %s26, %s27
    %p41 = scmp.eq.s32.totalorder %s19, 1
    %p42 = por %p40, %p41
    %p44 = scmp.ne.s32.totalorder %s27, %s43
    %p45 = scmp.eq.s32.totalorder %s19, 0
    %p46 = por %p44, %p45
    %s48 = sadd.s32 %s47, 1
    %p51 = scmp.eq.s32.totalorder %s13, 1
    %p52 = scmp.ne.s32.totalorder %s47, %s49
    %p53 = scmp.eq.s32.totalorder %s13, 0
    %p54 = por %p52, %p53
    %p55 = scmp.ne.s32.totalorder %s47, %s49
    %p56 = scmp.eq.s32.totalorder %s18, 1
    %p57 = por %p55, %p56
    %p58 = scmp.ne.s32.totalorder %s49, %s50
    %p59 = scmp.eq.s32.totalorder %s18, 0
    %p60 = por %p58, %p59
    %p61 = scmp.ne.s32.totalorder %s49, %s50
    %p62 = scmp.eq.s32.totalorder %s19, 1
    %p63 = por %p61, %p62
    %p65 = scmp.ne.s32.totalorder %s50, %s64
    %p66 = scmp.eq.s32.totalorder %s19, 0
    %p67 = por %p65, %p66
    %s69 = sadd.s32 %s68, 1
    %p72 = scmp.eq.s32.totalorder %s13, 1
    %p73 = scmp.ne.s32.totalorder %s68, %s70
    %p74 = scmp.eq.s32.totalorder %s13, 0
    %p75 = por %p73, %p74
    %p76 = scmp.ne.s32.totalorder %s68, %s70
    %p77 = scmp.eq.s32.totalorder %s18, 1
    %p78 = por %p76, %p77
    %p79 = scmp.ne.s32.totalorder %s70, %s71
    %p80 = scmp.eq.s32.totalorder %s18, 0
    %p81 = por %p79, %p80
    %p82 = scmp.ne.s32.totalorder %s70, %s71
    %p83 = scmp.eq.s32.totalorder %s19, 1
    %p84 = por %p82, %p83
    %p86 = scmp.ne.s32.totalorder %s71, %s85
    %p87 = scmp.eq.s32.totalorder %s19, 0
    %p88 = por %p86, %p87
    %s90 = sadd.s32 %s89, 1
    %p93 = scmp.eq.s32.totalorder %s13, 1
    %p94 = scmp.ne.s32.totalorder %s89, %s91
    %p95 = scmp.eq.s32.totalorder %s13, 0
    %p96 = por %p94, %p95
    %p97 = scmp.ne.s32.totalorder %s89, %s91
    %p98 = scmp.eq.s32.totalorder %s18, 1
    %p99 = por %p97, %p98
    %p100 = scmp.ne.s32.totalorder %s91, %s92
    %p101 = scmp.eq.s32.totalorder %s18, 0
    %p102 = por %p100, %p101
    %p103 = scmp.ne.s32.totalorder %s91, %s92
    %p104 = scmp.eq.s32.totalorder %s19, 1
    %p105 = por %p103, %p104
    %p107 = scmp.ne.s32.totalorder %s92, %s106
    %p108 = scmp.eq.s32.totalorder %s19, 0
    %p109 = por %p107, %p108
    %s111 = sadd.s32 %s110, 1
    %p114 = scmp.eq.s32.totalorder %s13, 1
    %p115 = scmp.ne.s32.totalorder %s110, %s112
    %p116 = scmp.eq.s32.totalorder %s13, 0
    %p117 = por %p115, %p116
    %p118 = scmp.ne.s32.totalorder %s110, %s112
    %p119 = scmp.eq.s32.totalorder %s18, 1
    %p120 = por %p118, %p119
    %p121 = scmp.ne.s32.totalorder %s112, %s113
    %p122 = scmp.eq.s32.totalorder %s18, 0
    %p123 = por %p121, %p122
    %p124 = scmp.ne.s32.totalorder %s112, %s113
    %p125 = scmp.eq.s32.totalorder %s19, 1
    %p126 = por %p124, %p125
    %p128 = scmp.ne.s32.totalorder %s113, %s127
    %p129 = scmp.eq.s32.totalorder %s19, 0
    %p130 = por %p128, %p129
    %s131 = ssub.s32 %s13, %s20
    %p132 = scmp.eq.s32.totalorder %s131, 0
    %s134 = sadd.s32 %s133, 1
    %s135 = scalar_select %p132, %s133, %s134
    %p138 = pneg %p132
    %p139 = scmp.eq.s32.totalorder %s13, 1
    %p140 = por %p138, %p139
    %p141 = scmp.ne.s32.totalorder %s133, %s136
    %p142 = scmp.eq.s32.totalorder %s13, 0
    %p143 = por %p141, %p142
    %p144 = scmp.ne.s32.totalorder %s133, %s136
    %p145 = scmp.eq.s32.totalorder %s18, 1
    %p146 = por %p144, %p145
    %p147 = scmp.ne.s32.totalorder %s136, %s137
    %p148 = scmp.eq.s32.totalorder %s18, 0
    %p149 = por %p147, %p148
    %p150 = scmp.ne.s32.totalorder %s136, %s137
    %p151 = scmp.eq.s32.totalorder %s19, 1
    %p152 = por %p150, %p151
    %p154 = scmp.ne.s32.totalorder %s137, %s153
    %p155 = scmp.eq.s32.totalorder %s19, 0
    %p156 = por %p154, %p155
    %s157 = ssub.s32 %s13, %s20
    %p158 = scmp.eq.s32.totalorder %s157, 0
    %s160 = sadd.s32 %s159, 1
    %s161 = scalar_select %p158, %s159, %s160
    %p164 = pneg %p158
    %p165 = scmp.eq.s32.totalorder %s13, 1
    %p166 = por %p164, %p165
    %p167 = scmp.ne.s32.totalorder %s159, %s162
    %p168 = scmp.eq.s32.totalorder %s13, 0
    %p169 = por %p167, %p168
    %p170 = scmp.ne.s32.totalorder %s159, %s162
    %p171 = scmp.eq.s32.totalorder %s18, 1
    %p172 = por %p170, %p171
    %p173 = scmp.ne.s32.totalorder %s162, %s163
    %p174 = scmp.eq.s32.totalorder %s18, 0
    %p175 = por %p173, %p174
    %p176 = scmp.ne.s32.totalorder %s162, %s163
    %p177 = scmp.eq.s32.totalorder %s19, 1
    %p178 = por %p176, %p177
    %p180 = scmp.ne.s32.totalorder %s163, %s179
    %p181 = scmp.eq.s32.totalorder %s19, 0
    %p182 = por %p180, %p181
    %p183 = scmp.le.s32.totalorder 1, %s13
    %p184 = scmp.lt.s32.totalorder %s13, 3
    %p185 = pnand %p183, %p184
    %p186 = pneg %p185
    // Predicated region
    $region9: #{_forward_impl.1} parent=5 // pred_check
      _
    $region10: #{_forward_impl.1} parent=5 // pred_check_branch
      %188 = sbr.rel (%p185) target = $region12
    $region11: #{_forward_impl.1} parent=5 // pred_region
      %s189 = ssub.s32 %s13, 1
      // Predicated region
      $region13: #{_forward_impl.1} parent=11 // pred_check
        %p190 = pneg %p60
      $region14: #{_forward_impl.1} parent=11 // pred_check_branch
        %192 = sbr.rel (%p190) target = $region16
      $region15: #{_forward_impl.1} parent=11 // pred_region
        _
      $region16: #{_forward_impl.1} parent=11 // pred_fallthru
        _
      // Predicated region
      $region17: #{_forward_impl.1} parent=11 // pred_check
        %p193 = pneg %p81
      $region18: #{_forward_impl.1} parent=11 // pred_check_branch
        %195 = sbr.rel (%p193) target = $region20
      $region19: #{_forward_impl.1} parent=11 // pred_region
        _
      $region20: #{_forward_impl.1} parent=11 // pred_fallthru
        _
      // Predicated region
      $region21: #{_forward_impl.1} parent=11 // pred_check
        %p196 = pneg %p102
      $region22: #{_forward_impl.1} parent=11 // pred_check_branch
        %198 = sbr.rel (%p196) target = $region24
      $region23: #{_forward_impl.1} parent=11 // pred_region
        _
      $region24: #{_forward_impl.1} parent=11 // pred_fallthru
        _
      // Predicated region
      $region25: #{_forward_impl.1} parent=11 // pred_check
        %p199 = pneg %p123
      $region26: #{_forward_impl.1} parent=11 // pred_check_branch
        %201 = sbr.rel (%p199) target = $region28
      $region27: #{_forward_impl.1} parent=11 // pred_region
        _
      $region28: #{_forward_impl.1} parent=11 // pred_fallthru
        _
    $region12: #{_forward_impl.1} parent=5 // pred_fallthru
      _
    %p202 = scmp.lt.s32.totalorder %s13, 2
    // Predicated region
    $region29: #{_forward_impl.1} parent=5 // pred_check
      %p203 = pneg %p202
    $region30: #{_forward_impl.1} parent=5 // pred_check_branch
      %205 = sbr.rel (%p203) target = $region32
    $region31: #{_forward_impl.1} parent=5 // pred_region
      // Predicated region
      $region33: #{_forward_impl.1} parent=31 // pred_check
        %p206 = pneg %p33
      $region34: #{_forward_impl.1} parent=31 // pred_check_branch
        %208 = sbr.rel (%p206) target = $region36
      $region35: #{_forward_impl.1} parent=31 // pred_region
        %s209 = smul.u32 16, %s13
        %p210 = scmp.lt.s32.totalorder %s209, 31
        %s211 = scalar_select %p210, %s209, 31
        %s212 = smul.addr %s211, 5
        %s213 = smul.addr %s212, 4
        %s214 = scalar_lea.vmem %s0, %s213
        %s215 = smul.u32 16, %s13
      $region36: #{_forward_impl.1} parent=31 // pred_fallthru
        _
    $region32: #{_forward_impl.1} parent=5 // pred_fallthru
      _
    %p216 = scmp.le.s32.totalorder 1, %s13
    %p217 = scmp.lt.s32.totalorder %s13, 3
    %p218 = pnand %p216, %p217
    %p219 = pneg %p218
    // Predicated region
    $region37: #{_forward_impl.1} parent=5 // pred_check
      _
    $region38: #{_forward_impl.1} parent=5 // pred_check_branch
      %221 = sbr.rel (%p218) target = $region40
    $region39: #{_forward_impl.1} parent=5 // pred_region
      %s222 = ssub.s32 %s13, 1
      %s223 = smul.u32 16, %s18
      %p224 = scmp.lt.s32.totalorder %s223, 31
      %s225 = scalar_select %p224, %s223, 31
      %s226 = smul.addr %s225, 5
      %s227 = smul.addr %s226, 4
      %s228 = scalar_lea.vmem %s0, %s227
      %p229 = pneg %p39
      %p230 = pneg %p36
      %p231 = pneg %p60
      %p232 = pneg %p57
      %p233 = pneg %p81
      %p234 = pneg %p78
      %p235 = pneg %p102
      %p236 = pneg %p99
      %p237 = pneg %p123
      %p238 = pneg %p120
      %p239 = pneg %p149
      %p240 = pneg %p146
      %s241 = smul.u32 16, %s18
      %p242 = scmp.lt.s32.totalorder %s241, 31
      %s243 = scalar_select %p242, %s241, 31
      %s244 = smul.addr %s243, 8
      %s245 = scalar_lea.vmem %s5, %s244
      %p246 = pneg %p175
      %p247 = pneg %p172
      %s248 = smul.u32 16, %s18
      %p249 = scmp.lt.s32.totalorder %s248, 31
      %s250 = scalar_select %p249, %s248, 31
      %s251 = smul.addr %s250, 8
      %s252 = scalar_lea.vmem %s6, %s251
      %s253 = smul.u32 16, %s18
      %p254 = scmp.lt.s32.totalorder %s253, 31
      %s255 = scalar_select %p254, %s253, 31
      %s256 = smul.addr %s255, 5
      %s257 = smul.addr %s256, 4
      %s258 = scalar_lea.vmem %s0, %s257
      %s259 = smul.u32 16, %s18
      %s260 = smul.u32 16, %s18
      %p261 = scmp.lt.s32.totalorder %s260, 31
      %s262 = scalar_select %p261, %s260, 31
      %s263 = smul.addr %s262, 8
      %s264 = scalar_lea.vmem %s5, %s263
      %s265 = smul.u32 16, %s18
      %s266 = smul.u32 16, %s18
      %p267 = scmp.lt.s32.totalorder %s266, 31
      %s268 = scalar_select %p267, %s266, 31
      %s269 = smul.addr %s268, 8
      %s270 = scalar_lea.vmem %s6, %s269
      %s271 = smul.u32 16, %s18
      %v273 = vld [vmem:[%s258] sm:$0xff]
      %v274 = vld [vmem:[%s258 + $0x8] sm:$0xff]
      %v275 = vld [vmem:[%s258 + $0x10] sm:$0xf]
      %v276 = vld [vmem:[%s258 + $0x14] sm:$0xff]
      %v277 = vld [vmem:[%s258 + $0x1c] sm:$0xff]
      %v278 = vld [vmem:[%s258 + $0x24] sm:$0xf]
      %v279 = vld [vmem:[%s258 + $0x28] sm:$0xff]
      %v280 = vld [vmem:[%s258 + $0x30] sm:$0xff]
      %v281 = vld [vmem:[%s258 + $0x38] sm:$0xf]
      %v282 = vld [vmem:[%s258 + $0x3c] sm:$0xff]
      %v283 = vld [vmem:[%s258 + $0x44] sm:$0xff]
      %v284 = vld [vmem:[%s258 + $0x4c] sm:$0xf]
      %v285 = vld [vmem:[%s258 + $0x50] sm:$0xff]
      %v286 = vld [vmem:[%s258 + $0x58] sm:$0xff]
      %v287 = vld [vmem:[%s258 + $0x60] sm:$0xf]
      %v288 = vld [vmem:[%s258 + $0x64] sm:$0xff]
      %v289 = vld [vmem:[%s258 + $0x6c] sm:$0xff]
      %v290 = vld [vmem:[%s258 + $0x74] sm:$0xf]
      %v291 = vld [vmem:[%s258 + $0x78] sm:$0xff]
      %v292 = vld [vmem:[%s258 + $0x80] sm:$0xff]
      %v293 = vld [vmem:[%s258 + $0x88] sm:$0xf]
      %v294 = vld [vmem:[%s258 + $0x8c] sm:$0xff]
      %v295 = vld [vmem:[%s258 + $0x94] sm:$0xff]
      %v296 = vld [vmem:[%s258 + $0x9c] sm:$0xf]
      %v297 = vld [vmem:[%s258 + $0xa0] sm:$0xff]
      %v298 = vld [vmem:[%s258 + $0xa8] sm:$0xff]
      %v299 = vld [vmem:[%s258 + $0xb0] sm:$0xf]
      %v300 = vld [vmem:[%s258 + $0xb4] sm:$0xff]
      %v301 = vld [vmem:[%s258 + $0xbc] sm:$0xff]
      %v302 = vld [vmem:[%s258 + $0xc4] sm:$0xf]
      %v303 = vld [vmem:[%s258 + $0xc8] sm:$0xff]
      %v304 = vld [vmem:[%s258 + $0xd0] sm:$0xff]
      %v305 = vld [vmem:[%s258 + $0xd8] sm:$0xf]
      %v306 = vld [vmem:[%s258 + $0xdc] sm:$0xff]
      %v307 = vld [vmem:[%s258 + $0xe4] sm:$0xff]
      %v308 = vld [vmem:[%s258 + $0xec] sm:$0xf]
      %v309 = vld [vmem:[%s258 + $0xf0] sm:$0xff]
      %v310 = vld [vmem:[%s258 + $0xf8] sm:$0xff]
      %v311 = vld [vmem:[%s258 + $0x100] sm:$0xf]
      %v312 = vld [vmem:[%s258 + $0x104] sm:$0xff]
      %v313 = vld [vmem:[%s258 + $0x10c] sm:$0xff]
      %v314 = vld [vmem:[%s258 + $0x114] sm:$0xf]
      %v315 = vld [vmem:[%s258 + $0x118] sm:$0xff]
      %v316 = vld [vmem:[%s258 + $0x120] sm:$0xff]
      %v317 = vld [vmem:[%s258 + $0x128] sm:$0xf]
      %v318 = vld [vmem:[%s258 + $0x12c] sm:$0xff]
      %v319 = vld [vmem:[%s258 + $0x134] sm:$0xff]
      %v320 = vld [vmem:[%s258 + $0x13c] sm:$0xf]
      %v321 = vld [vmem:[%s1] sm:$0xff]
      %v322 = vld [vmem:[%s1 + $0x8] sm:$0xff]
      %v323 = vld [vmem:[%s1 + $0x10] sm:$0xff]
      %v324 = vld [vmem:[%s1 + $0x18] sm:$0xff]
      %v325 = vld [vmem:[%s1 + $0x20] sm:$0xff]
      %v326 = vld [vmem:[%s1 + $0x28] sm:$0xff]
      %v327 = vld [vmem:[%s1 + $0x30] sm:$0xff]
      %v328 = vld [vmem:[%s1 + $0x38] sm:$0xff]
      %v329 = vld [vmem:[%s1 + $0x40] sm:$0xff]
      %v330 = vld [vmem:[%s1 + $0x48] sm:$0xff]
      %v331 = vld [vmem:[%s1 + $0x50] sm:$0xff]
      %v332 = vld [vmem:[%s1 + $0x58] sm:$0xff]
      %v333 = vld [vmem:[%s1 + $0x60] sm:$0xff]
      %v334 = vld [vmem:[%s1 + $0x68] sm:$0xff]
      %v335 = vld [vmem:[%s1 + $0x70] sm:$0xff]
      %v336 = vld [vmem:[%s1 + $0x78] sm:$0xff]
      %v337 = vld [vmem:[%s1 + $0x80] sm:$0xff]
      %v338 = vld [vmem:[%s1 + $0x88] sm:$0xff]
      %v339 = vld [vmem:[%s1 + $0x90] sm:$0xff]
      %v340 = vld [vmem:[%s1 + $0x98] sm:$0xff]
      %v341 = vld [vmem:[%s1 + $0xa0] sm:$0xff]
      %v342 = vld [vmem:[%s1 + $0xa8] sm:$0xff]
      %v343 = vld [vmem:[%s1 + $0xb0] sm:$0xff]
      %v344 = vld [vmem:[%s1 + $0xb8] sm:$0xff]
      %v345 = vld [vmem:[%s1 + $0xc0] sm:$0xff]
      %v346 = vld [vmem:[%s1 + $0xc8] sm:$0xff]
      %v347 = vld [vmem:[%s1 + $0xd0] sm:$0xff]
      %v348 = vld [vmem:[%s1 + $0xd8] sm:$0xff]
      %v349 = vld [vmem:[%s1 + $0xe0] sm:$0xff]
      %v350 = vld [vmem:[%s1 + $0xe8] sm:$0xff]
      %v351 = vld [vmem:[%s1 + $0xf0] sm:$0xff]
      %v352 = vld [vmem:[%s1 + $0xf8] sm:$0xff]
      %v353 = vld [vmem:[%s1 + $0x100] sm:$0xff]
      %v354 = vld [vmem:[%s1 + $0x108] sm:$0xff]
      %v355 = vld [vmem:[%s1 + $0x110] sm:$0xff]
      %v356 = vld [vmem:[%s1 + $0x118] sm:$0xff]
      %v357 = vld [vmem:[%s1 + $0x120] sm:$0xff]
      %v358 = vld [vmem:[%s1 + $0x128] sm:$0xff]
      %v359 = vld [vmem:[%s1 + $0x130] sm:$0xff]
      %v360 = vld [vmem:[%s1 + $0x138] sm:$0xff]
      %v361 = vld [vmem:[%s1 + $0x140] sm:$0xff]
      %v362 = vld [vmem:[%s1 + $0x148] sm:$0xff]
      %v363 = vld [vmem:[%s1 + $0x150] sm:$0xff]
      %v364 = vld [vmem:[%s1 + $0x158] sm:$0xff]
      %v365 = vld [vmem:[%s1 + $0x160] sm:$0xff]
      %v366 = vld [vmem:[%s1 + $0x168] sm:$0xff]
      %v367 = vld [vmem:[%s1 + $0x170] sm:$0xff]
      %v368 = vld [vmem:[%s1 + $0x178] sm:$0xff]
      %v369 = vld [vmem:[%s1 + $0x180] sm:$0xff]
      %v370 = vld [vmem:[%s1 + $0x188] sm:$0xff]
      %v371 = vld [vmem:[%s1 + $0x190] sm:$0xff]
      %v372 = vld [vmem:[%s1 + $0x198] sm:$0xff]
      %v373 = vld [vmem:[%s1 + $0x1a0] sm:$0xff]
      %v374 = vld [vmem:[%s1 + $0x1a8] sm:$0xff]
      %v375 = vld [vmem:[%s1 + $0x1b0] sm:$0xff]
      %v376 = vld [vmem:[%s1 + $0x1b8] sm:$0xff]
      %v377 = vld [vmem:[%s1 + $0x1c0] sm:$0xff]
      %v378 = vld [vmem:[%s1 + $0x1c8] sm:$0xff]
      %v379 = vld [vmem:[%s1 + $0x1d0] sm:$0xff]
      %v380 = vld [vmem:[%s1 + $0x1d8] sm:$0xff]
      %v381 = vld [vmem:[%s1 + $0x1e0] sm:$0xff]
      %v382 = vld [vmem:[%s1 + $0x1e8] sm:$0xff]
      %v383 = vld [vmem:[%s1 + $0x1f0] sm:$0xff]
      %v384 = vld [vmem:[%s1 + $0x1f8] sm:$0xff]
      %v385 = vld [vmem:[%s1 + $0x200] sm:$0xff]
      %v386 = vld [vmem:[%s1 + $0x208] sm:$0xff]
      %v387 = vld [vmem:[%s1 + $0x210] sm:$0xff]
      %v388 = vld [vmem:[%s1 + $0x218] sm:$0xff]
      %v389 = vld [vmem:[%s1 + $0x220] sm:$0xff]
      %v390 = vld [vmem:[%s1 + $0x228] sm:$0xff]
      %v391 = vld [vmem:[%s1 + $0x230] sm:$0xff]
      %v392 = vld [vmem:[%s1 + $0x238] sm:$0xff]
      %v393 = vld [vmem:[%s1 + $0x240] sm:$0xff]
      %v394 = vld [vmem:[%s1 + $0x248] sm:$0xff]
      %v395 = vld [vmem:[%s1 + $0x250] sm:$0xff]
      %v396 = vld [vmem:[%s1 + $0x258] sm:$0xff]
      %v397 = vld [vmem:[%s1 + $0x260] sm:$0xff]
      %v398 = vld [vmem:[%s1 + $0x268] sm:$0xff]
      %v399 = vld [vmem:[%s1 + $0x270] sm:$0xff]
      %v400 = vld [vmem:[%s1 + $0x278] sm:$0xff]
      %v401 = vld [vmem:[%s1 + $0x280] sm:$0xff]
      %v402 = vld [vmem:[%s1 + $0x288] sm:$0xff]
      %v403 = vld [vmem:[%s1 + $0x290] sm:$0xff]
      %v404 = vld [vmem:[%s1 + $0x298] sm:$0xff]
      %v405 = vld [vmem:[%s1 + $0x2a0] sm:$0xff]
      %v406 = vld [vmem:[%s1 + $0x2a8] sm:$0xff]
      %v407 = vld [vmem:[%s1 + $0x2b0] sm:$0xff]
      %v408 = vld [vmem:[%s1 + $0x2b8] sm:$0xff]
      %v409 = vld [vmem:[%s1 + $0x2c0] sm:$0xff]
      %v410 = vld [vmem:[%s1 + $0x2c8] sm:$0xff]
      %v411 = vld [vmem:[%s1 + $0x2d0] sm:$0xff]
      %v412 = vld [vmem:[%s1 + $0x2d8] sm:$0xff]
      %v413 = vld [vmem:[%s1 + $0x2e0] sm:$0xff]
      %v414 = vld [vmem:[%s1 + $0x2e8] sm:$0xff]
      %v415 = vld [vmem:[%s1 + $0x2f0] sm:$0xff]
      %v416 = vld [vmem:[%s1 + $0x2f8] sm:$0xff]
      %v417 = vld [vmem:[%s1 + $0x300] sm:$0xff]
      %v418 = vld [vmem:[%s1 + $0x308] sm:$0xff]
      %v419 = vld [vmem:[%s1 + $0x310] sm:$0xff]
      %v420 = vld [vmem:[%s1 + $0x318] sm:$0xff]
      %v421 = vld [vmem:[%s1 + $0x320] sm:$0xff]
      %v422 = vld [vmem:[%s1 + $0x328] sm:$0xff]
      %v423 = vld [vmem:[%s1 + $0x330] sm:$0xff]
      %v424 = vld [vmem:[%s1 + $0x338] sm:$0xff]
      %v425 = vld [vmem:[%s1 + $0x340] sm:$0xff]
      %v426 = vld [vmem:[%s1 + $0x348] sm:$0xff]
      %v427 = vld [vmem:[%s1 + $0x350] sm:$0xff]
      %v428 = vld [vmem:[%s1 + $0x358] sm:$0xff]
      %v429 = vld [vmem:[%s1 + $0x360] sm:$0xff]
      %v430 = vld [vmem:[%s1 + $0x368] sm:$0xff]
      %v431 = vld [vmem:[%s1 + $0x370] sm:$0xff]
      %v432 = vld [vmem:[%s1 + $0x378] sm:$0xff]
      %v433 = vld [vmem:[%s1 + $0x380] sm:$0xff]
      %v434 = vld [vmem:[%s1 + $0x388] sm:$0xff]
      %v435 = vld [vmem:[%s1 + $0x390] sm:$0xff]
      %v436 = vld [vmem:[%s1 + $0x398] sm:$0xff]
      %v437 = vld [vmem:[%s1 + $0x3a0] sm:$0xff]
      %v438 = vld [vmem:[%s1 + $0x3a8] sm:$0xff]
      %v439 = vld [vmem:[%s1 + $0x3b0] sm:$0xff]
      %v440 = vld [vmem:[%s1 + $0x3b8] sm:$0xff]
      %v441 = vld [vmem:[%s1 + $0x3c0] sm:$0xff]
      %v442 = vld [vmem:[%s1 + $0x3c8] sm:$0xff]
      %v443 = vld [vmem:[%s1 + $0x3d0] sm:$0xff]
      %v444 = vld [vmem:[%s1 + $0x3d8] sm:$0xff]
      %v445 = vld [vmem:[%s1 + $0x3e0] sm:$0xff]
      %v446 = vld [vmem:[%s1 + $0x3e8] sm:$0xff]
      %v447 = vld [vmem:[%s1 + $0x3f0] sm:$0xff]
      %v448 = vld [vmem:[%s1 + $0x3f8] sm:$0xff]
      %v449 = vld [vmem:[%s1 + $0x400] sm:$0xff]
      %v450 = vld [vmem:[%s1 + $0x408] sm:$0xff]
      %v451 = vld [vmem:[%s1 + $0x410] sm:$0xff]
      %v452 = vld [vmem:[%s1 + $0x418] sm:$0xff]
      %v453 = vld [vmem:[%s1 + $0x420] sm:$0xff]
      %v454 = vld [vmem:[%s1 + $0x428] sm:$0xff]
      %v455 = vld [vmem:[%s1 + $0x430] sm:$0xff]
      %v456 = vld [vmem:[%s1 + $0x438] sm:$0xff]
      %v457 = vld [vmem:[%s1 + $0x440] sm:$0xff]
      %v458 = vld [vmem:[%s1 + $0x448] sm:$0xff]
      %v459 = vld [vmem:[%s1 + $0x450] sm:$0xff]
      %v460 = vld [vmem:[%s1 + $0x458] sm:$0xff]
      %v461 = vld [vmem:[%s1 + $0x460] sm:$0xff]
      %v462 = vld [vmem:[%s1 + $0x468] sm:$0xff]
      %v463 = vld [vmem:[%s1 + $0x470] sm:$0xff]
      %v464 = vld [vmem:[%s1 + $0x478] sm:$0xff]
      %v465 = vld [vmem:[%s1 + $0x480] sm:$0xff]
      %v466 = vld [vmem:[%s1 + $0x488] sm:$0xff]
      %v467 = vld [vmem:[%s1 + $0x490] sm:$0xff]
      %v468 = vld [vmem:[%s1 + $0x498] sm:$0xff]
      %v469 = vld [vmem:[%s1 + $0x4a0] sm:$0xff]
      %v470 = vld [vmem:[%s1 + $0x4a8] sm:$0xff]
      %v519 = vunpack.c.l.b16 %v273
      %v520 = vunpack.c.h.b16 %v273
      %v521 = vunpack.c.l.b16 %v274
      %v522 = vunpack.c.h.b16 %v274
      %v523 = vunpack.c.l.b16 %v275
      %v524 = vunpack.c.l.b16 %v276
      %v525 = vunpack.c.h.b16 %v276
      %v526 = vunpack.c.l.b16 %v277
      %v527 = vunpack.c.h.b16 %v277
      %v528 = vunpack.c.l.b16 %v278
      %v529 = vunpack.c.l.b16 %v279
      %v530 = vunpack.c.h.b16 %v279
      %v531 = vunpack.c.l.b16 %v280
      %v532 = vunpack.c.h.b16 %v280
      %v533 = vunpack.c.l.b16 %v281
      %v534 = vunpack.c.l.b16 %v282
      %v535 = vunpack.c.h.b16 %v282
      %v536 = vunpack.c.l.b16 %v283
      %v537 = vunpack.c.h.b16 %v283
      %v538 = vunpack.c.l.b16 %v284
      %v539 = vunpack.c.l.b16 %v285
      %v540 = vunpack.c.h.b16 %v285
      %v541 = vunpack.c.l.b16 %v286
      %v542 = vunpack.c.h.b16 %v286
      %v543 = vunpack.c.l.b16 %v287
      %v544 = vunpack.c.l.b16 %v288
      %v545 = vunpack.c.h.b16 %v288
      %v546 = vunpack.c.l.b16 %v289
      %v547 = vunpack.c.h.b16 %v289
      %v548 = vunpack.c.l.b16 %v290
      %v549 = vunpack.c.l.b16 %v291
      %v550 = vunpack.c.h.b16 %v291
      %v551 = vunpack.c.l.b16 %v292
      %v552 = vunpack.c.h.b16 %v292
      %v553 = vunpack.c.l.b16 %v293
      %v554 = vunpack.c.l.b16 %v294
      %v555 = vunpack.c.h.b16 %v294
      %v556 = vunpack.c.l.b16 %v295
      %v557 = vunpack.c.h.b16 %v295
      %v558 = vunpack.c.l.b16 %v296
      %v559 = vunpack.c.l.b16 %v297
      %v560 = vunpack.c.h.b16 %v297
      %v561 = vunpack.c.l.b16 %v298
      %v562 = vunpack.c.h.b16 %v298
      %v563 = vunpack.c.l.b16 %v299
      %v564 = vunpack.c.l.b16 %v300
      %v565 = vunpack.c.h.b16 %v300
      %v566 = vunpack.c.l.b16 %v301
      %v567 = vunpack.c.h.b16 %v301
      %v568 = vunpack.c.l.b16 %v302
      %v569 = vunpack.c.l.b16 %v303
      %v570 = vunpack.c.h.b16 %v303
      %v571 = vunpack.c.l.b16 %v304
      %v572 = vunpack.c.h.b16 %v304
      %v573 = vunpack.c.l.b16 %v305
      %v574 = vunpack.c.l.b16 %v306
      %v575 = vunpack.c.h.b16 %v306
      %v576 = vunpack.c.l.b16 %v307
      %v577 = vunpack.c.h.b16 %v307
      %v578 = vunpack.c.l.b16 %v308
      %v579 = vunpack.c.l.b16 %v309
      %v580 = vunpack.c.h.b16 %v309
      %v581 = vunpack.c.l.b16 %v310
      %v582 = vunpack.c.h.b16 %v310
      %v583 = vunpack.c.l.b16 %v311
      %v584 = vunpack.c.l.b16 %v312
      %v585 = vunpack.c.h.b16 %v312
      %v586 = vunpack.c.l.b16 %v313
      %v587 = vunpack.c.h.b16 %v313
      %v588 = vunpack.c.l.b16 %v314
      %v589 = vunpack.c.l.b16 %v315
      %v590 = vunpack.c.h.b16 %v315
      %v591 = vunpack.c.l.b16 %v316
      %v592 = vunpack.c.h.b16 %v316
      %v593 = vunpack.c.l.b16 %v317
      %v594 = vunpack.c.l.b16 %v318
      %v595 = vunpack.c.h.b16 %v318
      %v596 = vunpack.c.l.b16 %v319
      %v597 = vunpack.c.h.b16 %v319
      %v598 = vunpack.c.l.b16 %v320
      %v599 = vpack.c.b16 %v524, %v519
      %v600 = vpack.c.b16 %v525, %v520
      %v601 = vpack.c.b16 %v526, %v521
      %v602 = vpack.c.b16 %v527, %v522
      %v603 = vpack.c.b16 %v528, %v523
      %v604 = vpack.c.b16 %v534, %v529
      %v605 = vpack.c.b16 %v535, %v530
      %v606 = vpack.c.b16 %v536, %v531
      %v607 = vpack.c.b16 %v537, %v532
      %v608 = vpack.c.b16 %v538, %v533
      %v609 = vpack.c.b16 %v544, %v539
      %v610 = vpack.c.b16 %v545, %v540
      %v611 = vpack.c.b16 %v546, %v541
      %v612 = vpack.c.b16 %v547, %v542
      %v613 = vpack.c.b16 %v548, %v543
      %v614 = vpack.c.b16 %v554, %v549
      %v615 = vpack.c.b16 %v555, %v550
      %v616 = vpack.c.b16 %v556, %v551
      %v617 = vpack.c.b16 %v557, %v552
      %v618 = vpack.c.b16 %v558, %v553
      %v619 = vpack.c.b16 %v564, %v559
      %v620 = vpack.c.b16 %v565, %v560
      %v621 = vpack.c.b16 %v566, %v561
      %v622 = vpack.c.b16 %v567, %v562
      %v623 = vpack.c.b16 %v568, %v563
      %v624 = vpack.c.b16 %v574, %v569
      %v625 = vpack.c.b16 %v575, %v570
      %v626 = vpack.c.b16 %v576, %v571
      %v627 = vpack.c.b16 %v577, %v572
      %v628 = vpack.c.b16 %v578, %v573
      %v629 = vpack.c.b16 %v584, %v579
      %v630 = vpack.c.b16 %v585, %v580
      %v631 = vpack.c.b16 %v586, %v581
      %v632 = vpack.c.b16 %v587, %v582
      %v633 = vpack.c.b16 %v588, %v583
      %v634 = vpack.c.b16 %v594, %v589
      %v635 = vpack.c.b16 %v595, %v590
      %v636 = vpack.c.b16 %v596, %v591
      %v637 = vpack.c.b16 %v597, %v592
      %v638 = vpack.c.b16 %v598, %v593
      %v821 = vunpack.c.l.b16 %v321
      %v822 = vunpack.c.h.b16 %v321
      %v823 = vunpack.c.l.b16 %v322
      %v824 = vunpack.c.h.b16 %v322
      %v825 = vunpack.c.l.b16 %v323
      %v826 = vunpack.c.h.b16 %v323
      %v827 = vunpack.c.l.b16 %v324
      %v828 = vunpack.c.h.b16 %v324
      %v829 = vunpack.c.l.b16 %v325
      %v830 = vunpack.c.h.b16 %v325
      %v831 = vunpack.c.l.b16 %v326
      %v832 = vunpack.c.h.b16 %v326
      %v833 = vunpack.c.l.b16 %v327
      %v834 = vunpack.c.h.b16 %v327
      %v835 = vunpack.c.l.b16 %v328
      %v836 = vunpack.c.h.b16 %v328
      %v837 = vunpack.c.l.b16 %v329
      %v838 = vunpack.c.h.b16 %v329
      %v839 = vunpack.c.l.b16 %v330
      %v840 = vunpack.c.h.b16 %v330
      %v841 = vunpack.c.l.b16 %v331
      %v842 = vunpack.c.h.b16 %v331
      %v843 = vunpack.c.l.b16 %v332
      %v844 = vunpack.c.h.b16 %v332
      %v845 = vunpack.c.l.b16 %v333
      %v846 = vunpack.c.h.b16 %v333
      %v847 = vunpack.c.l.b16 %v334
      %v848 = vunpack.c.h.b16 %v334
      %v849 = vunpack.c.l.b16 %v335
      %v850 = vunpack.c.h.b16 %v335
      %v851 = vunpack.c.l.b16 %v336
      %v852 = vunpack.c.h.b16 %v336
      %v853 = vunpack.c.l.b16 %v337
      %v854 = vunpack.c.h.b16 %v337
      %v855 = vunpack.c.l.b16 %v338
      %v856 = vunpack.c.h.b16 %v338
      %v857 = vunpack.c.l.b16 %v339
      %v858 = vunpack.c.h.b16 %v339
      %v859 = vunpack.c.l.b16 %v340
      %v860 = vunpack.c.h.b16 %v340
      %v861 = vunpack.c.l.b16 %v341
      %v862 = vunpack.c.h.b16 %v341
      %v863 = vunpack.c.l.b16 %v342
      %v864 = vunpack.c.h.b16 %v342
      %v865 = vunpack.c.l.b16 %v343
      %v866 = vunpack.c.h.b16 %v343
      %v867 = vunpack.c.l.b16 %v344
      %v868 = vunpack.c.h.b16 %v344
      %v869 = vunpack.c.l.b16 %v345
      %v870 = vunpack.c.h.b16 %v345
      %v871 = vunpack.c.l.b16 %v346
      %v872 = vunpack.c.h.b16 %v346
      %v873 = vunpack.c.l.b16 %v347
      %v874 = vunpack.c.h.b16 %v347
      %v875 = vunpack.c.l.b16 %v348
      %v876 = vunpack.c.h.b16 %v348
      %v877 = vunpack.c.l.b16 %v349
      %v878 = vunpack.c.h.b16 %v349
      %v879 = vunpack.c.l.b16 %v350
      %v880 = vunpack.c.h.b16 %v350
      %v881 = vunpack.c.l.b16 %v351
      %v882 = vunpack.c.h.b16 %v351
      %v883 = vunpack.c.l.b16 %v352
      %v884 = vunpack.c.h.b16 %v352
      %v885 = vunpack.c.l.b16 %v353
      %v886 = vunpack.c.h.b16 %v353
      %v887 = vunpack.c.l.b16 %v354
      %v888 = vunpack.c.h.b16 %v354
      %v889 = vunpack.c.l.b16 %v355
      %v890 = vunpack.c.h.b16 %v355
      %v891 = vunpack.c.l.b16 %v356
      %v892 = vunpack.c.h.b16 %v356
      %v893 = vunpack.c.l.b16 %v357
      %v894 = vunpack.c.h.b16 %v357
      %v895 = vunpack.c.l.b16 %v358
      %v896 = vunpack.c.h.b16 %v358
      %v897 = vunpack.c.l.b16 %v359
      %v898 = vunpack.c.h.b16 %v359
      %v899 = vunpack.c.l.b16 %v360
      %v900 = vunpack.c.h.b16 %v360
      %v901 = vunpack.c.l.b16 %v361
      %v902 = vunpack.c.h.b16 %v361
      %v903 = vunpack.c.l.b16 %v362
      %v904 = vunpack.c.h.b16 %v362
      %v905 = vunpack.c.l.b16 %v363
      %v906 = vunpack.c.h.b16 %v363
      %v907 = vunpack.c.l.b16 %v364
      %v908 = vunpack.c.h.b16 %v364
      %v909 = vunpack.c.l.b16 %v365
      %v910 = vunpack.c.h.b16 %v365
      %v911 = vunpack.c.l.b16 %v366
      %v912 = vunpack.c.h.b16 %v366
      %v913 = vunpack.c.l.b16 %v367
      %v914 = vunpack.c.h.b16 %v367
      %v915 = vunpack.c.l.b16 %v368
      %v916 = vunpack.c.h.b16 %v368
      %v917 = vunpack.c.l.b16 %v369
      %v918 = vunpack.c.h.b16 %v369
      %v919 = vunpack.c.l.b16 %v370
      %v920 = vunpack.c.h.b16 %v370
      %v921 = vunpack.c.l.b16 %v371
      %v922 = vunpack.c.h.b16 %v371
      %v923 = vunpack.c.l.b16 %v372
      %v924 = vunpack.c.h.b16 %v372
      %v925 = vunpack.c.l.b16 %v373
      %v926 = vunpack.c.h.b16 %v373
      %v927 = vunpack.c.l.b16 %v374
      %v928 = vunpack.c.h.b16 %v374
      %v929 = vunpack.c.l.b16 %v375
      %v930 = vunpack.c.h.b16 %v375
      %v931 = vunpack.c.l.b16 %v376
      %v932 = vunpack.c.h.b16 %v376
      %v933 = vunpack.c.l.b16 %v377
      %v934 = vunpack.c.h.b16 %v377
      %v935 = vunpack.c.l.b16 %v378
      %v936 = vunpack.c.h.b16 %v378
      %v937 = vunpack.c.l.b16 %v379
      %v938 = vunpack.c.h.b16 %v379
      %v939 = vunpack.c.l.b16 %v380
      %v940 = vunpack.c.h.b16 %v380
      %v941 = vunpack.c.l.b16 %v381
      %v942 = vunpack.c.h.b16 %v381
      %v943 = vunpack.c.l.b16 %v382
      %v944 = vunpack.c.h.b16 %v382
      %v945 = vunpack.c.l.b16 %v383
      %v946 = vunpack.c.h.b16 %v383
      %v947 = vunpack.c.l.b16 %v384
      %v948 = vunpack.c.h.b16 %v384
      %v949 = vunpack.c.l.b16 %v385
      %v950 = vunpack.c.h.b16 %v385
      %v951 = vunpack.c.l.b16 %v386
      %v952 = vunpack.c.h.b16 %v386
      %v953 = vunpack.c.l.b16 %v387
      %v954 = vunpack.c.h.b16 %v387
      %v955 = vunpack.c.l.b16 %v388
      %v956 = vunpack.c.h.b16 %v388
      %v957 = vunpack.c.l.b16 %v389
      %v958 = vunpack.c.h.b16 %v389
      %v959 = vunpack.c.l.b16 %v390
      %v960 = vunpack.c.h.b16 %v390
      %v961 = vunpack.c.l.b16 %v391
      %v962 = vunpack.c.h.b16 %v391
      %v963 = vunpack.c.l.b16 %v392
      %v964 = vunpack.c.h.b16 %v392
      %v965 = vunpack.c.l.b16 %v393
      %v966 = vunpack.c.h.b16 %v393
      %v967 = vunpack.c.l.b16 %v394
      %v968 = vunpack.c.h.b16 %v394
      %v969 = vunpack.c.l.b16 %v395
      %v970 = vunpack.c.h.b16 %v395
      %v971 = vunpack.c.l.b16 %v396
      %v972 = vunpack.c.h.b16 %v396
      %v973 = vunpack.c.l.b16 %v397
      %v974 = vunpack.c.h.b16 %v397
      %v975 = vunpack.c.l.b16 %v398
      %v976 = vunpack.c.h.b16 %v398
      %v977 = vunpack.c.l.b16 %v399
      %v978 = vunpack.c.h.b16 %v399
      %v979 = vunpack.c.l.b16 %v400
      %v980 = vunpack.c.h.b16 %v400
      %v981 = vunpack.c.l.b16 %v401
      %v982 = vunpack.c.h.b16 %v401
      %v983 = vunpack.c.l.b16 %v402
      %v984 = vunpack.c.h.b16 %v402
      %v985 = vunpack.c.l.b16 %v403
      %v986 = vunpack.c.h.b16 %v403
      %v987 = vunpack.c.l.b16 %v404
      %v988 = vunpack.c.h.b16 %v404
      %v989 = vunpack.c.l.b16 %v405
      %v990 = vunpack.c.h.b16 %v405
      %v991 = vunpack.c.l.b16 %v406
      %v992 = vunpack.c.h.b16 %v406
      %v993 = vunpack.c.l.b16 %v407
      %v994 = vunpack.c.h.b16 %v407
      %v995 = vunpack.c.l.b16 %v408
      %v996 = vunpack.c.h.b16 %v408
      %v997 = vunpack.c.l.b16 %v409
      %v998 = vunpack.c.h.b16 %v409
      %v999 = vunpack.c.l.b16 %v410
      %v1000 = vunpack.c.h.b16 %v410
      %v1001 = vunpack.c.l.b16 %v411
      %v1002 = vunpack.c.h.b16 %v411
      %v1003 = vunpack.c.l.b16 %v412
      %v1004 = vunpack.c.h.b16 %v412
      %v1005 = vunpack.c.l.b16 %v413
      %v1006 = vunpack.c.h.b16 %v413
      %v1007 = vunpack.c.l.b16 %v414
      %v1008 = vunpack.c.h.b16 %v414
      %v1009 = vunpack.c.l.b16 %v415
      %v1010 = vunpack.c.h.b16 %v415
      %v1011 = vunpack.c.l.b16 %v416
      %v1012 = vunpack.c.h.b16 %v416
      %v1013 = vunpack.c.l.b16 %v417
      %v1014 = vunpack.c.h.b16 %v417
      %v1015 = vunpack.c.l.b16 %v418
      %v1016 = vunpack.c.h.b16 %v418
      %v1017 = vunpack.c.l.b16 %v419
      %v1018 = vunpack.c.h.b16 %v419
      %v1019 = vunpack.c.l.b16 %v420
      %v1020 = vunpack.c.h.b16 %v420
      %v1021 = vunpack.c.l.b16 %v421
      %v1022 = vunpack.c.h.b16 %v421
      %v1023 = vunpack.c.l.b16 %v422
      %v1024 = vunpack.c.h.b16 %v422
      %v1025 = vunpack.c.l.b16 %v423
      %v1026 = vunpack.c.h.b16 %v423
      %v1027 = vunpack.c.l.b16 %v424
      %v1028 = vunpack.c.h.b16 %v424
      %v1029 = vunpack.c.l.b16 %v425
      %v1030 = vunpack.c.h.b16 %v425
      %v1031 = vunpack.c.l.b16 %v426
      %v1032 = vunpack.c.h.b16 %v426
      %v1033 = vunpack.c.l.b16 %v427
      %v1034 = vunpack.c.h.b16 %v427
      %v1035 = vunpack.c.l.b16 %v428
      %v1036 = vunpack.c.h.b16 %v428
      %v1037 = vunpack.c.l.b16 %v429
      %v1038 = vunpack.c.h.b16 %v429
      %v1039 = vunpack.c.l.b16 %v430
      %v1040 = vunpack.c.h.b16 %v430
      %v1041 = vunpack.c.l.b16 %v431
      %v1042 = vunpack.c.h.b16 %v431
      %v1043 = vunpack.c.l.b16 %v432
      %v1044 = vunpack.c.h.b16 %v432
      %v1045 = vunpack.c.l.b16 %v433
      %v1046 = vunpack.c.h.b16 %v433
      %v1047 = vunpack.c.l.b16 %v434
      %v1048 = vunpack.c.h.b16 %v434
      %v1049 = vunpack.c.l.b16 %v435
      %v1050 = vunpack.c.h.b16 %v435
      %v1051 = vunpack.c.l.b16 %v436
      %v1052 = vunpack.c.h.b16 %v436
      %v1053 = vunpack.c.l.b16 %v437
      %v1054 = vunpack.c.h.b16 %v437
      %v1055 = vunpack.c.l.b16 %v438
      %v1056 = vunpack.c.h.b16 %v438
      %v1057 = vunpack.c.l.b16 %v439
      %v1058 = vunpack.c.h.b16 %v439
      %v1059 = vunpack.c.l.b16 %v440
      %v1060 = vunpack.c.h.b16 %v440
      %v1061 = vunpack.c.l.b16 %v441
      %v1062 = vunpack.c.h.b16 %v441
      %v1063 = vunpack.c.l.b16 %v442
      %v1064 = vunpack.c.h.b16 %v442
      %v1065 = vunpack.c.l.b16 %v443
      %v1066 = vunpack.c.h.b16 %v443
      %v1067 = vunpack.c.l.b16 %v444
      %v1068 = vunpack.c.h.b16 %v444
      %v1069 = vunpack.c.l.b16 %v445
      %v1070 = vunpack.c.h.b16 %v445
      %v1071 = vunpack.c.l.b16 %v446
      %v1072 = vunpack.c.h.b16 %v446
      %v1073 = vunpack.c.l.b16 %v447
      %v1074 = vunpack.c.h.b16 %v447
      %v1075 = vunpack.c.l.b16 %v448
      %v1076 = vunpack.c.h.b16 %v448
      %v1077 = vunpack.c.l.b16 %v449
      %v1078 = vunpack.c.h.b16 %v449
      %v1079 = vunpack.c.l.b16 %v450
      %v1080 = vunpack.c.h.b16 %v450
      %v1081 = vunpack.c.l.b16 %v451
      %v1082 = vunpack.c.h.b16 %v451
      %v1083 = vunpack.c.l.b16 %v452
      %v1084 = vunpack.c.h.b16 %v452
      %v1085 = vunpack.c.l.b16 %v453
      %v1086 = vunpack.c.h.b16 %v453
      %v1087 = vunpack.c.l.b16 %v454
      %v1088 = vunpack.c.h.b16 %v454
      %v1089 = vunpack.c.l.b16 %v455
      %v1090 = vunpack.c.h.b16 %v455
      %v1091 = vunpack.c.l.b16 %v456
      %v1092 = vunpack.c.h.b16 %v456
      %v1093 = vunpack.c.l.b16 %v457
      %v1094 = vunpack.c.h.b16 %v457
      %v1095 = vunpack.c.l.b16 %v458
      %v1096 = vunpack.c.h.b16 %v458
      %v1097 = vunpack.c.l.b16 %v459
      %v1098 = vunpack.c.h.b16 %v459
      %v1099 = vunpack.c.l.b16 %v460
      %v1100 = vunpack.c.h.b16 %v460
      %v1101 = vunpack.c.l.b16 %v461
      %v1102 = vunpack.c.h.b16 %v461
      %v1103 = vunpack.c.l.b16 %v462
      %v1104 = vunpack.c.h.b16 %v462
      %v1105 = vunpack.c.l.b16 %v463
      %v1106 = vunpack.c.h.b16 %v463
      %v1107 = vunpack.c.l.b16 %v464
      %v1108 = vunpack.c.h.b16 %v464
      %v1109 = vunpack.c.l.b16 %v465
      %v1110 = vunpack.c.h.b16 %v465
      %v1111 = vunpack.c.l.b16 %v466
      %v1112 = vunpack.c.h.b16 %v466
      %v1113 = vunpack.c.l.b16 %v467
      %v1114 = vunpack.c.h.b16 %v467
      %v1115 = vunpack.c.l.b16 %v468
      %v1116 = vunpack.c.h.b16 %v468
      %v1117 = vunpack.c.l.b16 %v469
      %v1118 = vunpack.c.h.b16 %v469
      %v1119 = vunpack.c.l.b16 %v470
      %v1120 = vunpack.c.h.b16 %v470
      %v1121 = vpack.c.b16 %v825, %v821
      %v1122 = vpack.c.b16 %v826, %v822
      %v1123 = vpack.c.b16 %v827, %v823
      %v1124 = vpack.c.b16 %v828, %v824
      %v1125 = vpack.c.b16 %v833, %v829
      %v1126 = vpack.c.b16 %v834, %v830
      %v1127 = vpack.c.b16 %v835, %v831
      %v1128 = vpack.c.b16 %v836, %v832
      %v1129 = vpack.c.b16 %v841, %v837
      %v1130 = vpack.c.b16 %v842, %v838
      %v1131 = vpack.c.b16 %v843, %v839
      %v1132 = vpack.c.b16 %v844, %v840
      %v1133 = vpack.c.b16 %v849, %v845
      %v1134 = vpack.c.b16 %v850, %v846
      %v1135 = vpack.c.b16 %v851, %v847
      %v1136 = vpack.c.b16 %v852, %v848
      %v1137 = vpack.c.b16 %v857, %v853
      %v1138 = vpack.c.b16 %v858, %v854
      %v1139 = vpack.c.b16 %v859, %v855
      %v1140 = vpack.c.b16 %v860, %v856
      %v1141 = vpack.c.b16 %v865, %v861
      %v1142 = vpack.c.b16 %v866, %v862
      %v1143 = vpack.c.b16 %v867, %v863
      %v1144 = vpack.c.b16 %v868, %v864
      %v1145 = vpack.c.b16 %v873, %v869
      %v1146 = vpack.c.b16 %v874, %v870
      %v1147 = vpack.c.b16 %v875, %v871
      %v1148 = vpack.c.b16 %v876, %v872
      %v1149 = vpack.c.b16 %v881, %v877
      %v1150 = vpack.c.b16 %v882, %v878
      %v1151 = vpack.c.b16 %v883, %v879
      %v1152 = vpack.c.b16 %v884, %v880
      %v1153 = vpack.c.b16 %v889, %v885
      %v1154 = vpack.c.b16 %v890, %v886
      %v1155 = vpack.c.b16 %v891, %v887
      %v1156 = vpack.c.b16 %v892, %v888
      %v1157 = vpack.c.b16 %v897, %v893
      %v1158 = vpack.c.b16 %v898, %v894
      %v1159 = vpack.c.b16 %v899, %v895
      %v1160 = vpack.c.b16 %v900, %v896
      %v1161 = vpack.c.b16 %v905, %v901
      %v1162 = vpack.c.b16 %v906, %v902
      %v1163 = vpack.c.b16 %v907, %v903
      %v1164 = vpack.c.b16 %v908, %v904
      %v1165 = vpack.c.b16 %v913, %v909
      %v1166 = vpack.c.b16 %v914, %v910
      %v1167 = vpack.c.b16 %v915, %v911
      %v1168 = vpack.c.b16 %v916, %v912
      %v1169 = vpack.c.b16 %v921, %v917
      %v1170 = vpack.c.b16 %v922, %v918
      %v1171 = vpack.c.b16 %v923, %v919
      %v1172 = vpack.c.b16 %v924, %v920
      %v1173 = vpack.c.b16 %v929, %v925
      %v1174 = vpack.c.b16 %v930, %v926
      %v1175 = vpack.c.b16 %v931, %v927
      %v1176 = vpack.c.b16 %v932, %v928
      %v1177 = vpack.c.b16 %v937, %v933
      %v1178 = vpack.c.b16 %v938, %v934
      %v1179 = vpack.c.b16 %v939, %v935
      %v1180 = vpack.c.b16 %v940, %v936
      %v1181 = vpack.c.b16 %v945, %v941
      %v1182 = vpack.c.b16 %v946, %v942
      %v1183 = vpack.c.b16 %v947, %v943
      %v1184 = vpack.c.b16 %v948, %v944
      %v1185 = vpack.c.b16 %v953, %v949
      %v1186 = vpack.c.b16 %v954, %v950
      %v1187 = vpack.c.b16 %v955, %v951
      %v1188 = vpack.c.b16 %v956, %v952
      %v1189 = vpack.c.b16 %v961, %v957
      %v1190 = vpack.c.b16 %v962, %v958
      %v1191 = vpack.c.b16 %v963, %v959
      %v1192 = vpack.c.b16 %v964, %v960
      %v1193 = vpack.c.b16 %v969, %v965
      %v1194 = vpack.c.b16 %v970, %v966
      %v1195 = vpack.c.b16 %v971, %v967
      %v1196 = vpack.c.b16 %v972, %v968
      %v1197 = vpack.c.b16 %v977, %v973
      %v1198 = vpack.c.b16 %v978, %v974
      %v1199 = vpack.c.b16 %v979, %v975
      %v1200 = vpack.c.b16 %v980, %v976
      %v1201 = vpack.c.b16 %v985, %v981
      %v1202 = vpack.c.b16 %v986, %v982
      %v1203 = vpack.c.b16 %v987, %v983
      %v1204 = vpack.c.b16 %v988, %v984
      %v1205 = vpack.c.b16 %v993, %v989
      %v1206 = vpack.c.b16 %v994, %v990
      %v1207 = vpack.c.b16 %v995, %v991
      %v1208 = vpack.c.b16 %v996, %v992
      %v1209 = vpack.c.b16 %v1001, %v997
      %v1210 = vpack.c.b16 %v1002, %v998
      %v1211 = vpack.c.b16 %v1003, %v999
      %v1212 = vpack.c.b16 %v1004, %v1000
      %v1213 = vpack.c.b16 %v1009, %v1005
      %v1214 = vpack.c.b16 %v1010, %v1006
      %v1215 = vpack.c.b16 %v1011, %v1007
      %v1216 = vpack.c.b16 %v1012, %v1008
      %v1217 = vpack.c.b16 %v1017, %v1013
      %v1218 = vpack.c.b16 %v1018, %v1014
      %v1219 = vpack.c.b16 %v1019, %v1015
      %v1220 = vpack.c.b16 %v1020, %v1016
      %v1221 = vpack.c.b16 %v1025, %v1021
      %v1222 = vpack.c.b16 %v1026, %v1022
      %v1223 = vpack.c.b16 %v1027, %v1023
      %v1224 = vpack.c.b16 %v1028, %v1024
      %v1225 = vpack.c.b16 %v1033, %v1029
      %v1226 = vpack.c.b16 %v1034, %v1030
      %v1227 = vpack.c.b16 %v1035, %v1031
      %v1228 = vpack.c.b16 %v1036, %v1032
      %v1229 = vpack.c.b16 %v1041, %v1037
      %v1230 = vpack.c.b16 %v1042, %v1038
      %v1231 = vpack.c.b16 %v1043, %v1039
      %v1232 = vpack.c.b16 %v1044, %v1040
      %v1233 = vpack.c.b16 %v1049, %v1045
      %v1234 = vpack.c.b16 %v1050, %v1046
      %v1235 = vpack.c.b16 %v1051, %v1047
      %v1236 = vpack.c.b16 %v1052, %v1048
      %v1237 = vpack.c.b16 %v1057, %v1053
      %v1238 = vpack.c.b16 %v1058, %v1054
      %v1239 = vpack.c.b16 %v1059, %v1055
      %v1240 = vpack.c.b16 %v1060, %v1056
      %v1241 = vpack.c.b16 %v1065, %v1061
      %v1242 = vpack.c.b16 %v1066, %v1062
      %v1243 = vpack.c.b16 %v1067, %v1063
      %v1244 = vpack.c.b16 %v1068, %v1064
      %v1245 = vpack.c.b16 %v1073, %v1069
      %v1246 = vpack.c.b16 %v1074, %v1070
      %v1247 = vpack.c.b16 %v1075, %v1071
      %v1248 = vpack.c.b16 %v1076, %v1072
      %v1249 = vpack.c.b16 %v1081, %v1077
      %v1250 = vpack.c.b16 %v1082, %v1078
      %v1251 = vpack.c.b16 %v1083, %v1079
      %v1252 = vpack.c.b16 %v1084, %v1080
      %v1253 = vpack.c.b16 %v1089, %v1085
      %v1254 = vpack.c.b16 %v1090, %v1086
      %v1255 = vpack.c.b16 %v1091, %v1087
      %v1256 = vpack.c.b16 %v1092, %v1088
      %v1257 = vpack.c.b16 %v1097, %v1093
      %v1258 = vpack.c.b16 %v1098, %v1094
      %v1259 = vpack.c.b16 %v1099, %v1095
      %v1260 = vpack.c.b16 %v1100, %v1096
      %v1261 = vpack.c.b16 %v1105, %v1101
      %v1262 = vpack.c.b16 %v1106, %v1102
      %v1263 = vpack.c.b16 %v1107, %v1103
      %v1264 = vpack.c.b16 %v1108, %v1104
      %v1265 = vpack.c.b16 %v1113, %v1109
      %v1266 = vpack.c.b16 %v1114, %v1110
      %v1267 = vpack.c.b16 %v1115, %v1111
      %v1268 = vpack.c.b16 %v1116, %v1112
      %v1269 = vpack.c.b16 %v1117, %v1117
      %v1270 = vpack.c.b16 %v1118, %v1118
      %v1271 = vpack.c.b16 %v1119, %v1119
      %v1272 = vpack.c.b16 %v1120, %v1120
      %vm1421 = vcmask 719872
      %v1423 = vsel %vm1421, %v603, 0
      %v1426 = vsel %vm1421, %v608, 0
      %v1429 = vsel %vm1421, %v613, 0
      %v1432 = vsel %vm1421, %v618, 0
      %v1435 = vsel %vm1421, %v623, 0
      %v1438 = vsel %vm1421, %v628, 0
      %v1441 = vsel %vm1421, %v633, 0
      %v1444 = vsel %vm1421, %v638, 0
      %vm1446 = vcmask 1043456
      %v1448 = vsel %vm1446, %v1269, 0
      %v1451 = vsel %vm1446, %v1270, 0
      %v1454 = vsel %vm1446, %v1271, 0
      %v1457 = vsel %vm1446, %v1272, 0
      %1459 = vmatprep.subr.bf16.mxu0 %v1122
      %1460 = vmatpush1.bf16.msra.mxu0 %v1121
      %1461 = vmatprep.subr.bf16.mxu0 %v1126
      %1462 = vmatpush1.bf16.msra.mxu0 %v1125
      %1463 = vmatprep.subr.bf16.mxu0 %v1130
      %1464 = vmatpush1.bf16.msra.mxu0 %v1129
      %1465 = vmatprep.subr.bf16.mxu0 %v1134
      %1466 = vmatpush1.bf16.msra.mxu0 %v1133
      %1467 = vmatprep.subr.bf16.mxu0 %v1138
      %1468 = vmatpush1.bf16.msra.mxu0 %v1137
      %1469 = vmatprep.subr.bf16.mxu0 %v1142
      %1470 = vmatpush1.bf16.msra.mxu0 %v1141
      %1471 = vmatprep.subr.bf16.mxu0 %v1146
      %1472 = vmatpush1.bf16.msra.mxu0 %v1145
      %1473 = vmatprep.subr.bf16.mxu0 %v1150
      %1474 = vmatpush1.bf16.msra.mxu0 %v1149
      %1475 = vmatprep.subr.bf16.mxu0 %v1154
      %1476 = vmatpush1.bf16.msra.mxu0 %v1153
      %1477 = vmatprep.subr.bf16.mxu0 %v1158
      %1478 = vmatpush1.bf16.msra.mxu0 %v1157
      %1479 = vmatprep.subr.bf16.mxu0 %v1162
      %1480 = vmatpush1.bf16.msra.mxu0 %v1161
      %1481 = vmatprep.subr.bf16.mxu0 %v1166
      %1482 = vmatpush1.bf16.msra.mxu0 %v1165
      %1483 = vmatprep.subr.bf16.mxu0 %v1170
      %1484 = vmatpush1.bf16.msra.mxu0 %v1169
      %1485 = vmatprep.subr.bf16.mxu0 %v1174
      %1486 = vmatpush1.bf16.msra.mxu0 %v1173
      %1487 = vmatprep.subr.bf16.mxu0 %v1178
      %1488 = vmatpush1.bf16.msra.mxu0 %v1177
      %1489 = vmatprep.subr.bf16.mxu0 %v1182
      %1490 = vmatpush1.bf16.msra.mxu0 %v1181
      %1491 = vmatprep.mubr.bf16.mxu0 %v600
      %1492 = vmatmul.mubr.bf16.gmra.mrb[0].mxu0 %v599
      %v1493 = vpop.f32.mrb[0].mxu0
      %v1494 = vadd.f32 0.0, %v1493
      %v1495 = vpop.f32.mrb[0].mxu0
      %v1496 = vadd.f32 0.0, %v1495
      %v1497 = vpop.f32.mrb[0].mxu0
      %v1498 = vadd.f32 0.0, %v1497
      %v1499 = vpop.f32.mrb[0].mxu0
      %v1500 = vadd.f32 0.0, %v1499
      %1501 = vmatprep.mubr.bf16.mxu0 %v605
      %1502 = vmatmul.mubr.bf16.gmra.mrb[0].mxu0 %v604
      %v1503 = vpop.f32.mrb[0].mxu0
      %v1504 = vadd.f32 0.0, %v1503
      %v1505 = vpop.f32.mrb[0].mxu0
      %v1506 = vadd.f32 0.0, %v1505
      %v1507 = vpop.f32.mrb[0].mxu0
      %v1508 = vadd.f32 0.0, %v1507
      %v1509 = vpop.f32.mrb[0].mxu0
      %v1510 = vadd.f32 0.0, %v1509
      %1511 = vmatprep.mubr.bf16.mxu0 %v610
      %1512 = vmatmul.mubr.bf16.gmra.mrb[0].mxu0 %v609
      %v1513 = vpop.f32.mrb[0].mxu0
      %v1514 = vadd.f32 0.0, %v1513
      %v1515 = vpop.f32.mrb[0].mxu0
      %v1516 = vadd.f32 0.0, %v1515
      %v1517 = vpop.f32.mrb[0].mxu0
      %v1518 = vadd.f32 0.0, %v1517
      %v1519 = vpop.f32.mrb[0].mxu0
      %v1520 = vadd.f32 0.0, %v1519
      %1521 = vmatprep.mubr.bf16.mxu0 %v615
      %1522 = vmatmul.mubr.bf16.gmra.mrb[0].mxu0 %v614
      %v1523 = vpop.f32.mrb[0].mxu0
      %v1524 = vadd.f32 0.0, %v1523
      %v1525 = vpop.f32.mrb[0].mxu0
      %v1526 = vadd.f32 0.0, %v1525
      %v1527 = vpop.f32.mrb[0].mxu0
      %v1528 = vadd.f32 0.0, %v1527
      %v1529 = vpop.f32.mrb[0].mxu0
      %v1530 = vadd.f32 0.0, %v1529
      %1531 = vmatprep.mubr.bf16.mxu0 %v620
      %1532 = vmatmul.mubr.bf16.gmra.mrb[0].mxu0 %v619
      %v1533 = vpop.f32.mrb[0].mxu0
      %v1534 = vadd.f32 0.0, %v1533
      %v1535 = vpop.f32.mrb[0].mxu0
      %v1536 = vadd.f32 0.0, %v1535
      %v1537 = vpop.f32.mrb[0].mxu0
      %v1538 = vadd.f32 0.0, %v1537
      %v1539 = vpop.f32.mrb[0].mxu0
      %v1540 = vadd.f32 0.0, %v1539
      %1541 = vmatprep.mubr.bf16.mxu0 %v625
      %1542 = vmatmul.mubr.bf16.gmra.mrb[0].mxu0 %v624
      %v1543 = vpop.f32.mrb[0].mxu0
      %v1544 = vadd.f32 0.0, %v1543
      %v1545 = vpop.f32.mrb[0].mxu0
      %v1546 = vadd.f32 0.0, %v1545
      %v1547 = vpop.f32.mrb[0].mxu0
      %v1548 = vadd.f32 0.0, %v1547
      %v1549 = vpop.f32.mrb[0].mxu0
      %v1550 = vadd.f32 0.0, %v1549
      %1551 = vmatprep.mubr.bf16.mxu0 %v630
      %1552 = vmatmul.mubr.bf16.gmra.mrb[0].mxu0 %v629
      %v1553 = vpop.f32.mrb[0].mxu0
      %v1554 = vadd.f32 0.0, %v1553
      %v1555 = vpop.f32.mrb[0].mxu0
      %v1556 = vadd.f32 0.0, %v1555
      %v1557 = vpop.f32.mrb[0].mxu0
      %v1558 = vadd.f32 0.0, %v1557
      %v1559 = vpop.f32.mrb[0].mxu0
      %v1560 = vadd.f32 0.0, %v1559
      %1561 = vmatprep.mubr.bf16.mxu0 %v635
      %1562 = vmatmul.mubr.bf16.gmra.mrb[0].mxu0 %v634
      %v1563 = vpop.f32.mrb[0].mxu0
      %v1564 = vadd.f32 0.0, %v1563
      %v1565 = vpop.f32.mrb[0].mxu0
      %v1566 = vadd.f32 0.0, %v1565
      %v1567 = vpop.f32.mrb[0].mxu0
      %v1568 = vadd.f32 0.0, %v1567
      %v1569 = vpop.f32.mrb[0].mxu0
      %v1570 = vadd.f32 0.0, %v1569
      %1571 = vdwg.mxu0
      %1572 = vmatprep.subr.bf16.mxu0 %v1186
      %1573 = vmatpush1.bf16.msra.mxu0 %v1185
      %1574 = vmatprep.subr.bf16.mxu0 %v1190
      %1575 = vmatpush1.bf16.msra.mxu0 %v1189
      %1576 = vmatprep.subr.bf16.mxu0 %v1194
      %1577 = vmatpush1.bf16.msra.mxu0 %v1193
      %1578 = vmatprep.subr.bf16.mxu0 %v1198
      %1579 = vmatpush1.bf16.msra.mxu0 %v1197
      %1580 = vmatprep.subr.bf16.mxu0 %v1202
      %1581 = vmatpush1.bf16.msra.mxu0 %v1201
      %1582 = vmatprep.subr.bf16.mxu0 %v1206
      %1583 = vmatpush1.bf16.msra.mxu0 %v1205
      %1584 = vmatprep.subr.bf16.mxu0 %v1210
      %1585 = vmatpush1.bf16.msra.mxu0 %v1209
      %1586 = vmatprep.subr.bf16.mxu0 %v1214
      %1587 = vmatpush1.bf16.msra.mxu0 %v1213
      %1588 = vmatprep.subr.bf16.mxu0 %v1218
      %1589 = vmatpush1.bf16.msra.mxu0 %v1217
      %1590 = vmatprep.subr.bf16.mxu0 %v1222
      %1591 = vmatpush1.bf16.msra.mxu0 %v1221
      %1592 = vmatprep.subr.bf16.mxu0 %v1226
      %1593 = vmatpush1.bf16.msra.mxu0 %v1225
      %1594 = vmatprep.subr.bf16.mxu0 %v1230
      %1595 = vmatpush1.bf16.msra.mxu0 %v1229
      %1596 = vmatprep.subr.bf16.mxu0 %v1234
      %1597 = vmatpush1.bf16.msra.mxu0 %v1233
      %1598 = vmatprep.subr.bf16.mxu0 %v1238
      %1599 = vmatpush1.bf16.msra.mxu0 %v1237
      %1600 = vmatprep.subr.bf16.mxu0 %v1242
      %1601 = vmatpush1.bf16.msra.mxu0 %v1241
      %1602 = vmatprep.subr.bf16.mxu0 %v1246
      %1603 = vmatpush1.bf16.msra.mxu0 %v1245
      %1604 = vmatprep.mubr.bf16.mxu0 %v602
      %1605 = vmatmul.mubr.bf16.gmra.mrb[0].mxu0 %v601
      %v1606 = vpop.f32.mrb[0].mxu0
      %v1607 = vadd.f32 %v1494, %v1606
      %v1608 = vpop.f32.mrb[0].mxu0
      %v1609 = vadd.f32 %v1496, %v1608
      %v1610 = vpop.f32.mrb[0].mxu0
      %v1611 = vadd.f32 %v1498, %v1610
      %v1612 = vpop.f32.mrb[0].mxu0
      %v1613 = vadd.f32 %v1500, %v1612
      %1614 = vmatprep.mubr.bf16.mxu0 %v607
      %1615 = vmatmul.mubr.bf16.gmra.mrb[0].mxu0 %v606
      %v1616 = vpop.f32.mrb[0].mxu0
      %v1617 = vadd.f32 %v1504, %v1616
      %v1618 = vpop.f32.mrb[0].mxu0
      %v1619 = vadd.f32 %v1506, %v1618
      %v1620 = vpop.f32.mrb[0].mxu0
      %v1621 = vadd.f32 %v1508, %v1620
      %v1622 = vpop.f32.mrb[0].mxu0
      %v1623 = vadd.f32 %v1510, %v1622
      %1624 = vmatprep.mubr.bf16.mxu0 %v612
      %1625 = vmatmul.mubr.bf16.gmra.mrb[0].mxu0 %v611
      %v1626 = vpop.f32.mrb[0].mxu0
      %v1627 = vadd.f32 %v1514, %v1626
      %v1628 = vpop.f32.mrb[0].mxu0
      %v1629 = vadd.f32 %v1516, %v1628
      %v1630 = vpop.f32.mrb[0].mxu0
      %v1631 = vadd.f32 %v1518, %v1630
      %v1632 = vpop.f32.mrb[0].mxu0
      %v1633 = vadd.f32 %v1520, %v1632
      %1634 = vmatprep.mubr.bf16.mxu0 %v617
      %1635 = vmatmul.mubr.bf16.gmra.mrb[0].mxu0 %v616
      %v1636 = vpop.f32.mrb[0].mxu0
      %v1637 = vadd.f32 %v1524, %v1636
      %v1638 = vpop.f32.mrb[0].mxu0
      %v1639 = vadd.f32 %v1526, %v1638
      %v1640 = vpop.f32.mrb[0].mxu0
      %v1641 = vadd.f32 %v1528, %v1640
      %v1642 = vpop.f32.mrb[0].mxu0
      %v1643 = vadd.f32 %v1530, %v1642
      %1644 = vmatprep.mubr.bf16.mxu0 %v622
      %1645 = vmatmul.mubr.bf16.gmra.mrb[0].mxu0 %v621
      %v1646 = vpop.f32.mrb[0].mxu0
      %v1647 = vadd.f32 %v1534, %v1646
      %v1648 = vpop.f32.mrb[0].mxu0
      %v1649 = vadd.f32 %v1536, %v1648
      %v1650 = vpop.f32.mrb[0].mxu0
      %v1651 = vadd.f32 %v1538, %v1650
      %v1652 = vpop.f32.mrb[0].mxu0
      %v1653 = vadd.f32 %v1540, %v1652
      %1654 = vmatprep.mubr.bf16.mxu0 %v627
      %1655 = vmatmul.mubr.bf16.gmra.mrb[0].mxu0 %v626
      %v1656 = vpop.f32.mrb[0].mxu0
      %v1657 = vadd.f32 %v1544, %v1656
      %v1658 = vpop.f32.mrb[0].mxu0
      %v1659 = vadd.f32 %v1546, %v1658
      %v1660 = vpop.f32.mrb[0].mxu0
      %v1661 = vadd.f32 %v1548, %v1660
      %v1662 = vpop.f32.mrb[0].mxu0
      %v1663 = vadd.f32 %v1550, %v1662
      %1664 = vmatprep.mubr.bf16.mxu0 %v632
      %1665 = vmatmul.mubr.bf16.gmra.mrb[0].mxu0 %v631
      %v1666 = vpop.f32.mrb[0].mxu0
      %v1667 = vadd.f32 %v1554, %v1666
      %v1668 = vpop.f32.mrb[0].mxu0
      %v1669 = vadd.f32 %v1556, %v1668
      %v1670 = vpop.f32.mrb[0].mxu0
      %v1671 = vadd.f32 %v1558, %v1670
      %v1672 = vpop.f32.mrb[0].mxu0
      %v1673 = vadd.f32 %v1560, %v1672
      %1674 = vmatprep.mubr.bf16.mxu0 %v637
      %1675 = vmatmul.mubr.bf16.gmra.mrb[0].mxu0 %v636
      %v1676 = vpop.f32.mrb[0].mxu0
      %v1677 = vadd.f32 %v1564, %v1676
      %v1678 = vpop.f32.mrb[0].mxu0
      %v1679 = vadd.f32 %v1566, %v1678
      %v1680 = vpop.f32.mrb[0].mxu0
      %v1681 = vadd.f32 %v1568, %v1680
      %v1682 = vpop.f32.mrb[0].mxu0
      %v1683 = vadd.f32 %v1570, %v1682
      %1684 = vdwg.mxu0
      %1685 = vmatprep.subr.bf16.mxu0 %v1250
      %1686 = vmatpush1.bf16.msra.mxu0 %v1249
      %1687 = vmatprep.subr.bf16.mxu0 %v1254
      %1688 = vmatpush1.bf16.msra.mxu0 %v1253
      %1689 = vmatprep.subr.bf16.mxu0 %v1258
      %1690 = vmatpush1.bf16.msra.mxu0 %v1257
      %1691 = vmatprep.subr.bf16.mxu0 %v1262
      %1692 = vmatpush1.bf16.msra.mxu0 %v1261
      %1693 = vmatprep.subr.bf16.mxu0 %v1266
      %1694 = vmatpush1.bf16.msra.mxu0 %v1265
      %1695 = vmatprep.subr.bf16.mxu0 %v1451
      %1696 = vmatpush1.bf16.msra.mxu0 %v1448
      %1697 = vmatprep.subr.bf16.mxu0 0
      %1698 = vmatpush1.bf16.msra.mxu0 0
      %1699 = vmatprep.subr.bf16.mxu0 0
      %1700 = vmatpush1.bf16.msra.mxu0 0
      %1701 = vmatprep.subr.bf16.mxu0 0
      %1702 = vmatpush1.bf16.msra.mxu0 0
      %1703 = vmatprep.subr.bf16.mxu0 0
      %1704 = vmatpush1.bf16.msra.mxu0 0
      %1705 = vmatprep.subr.bf16.mxu0 0
      %1706 = vmatpush1.bf16.msra.mxu0 0
      %1707 = vmatprep.subr.bf16.mxu0 0
      %1708 = vmatpush1.bf16.msra.mxu0 0
      %1709 = vmatprep.subr.bf16.mxu0 0
      %1710 = vmatpush1.bf16.msra.mxu0 0
      %1711 = vmatprep.subr.bf16.mxu0 0
      %1712 = vmatpush1.bf16.msra.mxu0 0
      %1713 = vmatprep.subr.bf16.mxu0 0
      %1714 = vmatpush1.bf16.msra.mxu0 0
      %1715 = vmatprep.subr.bf16.mxu0 0
      %1716 = vmatpush1.bf16.msra.mxu0 0
      %1717 = vmatprep.mubr.bf16.mxu0 0
      %1718 = vmatmul.mubr.bf16.gmra.mrb[0].mxu0 %v1423
      %v1719 = vpop.f32.mrb[0].mxu0
      %v1720 = vadd.f32 %v1607, %v1719
      %v1721 = vpop.f32.mrb[0].mxu0
      %v1722 = vadd.f32 %v1609, %v1721
      %v1723 = vpop.f32.mrb[0].mxu0
      %v1724 = vadd.f32 %v1611, %v1723
      %v1725 = vpop.f32.mrb[0].mxu0
      %v1726 = vadd.f32 %v1613, %v1725
      %1727 = vmatprep.mubr.bf16.mxu0 0
      %1728 = vmatmul.mubr.bf16.gmra.mrb[0].mxu0 %v1426
      %v1729 = vpop.f32.mrb[0].mxu0
      %v1730 = vadd.f32 %v1617, %v1729
      %v1731 = vpop.f32.mrb[0].mxu0
      %v1732 = vadd.f32 %v1619, %v1731
      %v1733 = vpop.f32.mrb[0].mxu0
      %v1734 = vadd.f32 %v1621, %v1733
      %v1735 = vpop.f32.mrb[0].mxu0
      %v1736 = vadd.f32 %v1623, %v1735
      %1737 = vmatprep.mubr.bf16.mxu0 0
      %1738 = vmatmul.mubr.bf16.gmra.mrb[0].mxu0 %v1429
      %v1739 = vpop.f32.mrb[0].mxu0
      %v1740 = vadd.f32 %v1627, %v1739
      %v1741 = vpop.f32.mrb[0].mxu0
      %v1742 = vadd.f32 %v1629, %v1741
      %v1743 = vpop.f32.mrb[0].mxu0
      %v1744 = vadd.f32 %v1631, %v1743
      %v1745 = vpop.f32.mrb[0].mxu0
      %v1746 = vadd.f32 %v1633, %v1745
      %1747 = vmatprep.mubr.bf16.mxu0 0
      %1748 = vmatmul.mubr.bf16.gmra.mrb[0].mxu0 %v1432
      %v1749 = vpop.f32.mrb[0].mxu0
      %v1750 = vadd.f32 %v1637, %v1749
      %v1751 = vpop.f32.mrb[0].mxu0
      %v1752 = vadd.f32 %v1639, %v1751
      %v1753 = vpop.f32.mrb[0].mxu0
      %v1754 = vadd.f32 %v1641, %v1753
      %v1755 = vpop.f32.mrb[0].mxu0
      %v1756 = vadd.f32 %v1643, %v1755
      %1757 = vmatprep.mubr.bf16.mxu0 0
      %1758 = vmatmul.mubr.bf16.gmra.mrb[0].mxu0 %v1435
      %v1759 = vpop.f32.mrb[0].mxu0
      %v1760 = vadd.f32 %v1647, %v1759
      %v1761 = vpop.f32.mrb[0].mxu0
      %v1762 = vadd.f32 %v1649, %v1761
      %v1763 = vpop.f32.mrb[0].mxu0
      %v1764 = vadd.f32 %v1651, %v1763
      %v1765 = vpop.f32.mrb[0].mxu0
      %v1766 = vadd.f32 %v1653, %v1765
      %1767 = vmatprep.mubr.bf16.mxu0 0
      %1768 = vmatmul.mubr.bf16.gmra.mrb[0].mxu0 %v1438
      %v1769 = vpop.f32.mrb[0].mxu0
      %v1770 = vadd.f32 %v1657, %v1769
      %v1771 = vpop.f32.mrb[0].mxu0
      %v1772 = vadd.f32 %v1659, %v1771
      %v1773 = vpop.f32.mrb[0].mxu0
      %v1774 = vadd.f32 %v1661, %v1773
      %v1775 = vpop.f32.mrb[0].mxu0
      %v1776 = vadd.f32 %v1663, %v1775
      %1777 = vmatprep.mubr.bf16.mxu0 0
      %1778 = vmatmul.mubr.bf16.gmra.mrb[0].mxu0 %v1441
      %v1779 = vpop.f32.mrb[0].mxu0
      %v1780 = vadd.f32 %v1667, %v1779
      %v1781 = vpop.f32.mrb[0].mxu0
      %v1782 = vadd.f32 %v1669, %v1781
      %v1783 = vpop.f32.mrb[0].mxu0
      %v1784 = vadd.f32 %v1671, %v1783
      %v1785 = vpop.f32.mrb[0].mxu0
      %v1786 = vadd.f32 %v1673, %v1785
      %1787 = vmatprep.mubr.bf16.mxu0 0
      %1788 = vmatmul.mubr.bf16.gmra.mrb[0].mxu0 %v1444
      %v1789 = vpop.f32.mrb[0].mxu0
      %v1790 = vadd.f32 %v1677, %v1789
      %v1791 = vpop.f32.mrb[0].mxu0
      %v1792 = vadd.f32 %v1679, %v1791
      %v1793 = vpop.f32.mrb[0].mxu0
      %v1794 = vadd.f32 %v1681, %v1793
      %v1795 = vpop.f32.mrb[0].mxu0
      %v1796 = vadd.f32 %v1683, %v1795
      %1797 = vdwg.mxu0
      %1798 = vmatprep.subr.bf16.mxu0 %v1124
      %1799 = vmatpush1.bf16.msra.mxu0 %v1123
      %1800 = vmatprep.subr.bf16.mxu0 %v1128
      %1801 = vmatpush1.bf16.msra.mxu0 %v1127
      %1802 = vmatprep.subr.bf16.mxu0 %v1132
      %1803 = vmatpush1.bf16.msra.mxu0 %v1131
      %1804 = vmatprep.subr.bf16.mxu0 %v1136
      %1805 = vmatpush1.bf16.msra.mxu0 %v1135
      %1806 = vmatprep.subr.bf16.mxu0 %v1140
      %1807 = vmatpush1.bf16.msra.mxu0 %v1139
      %1808 = vmatprep.subr.bf16.mxu0 %v1144
      %1809 = vmatpush1.bf16.msra.mxu0 %v1143
      %1810 = vmatprep.subr.bf16.mxu0 %v1148
      %1811 = vmatpush1.bf16.msra.mxu0 %v1147
      %1812 = vmatprep.subr.bf16.mxu0 %v1152
      %1813 = vmatpush1.bf16.msra.mxu0 %v1151
      %1814 = vmatprep.subr.bf16.mxu0 %v1156
      %1815 = vmatpush1.bf16.msra.mxu0 %v1155
      %1816 = vmatprep.subr.bf16.mxu0 %v1160
      %1817 = vmatpush1.bf16.msra.mxu0 %v1159
      %1818 = vmatprep.subr.bf16.mxu0 %v1164
      %1819 = vmatpush1.bf16.msra.mxu0 %v1163
      %1820 = vmatprep.subr.bf16.mxu0 %v1168
      %1821 = vmatpush1.bf16.msra.mxu0 %v1167
      %1822 = vmatprep.subr.bf16.mxu0 %v1172
      %1823 = vmatpush1.bf16.msra.mxu0 %v1171
      %1824 = vmatprep.subr.bf16.mxu0 %v1176
      %1825 = vmatpush1.bf16.msra.mxu0 %v1175
      %1826 = vmatprep.subr.bf16.mxu0 %v1180
      %1827 = vmatpush1.bf16.msra.mxu0 %v1179
      %1828 = vmatprep.subr.bf16.mxu0 %v1184
      %1829 = vmatpush1.bf16.msra.mxu0 %v1183
      %1830 = vmatprep.mubr.bf16.mxu0 %v600
      %1831 = vmatmul.mubr.bf16.gmra.mrb[0].mxu0 %v599
      %v1832 = vpop.f32.mrb[0].mxu0
      %v1833 = vadd.f32 0.0, %v1832
      %v1834 = vpop.f32.mrb[0].mxu0
      %v1835 = vadd.f32 0.0, %v1834
      %v1836 = vpop.f32.mrb[0].mxu0
      %v1837 = vadd.f32 0.0, %v1836
      %v1838 = vpop.f32.mrb[0].mxu0
      %v1839 = vadd.f32 0.0, %v1838
      %1840 = vmatprep.mubr.bf16.mxu0 %v605
      %1841 = vmatmul.mubr.bf16.gmra.mrb[0].mxu0 %v604
      %v1842 = vpop.f32.mrb[0].mxu0
      %v1843 = vadd.f32 0.0, %v1842
      %v1844 = vpop.f32.mrb[0].mxu0
      %v1845 = vadd.f32 0.0, %v1844
      %v1846 = vpop.f32.mrb[0].mxu0
      %v1847 = vadd.f32 0.0, %v1846
      %v1848 = vpop.f32.mrb[0].mxu0
      %v1849 = vadd.f32 0.0, %v1848
      %1850 = vmatprep.mubr.bf16.mxu0 %v610
      %1851 = vmatmul.mubr.bf16.gmra.mrb[0].mxu0 %v609
      %v1852 = vpop.f32.mrb[0].mxu0
      %v1853 = vadd.f32 0.0, %v1852
      %v1854 = vpop.f32.mrb[0].mxu0
      %v1855 = vadd.f32 0.0, %v1854
      %v1856 = vpop.f32.mrb[0].mxu0
      %v1857 = vadd.f32 0.0, %v1856
      %v1858 = vpop.f32.mrb[0].mxu0
      %v1859 = vadd.f32 0.0, %v1858
      %1860 = vmatprep.mubr.bf16.mxu0 %v615
      %1861 = vmatmul.mubr.bf16.gmra.mrb[0].mxu0 %v614
      %v1862 = vpop.f32.mrb[0].mxu0
      %v1863 = vadd.f32 0.0, %v1862
      %v1864 = vpop.f32.mrb[0].mxu0
      %v1865 = vadd.f32 0.0, %v1864
      %v1866 = vpop.f32.mrb[0].mxu0
      %v1867 = vadd.f32 0.0, %v1866
      %v1868 = vpop.f32.mrb[0].mxu0
      %v1869 = vadd.f32 0.0, %v1868
      %1870 = vmatprep.mubr.bf16.mxu0 %v620
      %1871 = vmatmul.mubr.bf16.gmra.mrb[0].mxu0 %v619
      %v1872 = vpop.f32.mrb[0].mxu0
      %v1873 = vadd.f32 0.0, %v1872
      %v1874 = vpop.f32.mrb[0].mxu0
      %v1875 = vadd.f32 0.0, %v1874
      %v1876 = vpop.f32.mrb[0].mxu0
      %v1877 = vadd.f32 0.0, %v1876
      %v1878 = vpop.f32.mrb[0].mxu0
      %v1879 = vadd.f32 0.0, %v1878
      %1880 = vmatprep.mubr.bf16.mxu0 %v625
      %1881 = vmatmul.mubr.bf16.gmra.mrb[0].mxu0 %v624
      %v1882 = vpop.f32.mrb[0].mxu0
      %v1883 = vadd.f32 0.0, %v1882
      %v1884 = vpop.f32.mrb[0].mxu0
      %v1885 = vadd.f32 0.0, %v1884
      %v1886 = vpop.f32.mrb[0].mxu0
      %v1887 = vadd.f32 0.0, %v1886
      %v1888 = vpop.f32.mrb[0].mxu0
      %v1889 = vadd.f32 0.0, %v1888
      %1890 = vmatprep.mubr.bf16.mxu0 %v630
      %1891 = vmatmul.mubr.bf16.gmra.mrb[0].mxu0 %v629
      %v1892 = vpop.f32.mrb[0].mxu0
      %v1893 = vadd.f32 0.0, %v1892
      %v1894 = vpop.f32.mrb[0].mxu0
      %v1895 = vadd.f32 0.0, %v1894
      %v1896 = vpop.f32.mrb[0].mxu0
      %v1897 = vadd.f32 0.0, %v1896
      %v1898 = vpop.f32.mrb[0].mxu0
      %v1899 = vadd.f32 0.0, %v1898
      %1900 = vmatprep.mubr.bf16.mxu0 %v635
      %1901 = vmatmul.mubr.bf16.gmra.mrb[0].mxu0 %v634
      %v1902 = vpop.f32.mrb[0].mxu0
      %v1903 = vadd.f32 0.0, %v1902
      %v1904 = vpop.f32.mrb[0].mxu0
      %v1905 = vadd.f32 0.0, %v1904
      %v1906 = vpop.f32.mrb[0].mxu0
      %v1907 = vadd.f32 0.0, %v1906
      %v1908 = vpop.f32.mrb[0].mxu0
      %v1909 = vadd.f32 0.0, %v1908
      %1910 = vdwg.mxu0
      %1911 = vmatprep.subr.bf16.mxu0 %v1188
      %1912 = vmatpush1.bf16.msra.mxu0 %v1187
      %1913 = vmatprep.subr.bf16.mxu0 %v1192
      %1914 = vmatpush1.bf16.msra.mxu0 %v1191
      %1915 = vmatprep.subr.bf16.mxu0 %v1196
      %1916 = vmatpush1.bf16.msra.mxu0 %v1195
      %1917 = vmatprep.subr.bf16.mxu0 %v1200
      %1918 = vmatpush1.bf16.msra.mxu0 %v1199
      %1919 = vmatprep.subr.bf16.mxu0 %v1204
      %1920 = vmatpush1.bf16.msra.mxu0 %v1203
      %1921 = vmatprep.subr.bf16.mxu0 %v1208
      %1922 = vmatpush1.bf16.msra.mxu0 %v1207
      %1923 = vmatprep.subr.bf16.mxu0 %v1212
      %1924 = vmatpush1.bf16.msra.mxu0 %v1211
      %1925 = vmatprep.subr.bf16.mxu0 %v1216
      %1926 = vmatpush1.bf16.msra.mxu0 %v1215
      %1927 = vmatprep.subr.bf16.mxu0 %v1220
      %1928 = vmatpush1.bf16.msra.mxu0 %v1219
      %1929 = vmatprep.subr.bf16.mxu0 %v1224
      %1930 = vmatpush1.bf16.msra.mxu0 %v1223
      %1931 = vmatprep.subr.bf16.mxu0 %v1228
      %1932 = vmatpush1.bf16.msra.mxu0 %v1227
      %1933 = vmatprep.subr.bf16.mxu0 %v1232
      %1934 = vmatpush1.bf16.msra.mxu0 %v1231
      %1935 = vmatprep.subr.bf16.mxu0 %v1236
      %1936 = vmatpush1.bf16.msra.mxu0 %v1235
      %1937 = vmatprep.subr.bf16.mxu0 %v1240
      %1938 = vmatpush1.bf16.msra.mxu0 %v1239
      %1939 = vmatprep.subr.bf16.mxu0 %v1244
      %1940 = vmatpush1.bf16.msra.mxu0 %v1243
      %1941 = vmatprep.subr.bf16.mxu0 %v1248
      %1942 = vmatpush1.bf16.msra.mxu0 %v1247
      %1943 = vmatprep.mubr.bf16.mxu0 %v602
      %1944 = vmatmul.mubr.bf16.gmra.mrb[0].mxu0 %v601
      %v1945 = vpop.f32.mrb[0].mxu0
      %v1946 = vadd.f32 %v1833, %v1945
      %v1947 = vpop.f32.mrb[0].mxu0
      %v1948 = vadd.f32 %v1835, %v1947
      %v1949 = vpop.f32.mrb[0].mxu0
      %v1950 = vadd.f32 %v1837, %v1949
      %v1951 = vpop.f32.mrb[0].mxu0
      %v1952 = vadd.f32 %v1839, %v1951
      %1953 = vmatprep.mubr.bf16.mxu0 %v607
      %1954 = vmatmul.mubr.bf16.gmra.mrb[0].mxu0 %v606
      %v1955 = vpop.f32.mrb[0].mxu0
      %v1956 = vadd.f32 %v1843, %v1955
      %v1957 = vpop.f32.mrb[0].mxu0
      %v1958 = vadd.f32 %v1845, %v1957
      %v1959 = vpop.f32.mrb[0].mxu0
      %v1960 = vadd.f32 %v1847, %v1959
      %v1961 = vpop.f32.mrb[0].mxu0
      %v1962 = vadd.f32 %v1849, %v1961
      %1963 = vmatprep.mubr.bf16.mxu0 %v612
      %1964 = vmatmul.mubr.bf16.gmra.mrb[0].mxu0 %v611
      %v1965 = vpop.f32.mrb[0].mxu0
      %v1966 = vadd.f32 %v1853, %v1965
      %v1967 = vpop.f32.mrb[0].mxu0
      %v1968 = vadd.f32 %v1855, %v1967
      %v1969 = vpop.f32.mrb[0].mxu0
      %v1970 = vadd.f32 %v1857, %v1969
      %v1971 = vpop.f32.mrb[0].mxu0
      %v1972 = vadd.f32 %v1859, %v1971
      %1973 = vmatprep.mubr.bf16.mxu0 %v617
      %1974 = vmatmul.mubr.bf16.gmra.mrb[0].mxu0 %v616
      %v1975 = vpop.f32.mrb[0].mxu0
      %v1976 = vadd.f32 %v1863, %v1975
      %v1977 = vpop.f32.mrb[0].mxu0
      %v1978 = vadd.f32 %v1865, %v1977
      %v1979 = vpop.f32.mrb[0].mxu0
      %v1980 = vadd.f32 %v1867, %v1979
      %v1981 = vpop.f32.mrb[0].mxu0
      %v1982 = vadd.f32 %v1869, %v1981
      %1983 = vmatprep.mubr.bf16.mxu0 %v622
      %1984 = vmatmul.mubr.bf16.gmra.mrb[0].mxu0 %v621
      %v1985 = vpop.f32.mrb[0].mxu0
      %v1986 = vadd.f32 %v1873, %v1985
      %v1987 = vpop.f32.mrb[0].mxu0
      %v1988 = vadd.f32 %v1875, %v1987
      %v1989 = vpop.f32.mrb[0].mxu0
      %v1990 = vadd.f32 %v1877, %v1989
      %v1991 = vpop.f32.mrb[0].mxu0
      %v1992 = vadd.f32 %v1879, %v1991
      %1993 = vmatprep.mubr.bf16.mxu0 %v627
      %1994 = vmatmul.mubr.bf16.gmra.mrb[0].mxu0 %v626
      %v1995 = vpop.f32.mrb[0].mxu0
      %v1996 = vadd.f32 %v1883, %v1995
      %v1997 = vpop.f32.mrb[0].mxu0
      %v1998 = vadd.f32 %v1885, %v1997
      %v1999 = vpop.f32.mrb[0].mxu0
      %v2000 = vadd.f32 %v1887, %v1999
      %v2001 = vpop.f32.mrb[0].mxu0
      %v2002 = vadd.f32 %v1889, %v2001
      %2003 = vmatprep.mubr.bf16.mxu0 %v632
      %2004 = vmatmul.mubr.bf16.gmra.mrb[0].mxu0 %v631
      %v2005 = vpop.f32.mrb[0].mxu0
      %v2006 = vadd.f32 %v1893, %v2005
      %v2007 = vpop.f32.mrb[0].mxu0
      %v2008 = vadd.f32 %v1895, %v2007
      %v2009 = vpop.f32.mrb[0].mxu0
      %v2010 = vadd.f32 %v1897, %v2009
      %v2011 = vpop.f32.mrb[0].mxu0
      %v2012 = vadd.f32 %v1899, %v2011
      %2013 = vmatprep.mubr.bf16.mxu0 %v637
      %2014 = vmatmul.mubr.bf16.gmra.mrb[0].mxu0 %v636
      %v2015 = vpop.f32.mrb[0].mxu0
      %v2016 = vadd.f32 %v1903, %v2015
      %v2017 = vpop.f32.mrb[0].mxu0
      %v2018 = vadd.f32 %v1905, %v2017
      %v2019 = vpop.f32.mrb[0].mxu0
      %v2020 = vadd.f32 %v1907, %v2019
      %v2021 = vpop.f32.mrb[0].mxu0
      %v2022 = vadd.f32 %v1909, %v2021
      %2023 = vdwg.mxu0
      %2024 = vmatprep.subr.bf16.mxu0 %v1252
      %2025 = vmatpush1.bf16.msra.mxu0 %v1251
      %2026 = vmatprep.subr.bf16.mxu0 %v1256
      %2027 = vmatpush1.bf16.msra.mxu0 %v1255
      %2028 = vmatprep.subr.bf16.mxu0 %v1260
      %2029 = vmatpush1.bf16.msra.mxu0 %v1259
      %2030 = vmatprep.subr.bf16.mxu0 %v1264
      %2031 = vmatpush1.bf16.msra.mxu0 %v1263
      %2032 = vmatprep.subr.bf16.mxu0 %v1268
      %2033 = vmatpush1.bf16.msra.mxu0 %v1267
      %2034 = vmatprep.subr.bf16.mxu0 %v1457
      %2035 = vmatpush1.bf16.msra.mxu0 %v1454
      %2036 = vmatprep.subr.bf16.mxu0 0
      %2037 = vmatpush1.bf16.msra.mxu0 0
      %2038 = vmatprep.subr.bf16.mxu0 0
      %2039 = vmatpush1.bf16.msra.mxu0 0
      %2040 = vmatprep.subr.bf16.mxu0 0
      %2041 = vmatpush1.bf16.msra.mxu0 0
      %2042 = vmatprep.subr.bf16.mxu0 0
      %2043 = vmatpush1.bf16.msra.mxu0 0
      %2044 = vmatprep.subr.bf16.mxu0 0
      %2045 = vmatpush1.bf16.msra.mxu0 0
      %2046 = vmatprep.subr.bf16.mxu0 0
      %2047 = vmatpush1.bf16.msra.mxu0 0
      %2048 = vmatprep.subr.bf16.mxu0 0
      %2049 = vmatpush1.bf16.msra.mxu0 0
      %2050 = vmatprep.subr.bf16.mxu0 0
      %2051 = vmatpush1.bf16.msra.mxu0 0
      %2052 = vmatprep.subr.bf16.mxu0 0
      %2053 = vmatpush1.bf16.msra.mxu0 0
      %2054 = vmatprep.subr.bf16.mxu0 0
      %2055 = vmatpush1.bf16.msra.mxu0 0
      %2056 = vmatprep.mubr.bf16.mxu0 0
      %2057 = vmatmul.mubr.bf16.gmra.mrb[0].mxu0 %v1423
      %v2058 = vpop.f32.mrb[0].mxu0
      %v2059 = vadd.f32 %v1946, %v2058
      %v2060 = vpop.f32.mrb[0].mxu0
      %v2061 = vadd.f32 %v1948, %v2060
      %v2062 = vpop.f32.mrb[0].mxu0
      %v2063 = vadd.f32 %v1950, %v2062
      %v2064 = vpop.f32.mrb[0].mxu0
      %v2065 = vadd.f32 %v1952, %v2064
      %2066 = vmatprep.mubr.bf16.mxu0 0
      %2067 = vmatmul.mubr.bf16.gmra.mrb[0].mxu0 %v1426
      %v2068 = vpop.f32.mrb[0].mxu0
      %v2069 = vadd.f32 %v1956, %v2068
      %v2070 = vpop.f32.mrb[0].mxu0
      %v2071 = vadd.f32 %v1958, %v2070
      %v2072 = vpop.f32.mrb[0].mxu0
      %v2073 = vadd.f32 %v1960, %v2072
      %v2074 = vpop.f32.mrb[0].mxu0
      %v2075 = vadd.f32 %v1962, %v2074
      %2076 = vmatprep.mubr.bf16.mxu0 0
      %2077 = vmatmul.mubr.bf16.gmra.mrb[0].mxu0 %v1429
      %v2078 = vpop.f32.mrb[0].mxu0
      %v2079 = vadd.f32 %v1966, %v2078
      %v2080 = vpop.f32.mrb[0].mxu0
      %v2081 = vadd.f32 %v1968, %v2080
      %v2082 = vpop.f32.mrb[0].mxu0
      %v2083 = vadd.f32 %v1970, %v2082
      %v2084 = vpop.f32.mrb[0].mxu0
      %v2085 = vadd.f32 %v1972, %v2084
      %2086 = vmatprep.mubr.bf16.mxu0 0
      %2087 = vmatmul.mubr.bf16.gmra.mrb[0].mxu0 %v1432
      %v2088 = vpop.f32.mrb[0].mxu0
      %v2089 = vadd.f32 %v1976, %v2088
      %v2090 = vpop.f32.mrb[0].mxu0
      %v2091 = vadd.f32 %v1978, %v2090
      %v2092 = vpop.f32.mrb[0].mxu0
      %v2093 = vadd.f32 %v1980, %v2092
      %v2094 = vpop.f32.mrb[0].mxu0
      %v2095 = vadd.f32 %v1982, %v2094
      %2096 = vmatprep.mubr.bf16.mxu0 0
      %2097 = vmatmul.mubr.bf16.gmra.mrb[0].mxu0 %v1435
      %v2098 = vpop.f32.mrb[0].mxu0
      %v2099 = vadd.f32 %v1986, %v2098
      %v2100 = vpop.f32.mrb[0].mxu0
      %v2101 = vadd.f32 %v1988, %v2100
      %v2102 = vpop.f32.mrb[0].mxu0
      %v2103 = vadd.f32 %v1990, %v2102
      %v2104 = vpop.f32.mrb[0].mxu0
      %v2105 = vadd.f32 %v1992, %v2104
      %2106 = vmatprep.mubr.bf16.mxu0 0
      %2107 = vmatmul.mubr.bf16.gmra.mrb[0].mxu0 %v1438
      %v2108 = vpop.f32.mrb[0].mxu0
      %v2109 = vadd.f32 %v1996, %v2108
      %v2110 = vpop.f32.mrb[0].mxu0
      %v2111 = vadd.f32 %v1998, %v2110
      %v2112 = vpop.f32.mrb[0].mxu0
      %v2113 = vadd.f32 %v2000, %v2112
      %v2114 = vpop.f32.mrb[0].mxu0
      %v2115 = vadd.f32 %v2002, %v2114
      %2116 = vmatprep.mubr.bf16.mxu0 0
      %2117 = vmatmul.mubr.bf16.gmra.mrb[0].mxu0 %v1441
      %v2118 = vpop.f32.mrb[0].mxu0
      %v2119 = vadd.f32 %v2006, %v2118
      %v2120 = vpop.f32.mrb[0].mxu0
      %v2121 = vadd.f32 %v2008, %v2120
      %v2122 = vpop.f32.mrb[0].mxu0
      %v2123 = vadd.f32 %v2010, %v2122
      %v2124 = vpop.f32.mrb[0].mxu0
      %v2125 = vadd.f32 %v2012, %v2124
      %2126 = vmatprep.mubr.bf16.mxu0 0
      %2127 = vmatmul.mubr.bf16.gmra.mrb[0].mxu0 %v1444
      %v2128 = vpop.f32.mrb[0].mxu0
      %v2129 = vadd.f32 %v2016, %v2128
      %v2130 = vpop.f32.mrb[0].mxu0
      %v2131 = vadd.f32 %v2018, %v2130
      %v2132 = vpop.f32.mrb[0].mxu0
      %v2133 = vadd.f32 %v2020, %v2132
      %v2134 = vpop.f32.mrb[0].mxu0
      %v2135 = vadd.f32 %v2022, %v2134
      %2136 = vdwg.mxu0
      %v2137 = vtanh.pop %v1720
      %v2138 = vtanh.pop %v1722
      %v2139 = vtanh.pop %v2059
      %v2140 = vtanh.pop %v2061
      %v2141 = vtanh.pop %v1724
      %v2142 = vtanh.pop %v1726
      %v2143 = vtanh.pop %v2063
      %v2144 = vtanh.pop %v2065
      %v2145 = vtanh.pop %v1730
      %v2146 = vtanh.pop %v1732
      %v2147 = vtanh.pop %v2069
      %v2148 = vtanh.pop %v2071
      %v2149 = vtanh.pop %v1734
      %v2150 = vtanh.pop %v1736
      %v2151 = vtanh.pop %v2073
      %v2152 = vtanh.pop %v2075
      %v2153 = vtanh.pop %v1740
      %v2154 = vtanh.pop %v1742
      %v2155 = vtanh.pop %v2079
      %v2156 = vtanh.pop %v2081
      %v2157 = vtanh.pop %v1744
      %v2158 = vtanh.pop %v1746
      %v2159 = vtanh.pop %v2083
      %v2160 = vtanh.pop %v2085
      %v2161 = vtanh.pop %v1750
      %v2162 = vtanh.pop %v1752
      %v2163 = vtanh.pop %v2089
      %v2164 = vtanh.pop %v2091
      %v2165 = vtanh.pop %v1754
      %v2166 = vtanh.pop %v1756
      %v2167 = vtanh.pop %v2093
      %v2168 = vtanh.pop %v2095
      %v2169 = vtanh.pop %v1760
      %v2170 = vtanh.pop %v1762
      %v2171 = vtanh.pop %v2099
      %v2172 = vtanh.pop %v2101
      %v2173 = vtanh.pop %v1764
      %v2174 = vtanh.pop %v1766
      %v2175 = vtanh.pop %v2103
      %v2176 = vtanh.pop %v2105
      %v2177 = vtanh.pop %v1770
      %v2178 = vtanh.pop %v1772
      %v2179 = vtanh.pop %v2109
      %v2180 = vtanh.pop %v2111
      %v2181 = vtanh.pop %v1774
      %v2182 = vtanh.pop %v1776
      %v2183 = vtanh.pop %v2113
      %v2184 = vtanh.pop %v2115
      %v2185 = vtanh.pop %v1780
      %v2186 = vtanh.pop %v1782
      %v2187 = vtanh.pop %v2119
      %v2188 = vtanh.pop %v2121
      %v2189 = vtanh.pop %v1784
      %v2190 = vtanh.pop %v1786
      %v2191 = vtanh.pop %v2123
      %v2192 = vtanh.pop %v2125
      %v2193 = vtanh.pop %v1790
      %v2194 = vtanh.pop %v1792
      %v2195 = vtanh.pop %v2129
      %v2196 = vtanh.pop %v2131
      %v2197 = vtanh.pop %v1794
      %v2198 = vtanh.pop %v1796
      %v2199 = vtanh.pop %v2133
      %v2200 = vtanh.pop %v2135
      %v2201 = vpack.c.bf16 %v2141, %v2137
      %v2202 = vpack.c.bf16 %v2142, %v2138
      %v2203 = vpack.c.bf16 %v2143, %v2139
      %v2204 = vpack.c.bf16 %v2144, %v2140
      %v2205 = vpack.c.bf16 %v2149, %v2145
      %v2206 = vpack.c.bf16 %v2150, %v2146
      %v2207 = vpack.c.bf16 %v2151, %v2147
      %v2208 = vpack.c.bf16 %v2152, %v2148
      %v2209 = vpack.c.bf16 %v2157, %v2153
      %v2210 = vpack.c.bf16 %v2158, %v2154
      %v2211 = vpack.c.bf16 %v2159, %v2155
      %v2212 = vpack.c.bf16 %v2160, %v2156
      %v2213 = vpack.c.bf16 %v2165, %v2161
      %v2214 = vpack.c.bf16 %v2166, %v2162
      %v2215 = vpack.c.bf16 %v2167, %v2163
      %v2216 = vpack.c.bf16 %v2168, %v2164
      %v2217 = vpack.c.bf16 %v2173, %v2169
      %v2218 = vpack.c.bf16 %v2174, %v2170
      %v2219 = vpack.c.bf16 %v2175, %v2171
      %v2220 = vpack.c.bf16 %v2176, %v2172
      %v2221 = vpack.c.bf16 %v2181, %v2177
      %v2222 = vpack.c.bf16 %v2182, %v2178
      %v2223 = vpack.c.bf16 %v2183, %v2179
      %v2224 = vpack.c.bf16 %v2184, %v2180
      %v2225 = vpack.c.bf16 %v2189, %v2185
      %v2226 = vpack.c.bf16 %v2190, %v2186
      %v2227 = vpack.c.bf16 %v2191, %v2187
      %v2228 = vpack.c.bf16 %v2192, %v2188
      %v2229 = vpack.c.bf16 %v2197, %v2193
      %v2230 = vpack.c.bf16 %v2198, %v2194
      %v2231 = vpack.c.bf16 %v2199, %v2195
      %v2232 = vpack.c.bf16 %v2200, %v2196
      %v2233 = vld [vmem:[%s2] sm:$0xff]
      %v2234 = vld [vmem:[%s2 + $0x8] sm:$0xff]
      %v2235 = vld [vmem:[%s2 + $0x10] sm:$0xff]
      %v2236 = vld [vmem:[%s2 + $0x18] sm:$0xff]
      %v2237 = vld [vmem:[%s2 + $0x20] sm:$0xff]
      %v2238 = vld [vmem:[%s2 + $0x28] sm:$0xff]
      %v2239 = vld [vmem:[%s2 + $0x30] sm:$0xff]
      %v2240 = vld [vmem:[%s2 + $0x38] sm:$0xff]
      %v2241 = vld [vmem:[%s2 + $0x40] sm:$0xff]
      %v2242 = vld [vmem:[%s2 + $0x48] sm:$0xff]
      %v2243 = vld [vmem:[%s2 + $0x50] sm:$0xff]
      %v2244 = vld [vmem:[%s2 + $0x58] sm:$0xff]
      %v2245 = vld [vmem:[%s2 + $0x60] sm:$0xff]
      %v2246 = vld [vmem:[%s2 + $0x68] sm:$0xff]
      %v2247 = vld [vmem:[%s2 + $0x70] sm:$0xff]
      %v2248 = vld [vmem:[%s2 + $0x78] sm:$0xff]
      %v2249 = vld [vmem:[%s2 + $0x80] sm:$0xff]
      %v2250 = vld [vmem:[%s2 + $0x88] sm:$0xff]
      %v2251 = vld [vmem:[%s2 + $0x90] sm:$0xff]
      %v2252 = vld [vmem:[%s2 + $0x98] sm:$0xff]
      %v2253 = vld [vmem:[%s2 + $0xa0] sm:$0xff]
      %v2254 = vld [vmem:[%s2 + $0xa8] sm:$0xff]
      %v2255 = vld [vmem:[%s2 + $0xb0] sm:$0xff]
      %v2256 = vld [vmem:[%s2 + $0xb8] sm:$0xff]
      %v2257 = vld [vmem:[%s2 + $0xc0] sm:$0xff]
      %v2258 = vld [vmem:[%s2 + $0xc8] sm:$0xff]
      %v2259 = vld [vmem:[%s2 + $0xd0] sm:$0xff]
      %v2260 = vld [vmem:[%s2 + $0xd8] sm:$0xff]
      %v2261 = vld [vmem:[%s2 + $0xe0] sm:$0xff]
      %v2262 = vld [vmem:[%s2 + $0xe8] sm:$0xff]
      %v2263 = vld [vmem:[%s2 + $0xf0] sm:$0xff]
      %v2264 = vld [vmem:[%s2 + $0xf8] sm:$0xff]
      %v2265 = vld [vmem:[%s2 + $0x100] sm:$0xff]
      %v2266 = vld [vmem:[%s2 + $0x108] sm:$0xff]
      %v2267 = vld [vmem:[%s2 + $0x110] sm:$0xff]
      %v2268 = vld [vmem:[%s2 + $0x118] sm:$0xff]
      %v2269 = vld [vmem:[%s2 + $0x120] sm:$0xff]
      %v2270 = vld [vmem:[%s2 + $0x128] sm:$0xff]
      %v2271 = vld [vmem:[%s2 + $0x130] sm:$0xff]
      %v2272 = vld [vmem:[%s2 + $0x138] sm:$0xff]
      %v2273 = vld [vmem:[%s2 + $0x140] sm:$0xff]
      %v2274 = vld [vmem:[%s2 + $0x148] sm:$0xff]
      %v2275 = vld [vmem:[%s2 + $0x150] sm:$0xff]
      %v2276 = vld [vmem:[%s2 + $0x158] sm:$0xff]
      %v2277 = vld [vmem:[%s2 + $0x160] sm:$0xff]
      %v2278 = vld [vmem:[%s2 + $0x168] sm:$0xff]
      %v2279 = vld [vmem:[%s2 + $0x170] sm:$0xff]
      %v2280 = vld [vmem:[%s2 + $0x178] sm:$0xff]
      %v2281 = vld [vmem:[%s2 + $0x180] sm:$0xff]
      %v2282 = vld [vmem:[%s2 + $0x188] sm:$0xff]
      %v2283 = vld [vmem:[%s2 + $0x190] sm:$0xff]
      %v2284 = vld [vmem:[%s2 + $0x198] sm:$0xff]
      %v2285 = vld [vmem:[%s2 + $0x1a0] sm:$0xff]
      %v2286 = vld [vmem:[%s2 + $0x1a8] sm:$0xff]
      %v2287 = vld [vmem:[%s2 + $0x1b0] sm:$0xff]
      %v2288 = vld [vmem:[%s2 + $0x1b8] sm:$0xff]
      %v2289 = vld [vmem:[%s2 + $0x1c0] sm:$0xff]
      %v2290 = vld [vmem:[%s2 + $0x1c8] sm:$0xff]
      %v2291 = vld [vmem:[%s2 + $0x1d0] sm:$0xff]
      %v2292 = vld [vmem:[%s2 + $0x1d8] sm:$0xff]
      %v2293 = vld [vmem:[%s2 + $0x1e0] sm:$0xff]
      %v2294 = vld [vmem:[%s2 + $0x1e8] sm:$0xff]
      %v2295 = vld [vmem:[%s2 + $0x1f0] sm:$0xff]
      %v2296 = vld [vmem:[%s2 + $0x1f8] sm:$0xff]
      %v2361 = vunpack.c.l.b16 %v2233
      %v2362 = vunpack.c.h.b16 %v2233
      %v2363 = vunpack.c.l.b16 %v2234
      %v2364 = vunpack.c.h.b16 %v2234
      %v2365 = vunpack.c.l.b16 %v2235
      %v2366 = vunpack.c.h.b16 %v2235
      %v2367 = vunpack.c.l.b16 %v2236
      %v2368 = vunpack.c.h.b16 %v2236
      %v2369 = vunpack.c.l.b16 %v2237
      %v2370 = vunpack.c.h.b16 %v2237
      %v2371 = vunpack.c.l.b16 %v2238
      %v2372 = vunpack.c.h.b16 %v2238
      %v2373 = vunpack.c.l.b16 %v2239
      %v2374 = vunpack.c.h.b16 %v2239
      %v2375 = vunpack.c.l.b16 %v2240
      %v2376 = vunpack.c.h.b16 %v2240
      %v2377 = vunpack.c.l.b16 %v2241
      %v2378 = vunpack.c.h.b16 %v2241
      %v2379 = vunpack.c.l.b16 %v2242
      %v2380 = vunpack.c.h.b16 %v2242
      %v2381 = vunpack.c.l.b16 %v2243
      %v2382 = vunpack.c.h.b16 %v2243
      %v2383 = vunpack.c.l.b16 %v2244
      %v2384 = vunpack.c.h.b16 %v2244
      %v2385 = vunpack.c.l.b16 %v2245
      %v2386 = vunpack.c.h.b16 %v2245
      %v2387 = vunpack.c.l.b16 %v2246
      %v2388 = vunpack.c.h.b16 %v2246
      %v2389 = vunpack.c.l.b16 %v2247
      %v2390 = vunpack.c.h.b16 %v2247
      %v2391 = vunpack.c.l.b16 %v2248
      %v2392 = vunpack.c.h.b16 %v2248
      %v2393 = vunpack.c.l.b16 %v2249
      %v2394 = vunpack.c.h.b16 %v2249
      %v2395 = vunpack.c.l.b16 %v2250
      %v2396 = vunpack.c.h.b16 %v2250
      %v2397 = vunpack.c.l.b16 %v2251
      %v2398 = vunpack.c.h.b16 %v2251
      %v2399 = vunpack.c.l.b16 %v2252
      %v2400 = vunpack.c.h.b16 %v2252
      %v2401 = vunpack.c.l.b16 %v2253
      %v2402 = vunpack.c.h.b16 %v2253
      %v2403 = vunpack.c.l.b16 %v2254
      %v2404 = vunpack.c.h.b16 %v2254
      %v2405 = vunpack.c.l.b16 %v2255
      %v2406 = vunpack.c.h.b16 %v2255
      %v2407 = vunpack.c.l.b16 %v2256
      %v2408 = vunpack.c.h.b16 %v2256
      %v2409 = vunpack.c.l.b16 %v2257
      %v2410 = vunpack.c.h.b16 %v2257
      %v2411 = vunpack.c.l.b16 %v2258
      %v2412 = vunpack.c.h.b16 %v2258
      %v2413 = vunpack.c.l.b16 %v2259
      %v2414 = vunpack.c.h.b16 %v2259
      %v2415 = vunpack.c.l.b16 %v2260
      %v2416 = vunpack.c.h.b16 %v2260
      %v2417 = vunpack.c.l.b16 %v2261
      %v2418 = vunpack.c.h.b16 %v2261
      %v2419 = vunpack.c.l.b16 %v2262
      %v2420 = vunpack.c.h.b16 %v2262
      %v2421 = vunpack.c.l.b16 %v2263
      %v2422 = vunpack.c.h.b16 %v2263
      %v2423 = vunpack.c.l.b16 %v2264
      %v2424 = vunpack.c.h.b16 %v2264
      %v2425 = vunpack.c.l.b16 %v2265
      %v2426 = vunpack.c.h.b16 %v2265
      %v2427 = vunpack.c.l.b16 %v2266
      %v2428 = vunpack.c.h.b16 %v2266
      %v2429 = vunpack.c.l.b16 %v2267
      %v2430 = vunpack.c.h.b16 %v2267
      %v2431 = vunpack.c.l.b16 %v2268
      %v2432 = vunpack.c.h.b16 %v2268
      %v2433 = vunpack.c.l.b16 %v2269
      %v2434 = vunpack.c.h.b16 %v2269
      %v2435 = vunpack.c.l.b16 %v2270
      %v2436 = vunpack.c.h.b16 %v2270
      %v2437 = vunpack.c.l.b16 %v2271
      %v2438 = vunpack.c.h.b16 %v2271
      %v2439 = vunpack.c.l.b16 %v2272
      %v2440 = vunpack.c.h.b16 %v2272
      %v2441 = vunpack.c.l.b16 %v2273
      %v2442 = vunpack.c.h.b16 %v2273
      %v2443 = vunpack.c.l.b16 %v2274
      %v2444 = vunpack.c.h.b16 %v2274
      %v2445 = vunpack.c.l.b16 %v2275
      %v2446 = vunpack.c.h.b16 %v2275
      %v2447 = vunpack.c.l.b16 %v2276
      %v2448 = vunpack.c.h.b16 %v2276
      %v2449 = vunpack.c.l.b16 %v2277
      %v2450 = vunpack.c.h.b16 %v2277
      %v2451 = vunpack.c.l.b16 %v2278
      %v2452 = vunpack.c.h.b16 %v2278
      %v2453 = vunpack.c.l.b16 %v2279
      %v2454 = vunpack.c.h.b16 %v2279
      %v2455 = vunpack.c.l.b16 %v2280
      %v2456 = vunpack.c.h.b16 %v2280
      %v2457 = vunpack.c.l.b16 %v2281
      %v2458 = vunpack.c.h.b16 %v2281
      %v2459 = vunpack.c.l.b16 %v2282
      %v2460 = vunpack.c.h.b16 %v2282
      %v2461 = vunpack.c.l.b16 %v2283
      %v2462 = vunpack.c.h.b16 %v2283
      %v2463 = vunpack.c.l.b16 %v2284
      %v2464 = vunpack.c.h.b16 %v2284
      %v2465 = vunpack.c.l.b16 %v2285
      %v2466 = vunpack.c.h.b16 %v2285
      %v2467 = vunpack.c.l.b16 %v2286
      %v2468 = vunpack.c.h.b16 %v2286
      %v2469 = vunpack.c.l.b16 %v2287
      %v2470 = vunpack.c.h.b16 %v2287
      %v2471 = vunpack.c.l.b16 %v2288
      %v2472 = vunpack.c.h.b16 %v2288
      %v2473 = vunpack.c.l.b16 %v2289
      %v2474 = vunpack.c.h.b16 %v2289
      %v2475 = vunpack.c.l.b16 %v2290
      %v2476 = vunpack.c.h.b16 %v2290
      %v2477 = vunpack.c.l.b16 %v2291
      %v2478 = vunpack.c.h.b16 %v2291
      %v2479 = vunpack.c.l.b16 %v2292
      %v2480 = vunpack.c.h.b16 %v2292
      %v2481 = vunpack.c.l.b16 %v2293
      %v2482 = vunpack.c.h.b16 %v2293
      %v2483 = vunpack.c.l.b16 %v2294
      %v2484 = vunpack.c.h.b16 %v2294
      %v2485 = vunpack.c.l.b16 %v2295
      %v2486 = vunpack.c.h.b16 %v2295
      %v2487 = vunpack.c.l.b16 %v2296
      %v2488 = vunpack.c.h.b16 %v2296
      %v2489 = vpack.c.b16 %v2363, %v2361
      %v2490 = vpack.c.b16 %v2364, %v2362
      %v2491 = vpack.c.b16 %v2367, %v2365
      %v2492 = vpack.c.b16 %v2368, %v2366
      %v2493 = vpack.c.b16 %v2371, %v2369
      %v2494 = vpack.c.b16 %v2372, %v2370
      %v2495 = vpack.c.b16 %v2375, %v2373
      %v2496 = vpack.c.b16 %v2376, %v2374
      %v2497 = vpack.c.b16 %v2379, %v2377
      %v2498 = vpack.c.b16 %v2380, %v2378
      %v2499 = vpack.c.b16 %v2383, %v2381
      %v2500 = vpack.c.b16 %v2384, %v2382
      %v2501 = vpack.c.b16 %v2387, %v2385
      %v2502 = vpack.c.b16 %v2388, %v2386
      %v2503 = vpack.c.b16 %v2391, %v2389
      %v2504 = vpack.c.b16 %v2392, %v2390
      %v2505 = vpack.c.b16 %v2395, %v2393
      %v2506 = vpack.c.b16 %v2396, %v2394
      %v2507 = vpack.c.b16 %v2399, %v2397
      %v2508 = vpack.c.b16 %v2400, %v2398
      %v2509 = vpack.c.b16 %v2403, %v2401
      %v2510 = vpack.c.b16 %v2404, %v2402
      %v2511 = vpack.c.b16 %v2407, %v2405
      %v2512 = vpack.c.b16 %v2408, %v2406
      %v2513 = vpack.c.b16 %v2411, %v2409
      %v2514 = vpack.c.b16 %v2412, %v2410
      %v2515 = vpack.c.b16 %v2415, %v2413
      %v2516 = vpack.c.b16 %v2416, %v2414
      %v2517 = vpack.c.b16 %v2419, %v2417
      %v2518 = vpack.c.b16 %v2420, %v2418
      %v2519 = vpack.c.b16 %v2423, %v2421
      %v2520 = vpack.c.b16 %v2424, %v2422
      %v2521 = vpack.c.b16 %v2427, %v2425
      %v2522 = vpack.c.b16 %v2428, %v2426
      %v2523 = vpack.c.b16 %v2431, %v2429
      %v2524 = vpack.c.b16 %v2432, %v2430
      %v2525 = vpack.c.b16 %v2435, %v2433
      %v2526 = vpack.c.b16 %v2436, %v2434
      %v2527 = vpack.c.b16 %v2439, %v2437
      %v2528 = vpack.c.b16 %v2440, %v2438
      %v2529 = vpack.c.b16 %v2443, %v2441
      %v2530 = vpack.c.b16 %v2444, %v2442
      %v2531 = vpack.c.b16 %v2447, %v2445
      %v2532 = vpack.c.b16 %v2448, %v2446
      %v2533 = vpack.c.b16 %v2451, %v2449
      %v2534 = vpack.c.b16 %v2452, %v2450
      %v2535 = vpack.c.b16 %v2455, %v2453
      %v2536 = vpack.c.b16 %v2456, %v2454
      %v2537 = vpack.c.b16 %v2459, %v2457
      %v2538 = vpack.c.b16 %v2460, %v2458
      %v2539 = vpack.c.b16 %v2463, %v2461
      %v2540 = vpack.c.b16 %v2464, %v2462
      %v2541 = vpack.c.b16 %v2467, %v2465
      %v2542 = vpack.c.b16 %v2468, %v2466
      %v2543 = vpack.c.b16 %v2471, %v2469
      %v2544 = vpack.c.b16 %v2472, %v2470
      %v2545 = vpack.c.b16 %v2475, %v2473
      %v2546 = vpack.c.b16 %v2476, %v2474
      %v2547 = vpack.c.b16 %v2479, %v2477
      %v2548 = vpack.c.b16 %v2480, %v2478
      %v2549 = vpack.c.b16 %v2483, %v2481
      %v2550 = vpack.c.b16 %v2484, %v2482
      %v2551 = vpack.c.b16 %v2487, %v2485
      %v2552 = vpack.c.b16 %v2488, %v2486
      %2617 = vmatprep.subr.bf16.mxu0 %v2490
      %2618 = vmatpush1.bf16.msra.mxu0 %v2489
      %2619 = vmatprep.subr.bf16.mxu0 %v2492
      %2620 = vmatpush1.bf16.msra.mxu0 %v2491
      %2621 = vmatprep.subr.bf16.mxu0 %v2494
      %2622 = vmatpush1.bf16.msra.mxu0 %v2493
      %2623 = vmatprep.subr.bf16.mxu0 %v2496
      %2624 = vmatpush1.bf16.msra.mxu0 %v2495
      %2625 = vmatprep.subr.bf16.mxu0 %v2498
      %2626 = vmatpush1.bf16.msra.mxu0 %v2497
      %2627 = vmatprep.subr.bf16.mxu0 %v2500
      %2628 = vmatpush1.bf16.msra.mxu0 %v2499
      %2629 = vmatprep.subr.bf16.mxu0 %v2502
      %2630 = vmatpush1.bf16.msra.mxu0 %v2501
      %2631 = vmatprep.subr.bf16.mxu0 %v2504
      %2632 = vmatpush1.bf16.msra.mxu0 %v2503
      %2633 = vmatprep.subr.bf16.mxu0 %v2506
      %2634 = vmatpush1.bf16.msra.mxu0 %v2505
      %2635 = vmatprep.subr.bf16.mxu0 %v2508
      %2636 = vmatpush1.bf16.msra.mxu0 %v2507
      %2637 = vmatprep.subr.bf16.mxu0 %v2510
      %2638 = vmatpush1.bf16.msra.mxu0 %v2509
      %2639 = vmatprep.subr.bf16.mxu0 %v2512
      %2640 = vmatpush1.bf16.msra.mxu0 %v2511
      %2641 = vmatprep.subr.bf16.mxu0 %v2514
      %2642 = vmatpush1.bf16.msra.mxu0 %v2513
      %2643 = vmatprep.subr.bf16.mxu0 %v2516
      %2644 = vmatpush1.bf16.msra.mxu0 %v2515
      %2645 = vmatprep.subr.bf16.mxu0 %v2518
      %2646 = vmatpush1.bf16.msra.mxu0 %v2517
      %2647 = vmatprep.subr.bf16.mxu0 %v2520
      %2648 = vmatpush1.bf16.msra.mxu0 %v2519
      %2649 = vmatprep.mubr.bf16.mxu0 %v2202
      %2650 = vmatmul.mubr.bf16.gmra.mrb[0].mxu0 %v2201
      %v2651 = vpop.f32.mrb[0].mxu0
      %v2652 = vadd.f32 0.0, %v2651
      %v2653 = vpop.f32.mrb[0].mxu0
      %v2654 = vadd.f32 0.0, %v2653
      %v2655 = vpop.f32.mrb[0].mxu0
      %v2656 = vadd.f32 0.0, %v2655
      %v2657 = vpop.f32.mrb[0].mxu0
      %v2658 = vadd.f32 0.0, %v2657
      %2659 = vmatprep.mubr.bf16.mxu0 %v2206
      %2660 = vmatmul.mubr.bf16.gmra.mrb[0].mxu0 %v2205
      %v2661 = vpop.f32.mrb[0].mxu0
      %v2662 = vadd.f32 0.0, %v2661
      %v2663 = vpop.f32.mrb[0].mxu0
      %v2664 = vadd.f32 0.0, %v2663
      %v2665 = vpop.f32.mrb[0].mxu0
      %v2666 = vadd.f32 0.0, %v2665
      %v2667 = vpop.f32.mrb[0].mxu0
      %v2668 = vadd.f32 0.0, %v2667
      %2669 = vmatprep.mubr.bf16.mxu0 %v2210
      %2670 = vmatmul.mubr.bf16.gmra.mrb[0].mxu0 %v2209
      %v2671 = vpop.f32.mrb[0].mxu0
      %v2672 = vadd.f32 0.0, %v2671
      %v2673 = vpop.f32.mrb[0].mxu0
      %v2674 = vadd.f32 0.0, %v2673
      %v2675 = vpop.f32.mrb[0].mxu0
      %v2676 = vadd.f32 0.0, %v2675
      %v2677 = vpop.f32.mrb[0].mxu0
      %v2678 = vadd.f32 0.0, %v2677
      %2679 = vmatprep.mubr.bf16.mxu0 %v2214
      %2680 = vmatmul.mubr.bf16.gmra.mrb[0].mxu0 %v2213
      %v2681 = vpop.f32.mrb[0].mxu0
      %v2682 = vadd.f32 0.0, %v2681
      %v2683 = vpop.f32.mrb[0].mxu0
      %v2684 = vadd.f32 0.0, %v2683
      %v2685 = vpop.f32.mrb[0].mxu0
      %v2686 = vadd.f32 0.0, %v2685
      %v2687 = vpop.f32.mrb[0].mxu0
      %v2688 = vadd.f32 0.0, %v2687
      %2689 = vmatprep.mubr.bf16.mxu0 %v2218
      %2690 = vmatmul.mubr.bf16.gmra.mrb[0].mxu0 %v2217
      %v2691 = vpop.f32.mrb[0].mxu0
      %v2692 = vadd.f32 0.0, %v2691
      %v2693 = vpop.f32.mrb[0].mxu0
      %v2694 = vadd.f32 0.0, %v2693
      %v2695 = vpop.f32.mrb[0].mxu0
      %v2696 = vadd.f32 0.0, %v2695
      %v2697 = vpop.f32.mrb[0].mxu0
      %v2698 = vadd.f32 0.0, %v2697
      %2699 = vmatprep.mubr.bf16.mxu0 %v2222
      %2700 = vmatmul.mubr.bf16.gmra.mrb[0].mxu0 %v2221
      %v2701 = vpop.f32.mrb[0].mxu0
      %v2702 = vadd.f32 0.0, %v2701
      %v2703 = vpop.f32.mrb[0].mxu0
      %v2704 = vadd.f32 0.0, %v2703
      %v2705 = vpop.f32.mrb[0].mxu0
      %v2706 = vadd.f32 0.0, %v2705
      %v2707 = vpop.f32.mrb[0].mxu0
      %v2708 = vadd.f32 0.0, %v2707
      %2709 = vmatprep.mubr.bf16.mxu0 %v2226
      %2710 = vmatmul.mubr.bf16.gmra.mrb[0].mxu0 %v2225
      %v2711 = vpop.f32.mrb[0].mxu0
      %v2712 = vadd.f32 0.0, %v2711
      %v2713 = vpop.f32.mrb[0].mxu0
      %v2714 = vadd.f32 0.0, %v2713
      %v2715 = vpop.f32.mrb[0].mxu0
      %v2716 = vadd.f32 0.0, %v2715
      %v2717 = vpop.f32.mrb[0].mxu0
      %v2718 = vadd.f32 0.0, %v2717
      %2719 = vmatprep.mubr.bf16.mxu0 %v2230
      %2720 = vmatmul.mubr.bf16.gmra.mrb[0].mxu0 %v2229
      %v2721 = vpop.f32.mrb[0].mxu0
      %v2722 = vadd.f32 0.0, %v2721
      %v2723 = vpop.f32.mrb[0].mxu0
      %v2724 = vadd.f32 0.0, %v2723
      %v2725 = vpop.f32.mrb[0].mxu0
      %v2726 = vadd.f32 0.0, %v2725
      %v2727 = vpop.f32.mrb[0].mxu0
      %v2728 = vadd.f32 0.0, %v2727
      %2729 = vdwg.mxu0
      %2730 = vmatprep.subr.bf16.mxu0 %v2522
      %2731 = vmatpush1.bf16.msra.mxu0 %v2521
      %2732 = vmatprep.subr.bf16.mxu0 %v2524
      %2733 = vmatpush1.bf16.msra.mxu0 %v2523
      %2734 = vmatprep.subr.bf16.mxu0 %v2526
      %2735 = vmatpush1.bf16.msra.mxu0 %v2525
      %2736 = vmatprep.subr.bf16.mxu0 %v2528
      %2737 = vmatpush1.bf16.msra.mxu0 %v2527
      %2738 = vmatprep.subr.bf16.mxu0 %v2530
      %2739 = vmatpush1.bf16.msra.mxu0 %v2529
      %2740 = vmatprep.subr.bf16.mxu0 %v2532
      %2741 = vmatpush1.bf16.msra.mxu0 %v2531
      %2742 = vmatprep.subr.bf16.mxu0 %v2534
      %2743 = vmatpush1.bf16.msra.mxu0 %v2533
      %2744 = vmatprep.subr.bf16.mxu0 %v2536
      %2745 = vmatpush1.bf16.msra.mxu0 %v2535
      %2746 = vmatprep.subr.bf16.mxu0 %v2538
      %2747 = vmatpush1.bf16.msra.mxu0 %v2537
      %2748 = vmatprep.subr.bf16.mxu0 %v2540
      %2749 = vmatpush1.bf16.msra.mxu0 %v2539
      %2750 = vmatprep.subr.bf16.mxu0 %v2542
      %2751 = vmatpush1.bf16.msra.mxu0 %v2541
      %2752 = vmatprep.subr.bf16.mxu0 %v2544
      %2753 = vmatpush1.bf16.msra.mxu0 %v2543
      %2754 = vmatprep.subr.bf16.mxu0 %v2546
      %2755 = vmatpush1.bf16.msra.mxu0 %v2545
      %2756 = vmatprep.subr.bf16.mxu0 %v2548
      %2757 = vmatpush1.bf16.msra.mxu0 %v2547
      %2758 = vmatprep.subr.bf16.mxu0 %v2550
      %2759 = vmatpush1.bf16.msra.mxu0 %v2549
      %2760 = vmatprep.subr.bf16.mxu0 %v2552
      %2761 = vmatpush1.bf16.msra.mxu0 %v2551
      %2762 = vmatprep.mubr.bf16.mxu0 %v2204
      %2763 = vmatmul.mubr.bf16.gmra.mrb[0].mxu0 %v2203
      %v2764 = vpop.f32.mrb[0].mxu0
      %v2765 = vadd.f32 %v2652, %v2764
      %v2766 = vpop.f32.mrb[0].mxu0
      %v2767 = vadd.f32 %v2654, %v2766
      %v2768 = vpop.f32.mrb[0].mxu0
      %v2769 = vadd.f32 %v2656, %v2768
      %v2770 = vpop.f32.mrb[0].mxu0
      %v2771 = vadd.f32 %v2658, %v2770
      %2772 = vmatprep.mubr.bf16.mxu0 %v2208
      %2773 = vmatmul.mubr.bf16.gmra.mrb[0].mxu0 %v2207
      %v2774 = vpop.f32.mrb[0].mxu0
      %v2775 = vadd.f32 %v2662, %v2774
      %v2776 = vpop.f32.mrb[0].mxu0
      %v2777 = vadd.f32 %v2664, %v2776
      %v2778 = vpop.f32.mrb[0].mxu0
      %v2779 = vadd.f32 %v2666, %v2778
      %v2780 = vpop.f32.mrb[0].mxu0
      %v2781 = vadd.f32 %v2668, %v2780
      %2782 = vmatprep.mubr.bf16.mxu0 %v2212
      %2783 = vmatmul.mubr.bf16.gmra.mrb[0].mxu0 %v2211
      %v2784 = vpop.f32.mrb[0].mxu0
      %v2785 = vadd.f32 %v2672, %v2784
      %v2786 = vpop.f32.mrb[0].mxu0
      %v2787 = vadd.f32 %v2674, %v2786
      %v2788 = vpop.f32.mrb[0].mxu0
      %v2789 = vadd.f32 %v2676, %v2788
      %v2790 = vpop.f32.mrb[0].mxu0
      %v2791 = vadd.f32 %v2678, %v2790
      %2792 = vmatprep.mubr.bf16.mxu0 %v2216
      %2793 = vmatmul.mubr.bf16.gmra.mrb[0].mxu0 %v2215
      %v2794 = vpop.f32.mrb[0].mxu0
      %v2795 = vadd.f32 %v2682, %v2794
      %v2796 = vpop.f32.mrb[0].mxu0
      %v2797 = vadd.f32 %v2684, %v2796
      %v2798 = vpop.f32.mrb[0].mxu0
      %v2799 = vadd.f32 %v2686, %v2798
      %v2800 = vpop.f32.mrb[0].mxu0
      %v2801 = vadd.f32 %v2688, %v2800
      %2802 = vmatprep.mubr.bf16.mxu0 %v2220
      %2803 = vmatmul.mubr.bf16.gmra.mrb[0].mxu0 %v2219
      %v2804 = vpop.f32.mrb[0].mxu0
      %v2805 = vadd.f32 %v2692, %v2804
      %v2806 = vpop.f32.mrb[0].mxu0
      %v2807 = vadd.f32 %v2694, %v2806
      %v2808 = vpop.f32.mrb[0].mxu0
      %v2809 = vadd.f32 %v2696, %v2808
      %v2810 = vpop.f32.mrb[0].mxu0
      %v2811 = vadd.f32 %v2698, %v2810
      %2812 = vmatprep.mubr.bf16.mxu0 %v2224
      %2813 = vmatmul.mubr.bf16.gmra.mrb[0].mxu0 %v2223
      %v2814 = vpop.f32.mrb[0].mxu0
      %v2815 = vadd.f32 %v2702, %v2814
      %v2816 = vpop.f32.mrb[0].mxu0
      %v2817 = vadd.f32 %v2704, %v2816
      %v2818 = vpop.f32.mrb[0].mxu0
      %v2819 = vadd.f32 %v2706, %v2818
      %v2820 = vpop.f32.mrb[0].mxu0
      %v2821 = vadd.f32 %v2708, %v2820
      %2822 = vmatprep.mubr.bf16.mxu0 %v2228
      %2823 = vmatmul.mubr.bf16.gmra.mrb[0].mxu0 %v2227
      %v2824 = vpop.f32.mrb[0].mxu0
      %v2825 = vadd.f32 %v2712, %v2824
      %v2826 = vpop.f32.mrb[0].mxu0
      %v2827 = vadd.f32 %v2714, %v2826
      %v2828 = vpop.f32.mrb[0].mxu0
      %v2829 = vadd.f32 %v2716, %v2828
      %v2830 = vpop.f32.mrb[0].mxu0
      %v2831 = vadd.f32 %v2718, %v2830
      %2832 = vmatprep.mubr.bf16.mxu0 %v2232
      %2833 = vmatmul.mubr.bf16.gmra.mrb[0].mxu0 %v2231
      %v2834 = vpop.f32.mrb[0].mxu0
      %v2835 = vadd.f32 %v2722, %v2834
      %v2836 = vpop.f32.mrb[0].mxu0
      %v2837 = vadd.f32 %v2724, %v2836
      %v2838 = vpop.f32.mrb[0].mxu0
      %v2839 = vadd.f32 %v2726, %v2838
      %v2840 = vpop.f32.mrb[0].mxu0
      %v2841 = vadd.f32 %v2728, %v2840
      %2842 = vdwg.mxu0
      %v2843 = vtanh.pop %v2765
      %v2844 = vtanh.pop %v2767
      %v2845 = vtanh.pop %v2769
      %v2846 = vtanh.pop %v2771
      %v2847 = vtanh.pop %v2775
      %v2848 = vtanh.pop %v2777
      %v2849 = vtanh.pop %v2779
      %v2850 = vtanh.pop %v2781
      %v2851 = vtanh.pop %v2785
      %v2852 = vtanh.pop %v2787
      %v2853 = vtanh.pop %v2789
      %v2854 = vtanh.pop %v2791
      %v2855 = vtanh.pop %v2795
      %v2856 = vtanh.pop %v2797
      %v2857 = vtanh.pop %v2799
      %v2858 = vtanh.pop %v2801
      %v2859 = vtanh.pop %v2805
      %v2860 = vtanh.pop %v2807
      %v2861 = vtanh.pop %v2809
      %v2862 = vtanh.pop %v2811
      %v2863 = vtanh.pop %v2815
      %v2864 = vtanh.pop %v2817
      %v2865 = vtanh.pop %v2819
      %v2866 = vtanh.pop %v2821
      %v2867 = vtanh.pop %v2825
      %v2868 = vtanh.pop %v2827
      %v2869 = vtanh.pop %v2829
      %v2870 = vtanh.pop %v2831
      %v2871 = vtanh.pop %v2835
      %v2872 = vtanh.pop %v2837
      %v2873 = vtanh.pop %v2839
      %v2874 = vtanh.pop %v2841
      %v2875 = vpack.c.bf16 %v2845, %v2843
      %v2876 = vpack.c.bf16 %v2846, %v2844
      %v2877 = vpack.c.bf16 %v2849, %v2847
      %v2878 = vpack.c.bf16 %v2850, %v2848
      %v2879 = vpack.c.bf16 %v2853, %v2851
      %v2880 = vpack.c.bf16 %v2854, %v2852
      %v2881 = vpack.c.bf16 %v2857, %v2855
      %v2882 = vpack.c.bf16 %v2858, %v2856
      %v2883 = vpack.c.bf16 %v2861, %v2859
      %v2884 = vpack.c.bf16 %v2862, %v2860
      %v2885 = vpack.c.bf16 %v2865, %v2863
      %v2886 = vpack.c.bf16 %v2866, %v2864
      %v2887 = vpack.c.bf16 %v2869, %v2867
      %v2888 = vpack.c.bf16 %v2870, %v2868
      %v2889 = vpack.c.bf16 %v2873, %v2871
      %v2890 = vpack.c.bf16 %v2874, %v2872
      %v2891 = vld [vmem:[%s3] sm:$0xf]
      %v2892 = vld [vmem:[%s3 + $0x4] sm:$0xf]
      %v2893 = vld [vmem:[%s3 + $0x8] sm:$0xf]
      %v2894 = vld [vmem:[%s3 + $0xc] sm:$0xf]
      %v2895 = vld [vmem:[%s3 + $0x10] sm:$0xf]
      %v2896 = vld [vmem:[%s3 + $0x14] sm:$0xf]
      %v2897 = vld [vmem:[%s3 + $0x18] sm:$0xf]
      %v2898 = vld [vmem:[%s3 + $0x1c] sm:$0xf]
      %v2899 = vld [vmem:[%s3 + $0x20] sm:$0xf]
      %v2900 = vld [vmem:[%s3 + $0x24] sm:$0xf]
      %v2901 = vld [vmem:[%s3 + $0x28] sm:$0xf]
      %v2902 = vld [vmem:[%s3 + $0x2c] sm:$0xf]
      %v2903 = vld [vmem:[%s3 + $0x30] sm:$0xf]
      %v2904 = vld [vmem:[%s3 + $0x34] sm:$0xf]
      %v2905 = vld [vmem:[%s3 + $0x38] sm:$0xf]
      %v2906 = vld [vmem:[%s3 + $0x3c] sm:$0xf]
      %v2907 = vld [vmem:[%s3 + $0x40] sm:$0xf]
      %v2908 = vld [vmem:[%s3 + $0x44] sm:$0xf]
      %v2909 = vld [vmem:[%s3 + $0x48] sm:$0xf]
      %v2910 = vld [vmem:[%s3 + $0x4c] sm:$0xf]
      %v2911 = vld [vmem:[%s3 + $0x50] sm:$0xf]
      %v2912 = vld [vmem:[%s3 + $0x54] sm:$0xf]
      %v2913 = vld [vmem:[%s3 + $0x58] sm:$0xf]
      %v2914 = vld [vmem:[%s3 + $0x5c] sm:$0xf]
      %v2915 = vld [vmem:[%s3 + $0x60] sm:$0xf]
      %v2916 = vld [vmem:[%s3 + $0x64] sm:$0xf]
      %v2917 = vld [vmem:[%s3 + $0x68] sm:$0xf]
      %v2918 = vld [vmem:[%s3 + $0x6c] sm:$0xf]
      %v2919 = vld [vmem:[%s3 + $0x70] sm:$0xf]
      %v2920 = vld [vmem:[%s3 + $0x74] sm:$0xf]
      %v2921 = vld [vmem:[%s3 + $0x78] sm:$0xf]
      %v2922 = vld [vmem:[%s3 + $0x7c] sm:$0xf]
      %v2955 = vunpack.c.l.b16 %v2891
      %v2956 = vunpack.c.l.b16 %v2892
      %v2957 = vunpack.c.l.b16 %v2893
      %v2958 = vunpack.c.l.b16 %v2894
      %v2959 = vunpack.c.l.b16 %v2895
      %v2960 = vunpack.c.l.b16 %v2896
      %v2961 = vunpack.c.l.b16 %v2897
      %v2962 = vunpack.c.l.b16 %v2898
      %v2963 = vunpack.c.l.b16 %v2899
      %v2964 = vunpack.c.l.b16 %v2900
      %v2965 = vunpack.c.l.b16 %v2901
      %v2966 = vunpack.c.l.b16 %v2902
      %v2967 = vunpack.c.l.b16 %v2903
      %v2968 = vunpack.c.l.b16 %v2904
      %v2969 = vunpack.c.l.b16 %v2905
      %v2970 = vunpack.c.l.b16 %v2906
      %v2971 = vunpack.c.l.b16 %v2907
      %v2972 = vunpack.c.l.b16 %v2908
      %v2973 = vunpack.c.l.b16 %v2909
      %v2974 = vunpack.c.l.b16 %v2910
      %v2975 = vunpack.c.l.b16 %v2911
      %v2976 = vunpack.c.l.b16 %v2912
      %v2977 = vunpack.c.l.b16 %v2913
      %v2978 = vunpack.c.l.b16 %v2914
      %v2979 = vunpack.c.l.b16 %v2915
      %v2980 = vunpack.c.l.b16 %v2916
      %v2981 = vunpack.c.l.b16 %v2917
      %v2982 = vunpack.c.l.b16 %v2918
      %v2983 = vunpack.c.l.b16 %v2919
      %v2984 = vunpack.c.l.b16 %v2920
      %v2985 = vunpack.c.l.b16 %v2921
      %v2986 = vunpack.c.l.b16 %v2922
      %v2987 = vpack.c.b16 %v2956, %v2955
      %v2988 = vpack.c.b16 %v2958, %v2957
      %v2989 = vpack.c.b16 %v2960, %v2959
      %v2990 = vpack.c.b16 %v2962, %v2961
      %v2991 = vpack.c.b16 %v2964, %v2963
      %v2992 = vpack.c.b16 %v2966, %v2965
      %v2993 = vpack.c.b16 %v2968, %v2967
      %v2994 = vpack.c.b16 %v2970, %v2969
      %v2995 = vpack.c.b16 %v2972, %v2971
      %v2996 = vpack.c.b16 %v2974, %v2973
      %v2997 = vpack.c.b16 %v2976, %v2975
      %v2998 = vpack.c.b16 %v2978, %v2977
      %v2999 = vpack.c.b16 %v2980, %v2979
      %v3000 = vpack.c.b16 %v2982, %v2981
      %v3001 = vpack.c.b16 %v2984, %v2983
      %v3002 = vpack.c.b16 %v2986, %v2985
      %3019 = vmatprep.subr.bf16.mxu0 0
      %3020 = vmatpush1.bf16.msra.mxu0 %v2987
      %3021 = vmatprep.subr.bf16.mxu0 0
      %3022 = vmatpush1.bf16.msra.mxu0 %v2988
      %3023 = vmatprep.subr.bf16.mxu0 0
      %3024 = vmatpush1.bf16.msra.mxu0 %v2989
      %3025 = vmatprep.subr.bf16.mxu0 0
      %3026 = vmatpush1.bf16.msra.mxu0 %v2990
      %3027 = vmatprep.subr.bf16.mxu0 0
      %3028 = vmatpush1.bf16.msra.mxu0 %v2991
      %3029 = vmatprep.subr.bf16.mxu0 0
      %3030 = vmatpush1.bf16.msra.mxu0 %v2992
      %3031 = vmatprep.subr.bf16.mxu0 0
      %3032 = vmatpush1.bf16.msra.mxu0 %v2993
      %3033 = vmatprep.subr.bf16.mxu0 0
      %3034 = vmatpush1.bf16.msra.mxu0 %v2994
      %3035 = vmatprep.subr.bf16.mxu0 0
      %3036 = vmatpush1.bf16.msra.mxu0 %v2995
      %3037 = vmatprep.subr.bf16.mxu0 0
      %3038 = vmatpush1.bf16.msra.mxu0 %v2996
      %3039 = vmatprep.subr.bf16.mxu0 0
      %3040 = vmatpush1.bf16.msra.mxu0 %v2997
      %3041 = vmatprep.subr.bf16.mxu0 0
      %3042 = vmatpush1.bf16.msra.mxu0 %v2998
      %3043 = vmatprep.subr.bf16.mxu0 0
      %3044 = vmatpush1.bf16.msra.mxu0 %v2999
      %3045 = vmatprep.subr.bf16.mxu0 0
      %3046 = vmatpush1.bf16.msra.mxu0 %v3000
      %3047 = vmatprep.subr.bf16.mxu0 0
      %3048 = vmatpush1.bf16.msra.mxu0 %v3001
      %3049 = vmatprep.subr.bf16.mxu0 0
      %3050 = vmatpush1.bf16.msra.mxu0 %v3002
      %3051 = vmatprep.mubr.bf16.mxu0 %v2876
      %3052 = vmatmul.mubr.bf16.gmra.mrb[0].mxu0 %v2875
      %v3053 = vpop.f32.mrb[0].mxu0
      %v3054 = vadd.f32 0.0, %v3053
      %v3055 = vpop.f32.mrb[0].mxu0
      %v3056 = vpop.f32.mrb[0].mxu0
      %v3057 = vadd.f32 0.0, %v3056
      %v3058 = vpop.f32.mrb[0].mxu0
      %3059 = vmatprep.mubr.bf16.mxu0 %v2878
      %3060 = vmatmul.mubr.bf16.gmra.mrb[0].mxu0 %v2877
      %v3061 = vpop.f32.mrb[0].mxu0
      %v3062 = vadd.f32 0.0, %v3061
      %v3063 = vpop.f32.mrb[0].mxu0
      %v3064 = vpop.f32.mrb[0].mxu0
      %v3065 = vadd.f32 0.0, %v3064
      %v3066 = vpop.f32.mrb[0].mxu0
      %3067 = vmatprep.mubr.bf16.mxu0 %v2880
      %3068 = vmatmul.mubr.bf16.gmra.mrb[0].mxu0 %v2879
      %v3069 = vpop.f32.mrb[0].mxu0
      %v3070 = vadd.f32 0.0, %v3069
      %v3071 = vpop.f32.mrb[0].mxu0
      %v3072 = vpop.f32.mrb[0].mxu0
      %v3073 = vadd.f32 0.0, %v3072
      %v3074 = vpop.f32.mrb[0].mxu0
      %3075 = vmatprep.mubr.bf16.mxu0 %v2882
      %3076 = vmatmul.mubr.bf16.gmra.mrb[0].mxu0 %v2881
      %v3077 = vpop.f32.mrb[0].mxu0
      %v3078 = vadd.f32 0.0, %v3077
      %v3079 = vpop.f32.mrb[0].mxu0
      %v3080 = vpop.f32.mrb[0].mxu0
      %v3081 = vadd.f32 0.0, %v3080
      %v3082 = vpop.f32.mrb[0].mxu0
      %3083 = vmatprep.mubr.bf16.mxu0 %v2884
      %3084 = vmatmul.mubr.bf16.gmra.mrb[0].mxu0 %v2883
      %v3085 = vpop.f32.mrb[0].mxu0
      %v3086 = vadd.f32 0.0, %v3085
      %v3087 = vpop.f32.mrb[0].mxu0
      %v3088 = vpop.f32.mrb[0].mxu0
      %v3089 = vadd.f32 0.0, %v3088
      %v3090 = vpop.f32.mrb[0].mxu0
      %3091 = vmatprep.mubr.bf16.mxu0 %v2886
      %3092 = vmatmul.mubr.bf16.gmra.mrb[0].mxu0 %v2885
      %v3093 = vpop.f32.mrb[0].mxu0
      %v3094 = vadd.f32 0.0, %v3093
      %v3095 = vpop.f32.mrb[0].mxu0
      %v3096 = vpop.f32.mrb[0].mxu0
      %v3097 = vadd.f32 0.0, %v3096
      %v3098 = vpop.f32.mrb[0].mxu0
      %3099 = vmatprep.mubr.bf16.mxu0 %v2888
      %3100 = vmatmul.mubr.bf16.gmra.mrb[0].mxu0 %v2887
      %v3101 = vpop.f32.mrb[0].mxu0
      %v3102 = vadd.f32 0.0, %v3101
      %v3103 = vpop.f32.mrb[0].mxu0
      %v3104 = vpop.f32.mrb[0].mxu0
      %v3105 = vadd.f32 0.0, %v3104
      %v3106 = vpop.f32.mrb[0].mxu0
      %3107 = vmatprep.mubr.bf16.mxu0 %v2890
      %3108 = vmatmul.mubr.bf16.gmra.mrb[0].mxu0 %v2889
      %v3109 = vpop.f32.mrb[0].mxu0
      %v3110 = vadd.f32 0.0, %v3109
      %v3111 = vpop.f32.mrb[0].mxu0
      %v3112 = vpop.f32.mrb[0].mxu0
      %v3113 = vadd.f32 0.0, %v3112
      %v3114 = vpop.f32.mrb[0].mxu0
      %3115 = vdwg.mxu0
      %v3116 = vtanh.pop %v3054
      %v3117 = vtanh.pop %v3057
      %v3118 = vtanh.pop %v3062
      %v3119 = vtanh.pop %v3065
      %v3120 = vtanh.pop %v3070
      %v3121 = vtanh.pop %v3073
      %v3122 = vtanh.pop %v3078
      %v3123 = vtanh.pop %v3081
      %v3124 = vtanh.pop %v3086
      %v3125 = vtanh.pop %v3089
      %v3126 = vtanh.pop %v3094
      %v3127 = vtanh.pop %v3097
      %v3128 = vtanh.pop %v3102
      %v3129 = vtanh.pop %v3105
      %v3130 = vtanh.pop %v3110
      %v3131 = vtanh.pop %v3113
      %v3132 = vpack.c.bf16 %v3117, %v3116
      %v3133 = vpack.c.bf16 %v3119, %v3118
      %v3134 = vpack.c.bf16 %v3121, %v3120
      %v3135 = vpack.c.bf16 %v3123, %v3122
      %v3136 = vpack.c.bf16 %v3125, %v3124
      %v3137 = vpack.c.bf16 %v3127, %v3126
      %v3138 = vpack.c.bf16 %v3129, %v3128
      %v3139 = vpack.c.bf16 %v3131, %v3130
      %v3140 = vld [vmem:[%s4] sm:$0xf]
      %v3141 = vld [vmem:[%s4 + $0x4] sm:$0xf]
      %v3142 = vld [vmem:[%s4 + $0x8] sm:$0xf]
      %v3143 = vld [vmem:[%s4 + $0xc] sm:$0xf]
      %v3144 = vld [vmem:[%s4 + $0x10] sm:$0xf]
      %v3145 = vld [vmem:[%s4 + $0x14] sm:$0xf]
      %v3146 = vld [vmem:[%s4 + $0x18] sm:$0xf]
      %v3147 = vld [vmem:[%s4 + $0x1c] sm:$0xf]
      %v3148 = vld [vmem:[%s4 + $0x20] sm:$0xf]
      %v3149 = vld [vmem:[%s4 + $0x24] sm:$0xf]
      %v3150 = vld [vmem:[%s4 + $0x28] sm:$0xf]
      %v3151 = vld [vmem:[%s4 + $0x2c] sm:$0xf]
      %v3152 = vld [vmem:[%s4 + $0x30] sm:$0xf]
      %v3153 = vld [vmem:[%s4 + $0x34] sm:$0xf]
      %v3154 = vld [vmem:[%s4 + $0x38] sm:$0xf]
      %v3155 = vld [vmem:[%s4 + $0x3c] sm:$0xf]
      %v3172 = vunpack.c.l.b16 %v3140
      %v3173 = vunpack.c.l.b16 %v3141
      %v3174 = vunpack.c.l.b16 %v3142
      %v3175 = vunpack.c.l.b16 %v3143
      %v3176 = vunpack.c.l.b16 %v3144
      %v3177 = vunpack.c.l.b16 %v3145
      %v3178 = vunpack.c.l.b16 %v3146
      %v3179 = vunpack.c.l.b16 %v3147
      %v3180 = vunpack.c.l.b16 %v3148
      %v3181 = vunpack.c.l.b16 %v3149
      %v3182 = vunpack.c.l.b16 %v3150
      %v3183 = vunpack.c.l.b16 %v3151
      %v3184 = vunpack.c.l.b16 %v3152
      %v3185 = vunpack.c.l.b16 %v3153
      %v3186 = vunpack.c.l.b16 %v3154
      %v3187 = vunpack.c.l.b16 %v3155
      %v3188 = vpack.c.b16 %v3173, %v3172
      %v3189 = vpack.c.b16 %v3175, %v3174
      %v3190 = vpack.c.b16 %v3177, %v3176
      %v3191 = vpack.c.b16 %v3179, %v3178
      %v3192 = vpack.c.b16 %v3181, %v3180
      %v3193 = vpack.c.b16 %v3183, %v3182
      %v3194 = vpack.c.b16 %v3185, %v3184
      %v3195 = vpack.c.b16 %v3187, %v3186
      %3204 = vmatprep.subr.bf16.mxu0 0
      %3205 = vmatpush1.bf16.msra.mxu0 %v3188
      %3206 = vmatprep.subr.bf16.mxu0 0
      %3207 = vmatpush1.bf16.msra.mxu0 %v3189
      %3208 = vmatprep.subr.bf16.mxu0 0
      %3209 = vmatpush1.bf16.msra.mxu0 %v3190
      %3210 = vmatprep.subr.bf16.mxu0 0
      %3211 = vmatpush1.bf16.msra.mxu0 %v3191
      %3212 = vmatprep.subr.bf16.mxu0 0
      %3213 = vmatpush1.bf16.msra.mxu0 %v3192
      %3214 = vmatprep.subr.bf16.mxu0 0
      %3215 = vmatpush1.bf16.msra.mxu0 %v3193
      %3216 = vmatprep.subr.bf16.mxu0 0
      %3217 = vmatpush1.bf16.msra.mxu0 %v3194
      %3218 = vmatprep.subr.bf16.mxu0 0
      %3219 = vmatpush1.bf16.msra.mxu0 %v3195
      %3220 = vmatprep.subr.bf16.mxu0 0
      %3221 = vmatpush1.bf16.msra.mxu0 0
      %3222 = vmatprep.subr.bf16.mxu0 0
      %3223 = vmatpush1.bf16.msra.mxu0 0
      %3224 = vmatprep.subr.bf16.mxu0 0
      %3225 = vmatpush1.bf16.msra.mxu0 0
      %3226 = vmatprep.subr.bf16.mxu0 0
      %3227 = vmatpush1.bf16.msra.mxu0 0
      %3228 = vmatprep.subr.bf16.mxu0 0
      %3229 = vmatpush1.bf16.msra.mxu0 0
      %3230 = vmatprep.subr.bf16.mxu0 0
      %3231 = vmatpush1.bf16.msra.mxu0 0
      %3232 = vmatprep.subr.bf16.mxu0 0
      %3233 = vmatpush1.bf16.msra.mxu0 0
      %3234 = vmatprep.subr.bf16.mxu0 0
      %3235 = vmatpush1.bf16.msra.mxu0 0
      %3236 = vmatprep.mubr.bf16.mxu0 0
      %3237 = vmatmul.mubr.bf16.gmra.mrb[0].mxu0 %v3132
      %v3238 = vpop.f32.mrb[0].mxu0
      %v3239 = vadd.f32 0.0, %v3238
      %v3240 = vpop.f32.mrb[0].mxu0
      %v3241 = vpop.f32.mrb[0].mxu0
      %v3242 = vadd.f32 0.0, %v3241
      %v3243 = vpop.f32.mrb[0].mxu0
      %3244 = vmatprep.mubr.bf16.mxu0 0
      %3245 = vmatmul.mubr.bf16.gmra.mrb[0].mxu0 %v3133
      %v3246 = vpop.f32.mrb[0].mxu0
      %v3247 = vadd.f32 0.0, %v3246
      %v3248 = vpop.f32.mrb[0].mxu0
      %v3249 = vpop.f32.mrb[0].mxu0
      %v3250 = vadd.f32 0.0, %v3249
      %v3251 = vpop.f32.mrb[0].mxu0
      %3252 = vmatprep.mubr.bf16.mxu0 0
      %3253 = vmatmul.mubr.bf16.gmra.mrb[0].mxu0 %v3134
      %v3254 = vpop.f32.mrb[0].mxu0
      %v3255 = vadd.f32 0.0, %v3254
      %v3256 = vpop.f32.mrb[0].mxu0
      %v3257 = vpop.f32.mrb[0].mxu0
      %v3258 = vadd.f32 0.0, %v3257
      %v3259 = vpop.f32.mrb[0].mxu0
      %3260 = vmatprep.mubr.bf16.mxu0 0
      %3261 = vmatmul.mubr.bf16.gmra.mrb[0].mxu0 %v3135
      %v3262 = vpop.f32.mrb[0].mxu0
      %v3263 = vadd.f32 0.0, %v3262
      %v3264 = vpop.f32.mrb[0].mxu0
      %v3265 = vpop.f32.mrb[0].mxu0
      %v3266 = vadd.f32 0.0, %v3265
      %v3267 = vpop.f32.mrb[0].mxu0
      %3268 = vmatprep.mubr.bf16.mxu0 0
      %3269 = vmatmul.mubr.bf16.gmra.mrb[0].mxu0 %v3136
      %v3270 = vpop.f32.mrb[0].mxu0
      %v3271 = vadd.f32 0.0, %v3270
      %v3272 = vpop.f32.mrb[0].mxu0
      %v3273 = vpop.f32.mrb[0].mxu0
      %v3274 = vadd.f32 0.0, %v3273
      %v3275 = vpop.f32.mrb[0].mxu0
      %3276 = vmatprep.mubr.bf16.mxu0 0
      %3277 = vmatmul.mubr.bf16.gmra.mrb[0].mxu0 %v3137
      %v3278 = vpop.f32.mrb[0].mxu0
      %v3279 = vadd.f32 0.0, %v3278
      %v3280 = vpop.f32.mrb[0].mxu0
      %v3281 = vpop.f32.mrb[0].mxu0
      %v3282 = vadd.f32 0.0, %v3281
      %v3283 = vpop.f32.mrb[0].mxu0
      %3284 = vmatprep.mubr.bf16.mxu0 0
      %3285 = vmatmul.mubr.bf16.gmra.mrb[0].mxu0 %v3138
      %v3286 = vpop.f32.mrb[0].mxu0
      %v3287 = vadd.f32 0.0, %v3286
      %v3288 = vpop.f32.mrb[0].mxu0
      %v3289 = vpop.f32.mrb[0].mxu0
      %v3290 = vadd.f32 0.0, %v3289
      %v3291 = vpop.f32.mrb[0].mxu0
      %3292 = vmatprep.mubr.bf16.mxu0 0
      %3293 = vmatmul.mubr.bf16.gmra.mrb[0].mxu0 %v3139
      %v3294 = vpop.f32.mrb[0].mxu0
      %v3295 = vadd.f32 0.0, %v3294
      %v3296 = vpop.f32.mrb[0].mxu0
      %v3297 = vpop.f32.mrb[0].mxu0
      %v3298 = vadd.f32 0.0, %v3297
      %v3299 = vpop.f32.mrb[0].mxu0
      %3300 = vdwg.mxu0
      %3301 = vst [vmem:[%s264] sm:$0xff] %v3239
      %3302 = vst [vmem:[%s264 + $0x8] sm:$0xff] %v3242
      %3303 = vst [vmem:[%s264 + $0x10] sm:$0xff] %v3247
      %3304 = vst [vmem:[%s264 + $0x18] sm:$0xff] %v3250
      %3305 = vst [vmem:[%s264 + $0x20] sm:$0xff] %v3255
      %3306 = vst [vmem:[%s264 + $0x28] sm:$0xff] %v3258
      %3307 = vst [vmem:[%s264 + $0x30] sm:$0xff] %v3263
      %3308 = vst [vmem:[%s264 + $0x38] sm:$0xff] %v3266
      %3309 = vst [vmem:[%s264 + $0x40] sm:$0xff] %v3271
      %3310 = vst [vmem:[%s264 + $0x48] sm:$0xff] %v3274
      %3311 = vst [vmem:[%s264 + $0x50] sm:$0xff] %v3279
      %3312 = vst [vmem:[%s264 + $0x58] sm:$0xff] %v3282
      %3313 = vst [vmem:[%s264 + $0x60] sm:$0xff] %v3287
      %3314 = vst [vmem:[%s264 + $0x68] sm:$0xff] %v3290
      %3315 = vst [vmem:[%s264 + $0x70] sm:$0xff] %v3295
      %3316 = vst [vmem:[%s264 + $0x78] sm:$0xff] %v3298
      %v3317 = vlaneseq
      %v3318 = vand.u32 %v3317, 127
      %vm3319 = vcmp.lt.s32.totalorder %v3318, 100
      %v3320 = vsel %vm3319, %v3239, -inf
      %v3321 = vsel %vm3319, %v3242, -inf
      %v3322 = vsel %vm3319, %v3247, -inf
      %v3323 = vsel %vm3319, %v3250, -inf
      %v3324 = vsel %vm3319, %v3255, -inf
      %v3325 = vsel %vm3319, %v3258, -inf
      %v3326 = vsel %vm3319, %v3263, -inf
      %v3327 = vsel %vm3319, %v3266, -inf
      %v3328 = vsel %vm3319, %v3271, -inf
      %v3329 = vsel %vm3319, %v3274, -inf
      %v3330 = vsel %vm3319, %v3279, -inf
      %v3331 = vsel %vm3319, %v3282, -inf
      %v3332 = vsel %vm3319, %v3287, -inf
      %v3333 = vsel %vm3319, %v3290, -inf
      %v3334 = vsel %vm3319, %v3295, -inf
      %v3335 = vsel %vm3319, %v3298, -inf
      %3336 = vmax.xlane.f32.xlu0 %v3320
      %v3337 = vpop.xlane.xlu0 %3336
      %3338 = vmax.xlane.f32.xlu0 %v3321
      %v3339 = vpop.xlane.xlu0 %3338
      %3340 = vmax.xlane.f32.xlu0 %v3322
      %v3341 = vpop.xlane.xlu0 %3340
      %3342 = vmax.xlane.f32.xlu0 %v3323
      %v3343 = vpop.xlane.xlu0 %3342
      %3344 = vmax.xlane.f32.xlu0 %v3324
      %v3345 = vpop.xlane.xlu0 %3344
      %3346 = vmax.xlane.f32.xlu0 %v3325
      %v3347 = vpop.xlane.xlu0 %3346
      %3348 = vmax.xlane.f32.xlu0 %v3326
      %v3349 = vpop.xlane.xlu0 %3348
      %3350 = vmax.xlane.f32.xlu0 %v3327
      %v3351 = vpop.xlane.xlu0 %3350
      %3352 = vmax.xlane.f32.xlu0 %v3328
      %v3353 = vpop.xlane.xlu0 %3352
      %3354 = vmax.xlane.f32.xlu0 %v3329
      %v3355 = vpop.xlane.xlu0 %3354
      %3356 = vmax.xlane.f32.xlu0 %v3330
      %v3357 = vpop.xlane.xlu0 %3356
      %3358 = vmax.xlane.f32.xlu0 %v3331
      %v3359 = vpop.xlane.xlu0 %3358
      %3360 = vmax.xlane.f32.xlu0 %v3332
      %v3361 = vpop.xlane.xlu0 %3360
      %3362 = vmax.xlane.f32.xlu0 %v3333
      %v3363 = vpop.xlane.xlu0 %3362
      %3364 = vmax.xlane.f32.xlu0 %v3334
      %v3365 = vpop.xlane.xlu0 %3364
      %3366 = vmax.xlane.f32.xlu0 %v3335
      %v3367 = vpop.xlane.xlu0 %3366
      %v3368 = vsub.f32 %v3320, %v3337
      %v3369 = vsub.f32 %v3321, %v3339
      %v3370 = vsub.f32 %v3322, %v3341
      %v3371 = vsub.f32 %v3323, %v3343
      %v3372 = vsub.f32 %v3324, %v3345
      %v3373 = vsub.f32 %v3325, %v3347
      %v3374 = vsub.f32 %v3326, %v3349
      %v3375 = vsub.f32 %v3327, %v3351
      %v3376 = vsub.f32 %v3328, %v3353
      %v3377 = vsub.f32 %v3329, %v3355
      %v3378 = vsub.f32 %v3330, %v3357
      %v3379 = vsub.f32 %v3331, %v3359
      %v3380 = vsub.f32 %v3332, %v3361
      %v3381 = vsub.f32 %v3333, %v3363
      %v3382 = vsub.f32 %v3334, %v3365
      %v3383 = vsub.f32 %v3335, %v3367
      %v3384 = vmul.f32 %v3368, 1.442695
      %v3385 = vpow.pop %v3384
      %v3386 = vmul.f32 %v3369, 1.442695
      %v3387 = vpow.pop %v3386
      %v3388 = vmul.f32 %v3370, 1.442695
      %v3389 = vpow.pop %v3388
      %v3390 = vmul.f32 %v3371, 1.442695
      %v3391 = vpow.pop %v3390
      %v3392 = vmul.f32 %v3372, 1.442695
      %v3393 = vpow.pop %v3392
      %v3394 = vmul.f32 %v3373, 1.442695
      %v3395 = vpow.pop %v3394
      %v3396 = vmul.f32 %v3374, 1.442695
      %v3397 = vpow.pop %v3396
      %v3398 = vmul.f32 %v3375, 1.442695
      %v3399 = vpow.pop %v3398
      %v3400 = vmul.f32 %v3376, 1.442695
      %v3401 = vpow.pop %v3400
      %v3402 = vmul.f32 %v3377, 1.442695
      %v3403 = vpow.pop %v3402
      %v3404 = vmul.f32 %v3378, 1.442695
      %v3405 = vpow.pop %v3404
      %v3406 = vmul.f32 %v3379, 1.442695
      %v3407 = vpow.pop %v3406
      %v3408 = vmul.f32 %v3380, 1.442695
      %v3409 = vpow.pop %v3408
      %v3410 = vmul.f32 %v3381, 1.442695
      %v3411 = vpow.pop %v3410
      %v3412 = vmul.f32 %v3382, 1.442695
      %v3413 = vpow.pop %v3412
      %v3414 = vmul.f32 %v3383, 1.442695
      %v3415 = vpow.pop %v3414
      %3416 = vadd.xlane.f32.xlu0 %v3385
      %v3417 = vpop.xlane.xlu0 %3416
      %3418 = vadd.xlane.f32.xlu0 %v3387
      %v3419 = vpop.xlane.xlu0 %3418
      %3420 = vadd.xlane.f32.xlu0 %v3389
      %v3421 = vpop.xlane.xlu0 %3420
      %3422 = vadd.xlane.f32.xlu0 %v3391
      %v3423 = vpop.xlane.xlu0 %3422
      %3424 = vadd.xlane.f32.xlu0 %v3393
      %v3425 = vpop.xlane.xlu0 %3424
      %3426 = vadd.xlane.f32.xlu0 %v3395
      %v3427 = vpop.xlane.xlu0 %3426
      %3428 = vadd.xlane.f32.xlu0 %v3397
      %v3429 = vpop.xlane.xlu0 %3428
      %3430 = vadd.xlane.f32.xlu0 %v3399
      %v3431 = vpop.xlane.xlu0 %3430
      %3432 = vadd.xlane.f32.xlu0 %v3401
      %v3433 = vpop.xlane.xlu0 %3432
      %3434 = vadd.xlane.f32.xlu0 %v3403
      %v3435 = vpop.xlane.xlu0 %3434
      %3436 = vadd.xlane.f32.xlu0 %v3405
      %v3437 = vpop.xlane.xlu0 %3436
      %3438 = vadd.xlane.f32.xlu0 %v3407
      %v3439 = vpop.xlane.xlu0 %3438
      %3440 = vadd.xlane.f32.xlu0 %v3409
      %v3441 = vpop.xlane.xlu0 %3440
      %3442 = vadd.xlane.f32.xlu0 %v3411
      %v3443 = vpop.xlane.xlu0 %3442
      %3444 = vadd.xlane.f32.xlu0 %v3413
      %v3445 = vpop.xlane.xlu0 %3444
      %3446 = vadd.xlane.f32.xlu0 %v3415
      %v3447 = vpop.xlane.xlu0 %3446
      %v3448 = vrcp.pop %v3417
      %v3449 = vmul.f32 %v3385, %v3448
      %v3450 = vrcp.pop %v3419
      %v3451 = vmul.f32 %v3387, %v3450
      %v3452 = vrcp.pop %v3421
      %v3453 = vmul.f32 %v3389, %v3452
      %v3454 = vrcp.pop %v3423
      %v3455 = vmul.f32 %v3391, %v3454
      %v3456 = vrcp.pop %v3425
      %v3457 = vmul.f32 %v3393, %v3456
      %v3458 = vrcp.pop %v3427
      %v3459 = vmul.f32 %v3395, %v3458
      %v3460 = vrcp.pop %v3429
      %v3461 = vmul.f32 %v3397, %v3460
      %v3462 = vrcp.pop %v3431
      %v3463 = vmul.f32 %v3399, %v3462
      %v3464 = vrcp.pop %v3433
      %v3465 = vmul.f32 %v3401, %v3464
      %v3466 = vrcp.pop %v3435
      %v3467 = vmul.f32 %v3403, %v3466
      %v3468 = vrcp.pop %v3437
      %v3469 = vmul.f32 %v3405, %v3468
      %v3470 = vrcp.pop %v3439
      %v3471 = vmul.f32 %v3407, %v3470
      %v3472 = vrcp.pop %v3441
      %v3473 = vmul.f32 %v3409, %v3472
      %v3474 = vrcp.pop %v3443
      %v3475 = vmul.f32 %v3411, %v3474
      %v3476 = vrcp.pop %v3445
      %v3477 = vmul.f32 %v3413, %v3476
      %v3478 = vrcp.pop %v3447
      %v3479 = vmul.f32 %v3415, %v3478
      %3480 = vst [vmem:[%s270] sm:$0xff] %v3449
      %3481 = vst [vmem:[%s270 + $0x8] sm:$0xff] %v3451
      %3482 = vst [vmem:[%s270 + $0x10] sm:$0xff] %v3453
      %3483 = vst [vmem:[%s270 + $0x18] sm:$0xff] %v3455
      %3484 = vst [vmem:[%s270 + $0x20] sm:$0xff] %v3457
      %3485 = vst [vmem:[%s270 + $0x28] sm:$0xff] %v3459
      %3486 = vst [vmem:[%s270 + $0x30] sm:$0xff] %v3461
      %3487 = vst [vmem:[%s270 + $0x38] sm:$0xff] %v3463
      %3488 = vst [vmem:[%s270 + $0x40] sm:$0xff] %v3465
      %3489 = vst [vmem:[%s270 + $0x48] sm:$0xff] %v3467
      %3490 = vst [vmem:[%s270 + $0x50] sm:$0xff] %v3469
      %3491 = vst [vmem:[%s270 + $0x58] sm:$0xff] %v3471
      %3492 = vst [vmem:[%s270 + $0x60] sm:$0xff] %v3473
      %3493 = vst [vmem:[%s270 + $0x68] sm:$0xff] %v3475
      %3494 = vst [vmem:[%s270 + $0x70] sm:$0xff] %v3477
      %3495 = vst [vmem:[%s270 + $0x78] sm:$0xff] %v3479
      %s3496 = smul.u32 16, %s18
      %p3497 = scmp.lt.s32.totalorder %s3496, 31
      %s3498 = scalar_select %p3497, %s3496, 31
      %s3499 = smul.addr %s3498, 8
      %s3500 = scalar_lea.vmem %s5, %s3499
      %s3501 = smul.u32 16, %s18
      %p3502 = scmp.lt.s32.totalorder %s3501, 31
      %s3503 = scalar_select %p3502, %s3501, 31
      %s3504 = smul.addr %s3503, 8
      %s3505 = scalar_lea.vmem %s6, %s3504
      // Predicated region
      $region41: #{_forward_impl.1} parent=39 // pred_check
        %p3506 = pneg %p146
      $region42: #{_forward_impl.1} parent=39 // pred_check_branch
        %3508 = sbr.rel (%p3506) target = $region44
      $region43: #{_forward_impl.1} parent=39 // pred_region
        %s3509 = smul.u32 16, %s18
      $region44: #{_forward_impl.1} parent=39 // pred_fallthru
        _
      // Predicated region
      $region45: #{_forward_impl.1} parent=39 // pred_check
        %p3510 = pneg %p172
      $region46: #{_forward_impl.1} parent=39 // pred_check_branch
        %3512 = sbr.rel (%p3510) target = $region48
      $region47: #{_forward_impl.1} parent=39 // pred_region
        %s3513 = smul.u32 16, %s18
      $region48: #{_forward_impl.1} parent=39 // pred_fallthru
        _
    $region40: #{_forward_impl.1} parent=5 // pred_fallthru
      _
    %p3514 = scmp.le.s32.totalorder 2, %s13
    // Predicated region
    $region49: #{_forward_impl.1} parent=5 // pred_check
      %p3515 = pneg %p3514
    $region50: #{_forward_impl.1} parent=5 // pred_check_branch
      %3517 = sbr.rel (%p3515) target = $region52
    $region51: #{_forward_impl.1} parent=5 // pred_region
      %s3518 = ssub.s32 %s13, 2
      // Predicated region
      $region53: #{_forward_impl.1} parent=51 // pred_check
        %p3519 = pneg %p152
      $region54: #{_forward_impl.1} parent=51 // pred_check_branch
        %3521 = sbr.rel (%p3519) target = $region56
      $region55: #{_forward_impl.1} parent=51 // pred_region
        %s3522 = smul.u32 16, %s19
        %p3523 = scmp.lt.s32.totalorder %s3522, 31
        %s3524 = scalar_select %p3523, %s3522, 31
        %s3525 = smul.addr %s3524, 8
        %s3526 = scalar_lea.vmem %s5, %s3525
      $region56: #{_forward_impl.1} parent=51 // pred_fallthru
        _
      // Predicated region
      $region57: #{_forward_impl.1} parent=51 // pred_check
        %p3527 = pneg %p178
      $region58: #{_forward_impl.1} parent=51 // pred_check_branch
        %3529 = sbr.rel (%p3527) target = $region60
      $region59: #{_forward_impl.1} parent=51 // pred_region
        %s3530 = smul.u32 16, %s19
        %p3531 = scmp.lt.s32.totalorder %s3530, 31
        %s3532 = scalar_select %p3531, %s3530, 31
        %s3533 = smul.addr %s3532, 8
        %s3534 = scalar_lea.vmem %s6, %s3533
      $region60: #{_forward_impl.1} parent=51 // pred_fallthru
        _
    $region52: #{_forward_impl.1} parent=5 // pred_fallthru
      _
  $region6: #{_forward_impl.1} parent=0 // loop_footer
    %s17 = sadd.s32 1, %s13
  $region7: #{_forward_impl.1} parent=0 // loop_footer_branch
    %12 = sbr.rel target = $region3
  $region8: #{_forward_impl.1} parent=0 // loop_exit
    _

</llo_original>
